<compile_context>
chip_gen: v7x
topology: tpu7x:2x2x1
jax: 0.10.0
libtpu: 0.0.40
codegen_flags: <defaults>
</compile_context>

<pallas_src>
import jax
import jax.numpy as jnp
from jax import lax
from jax.experimental import pallas as pl
from jax.experimental.pallas import tpu as pltpu

EMBEDDING_SIZE = 384
NUM_COLS = 16
NUM_ROWS = 32

VOCAB = 128     # synthetic vocabulary size
SEQ = 8         # tokens per cell
TILE = 528      # cells per grid step (multiple of 8; gives an even 2-step grid
                # for the B=2 example -> both v7x TensorCores stay busy)


def _cell_encode_kernel(ids_ref, table_ref, out_ref):
    # ids_ref:   (TILE, SEQ)              int32   VMEM
    # table_ref: (VOCAB, EMBEDDING)       float32 VMEM  (embed_table @ proj_w)
    # out_ref:   (TILE, EMBEDDING)        float32 VMEM
    ids = ids_ref[...]                                            # (T, S)
    t, s = ids.shape
    v = table_ref.shape[0]

    # 2-D token histogram accumulated over the (static) SEQ axis.
    # Live set stays at ~(T, V) f32 -> no vreg spills, no cross-sublane reduce.
    vocab_iota = lax.broadcasted_iota(jnp.int32, (t, v), 1)       # (T, V)
    hist = jnp.zeros((t, v), jnp.float32)
    for tok in range(s):                                          # SEQ=8, unrolled
        hist = hist + (ids[:, tok:tok + 1] == vocab_iota).astype(jnp.float32)

    # pooled embedding + projection in ONE matmul against the pre-combined
    # table (proj_w folded on the host).  The 1/SEQ mean-pool scale is dropped
    # because the L2 normalization below cancels any uniform scale.
    proj = jnp.dot(hist, table_ref[...],
                   preferred_element_type=jnp.float32)            # (T, E)

    # L2 normalization (SentenceTransformer-style)
    inv_norm = lax.rsqrt(jnp.sum(proj * proj, axis=-1, keepdims=True) + 1e-12)
    out_ref[...] = (proj * inv_norm).astype(out_ref.dtype)


def embedding_forward(token_ids, embed_table, proj_w):
    """token_ids: (B, NUM_ROWS+1, NUM_COLS, SEQ) int32
       embed_table: (VOCAB, EMBEDDING_SIZE) float32
       proj_w: (EMBEDDING_SIZE, EMBEDDING_SIZE) float32
       returns (B, NUM_ROWS+1, NUM_COLS, EMBEDDING_SIZE) float32"""
    b, r, c, s = token_ids.shape
    n = b * r * c
    flat_ids = token_ids.reshape(n, s)

    # Fold the dense projection into the token table once on the host:
    # (one_hot @ T) @ W == one_hot @ (T @ W).  Removes 75% of in-kernel FLOPs.
    combined = jnp.dot(embed_table, proj_w,
                       preferred_element_type=jnp.float32)        # (V, E)

    # pad the cell axis up to a multiple of TILE
    n_pad = ((n + TILE - 1) // TILE) * TILE
    if n_pad != n:
        flat_ids = jnp.pad(flat_ids, ((0, n_pad - n), (0, 0)))

    grid = (n_pad // TILE,)
    out_flat = pl.pallas_call(
        _cell_encode_kernel,
        out_shape=jax.ShapeDtypeStruct((n_pad, EMBEDDING_SIZE), jnp.float32),
        grid_spec=pltpu.PrefetchScalarGridSpec(
            num_scalar_prefetch=0,
            grid=grid,
            in_specs=[
                pl.BlockSpec((TILE, s), lambda i: (i, 0)),
                pl.BlockSpec((VOCAB, EMBEDDING_SIZE), lambda i: (0, 0)),
            ],
            out_specs=pl.BlockSpec((TILE, EMBEDDING_SIZE), lambda i: (i, 0)),
        ),
        compiler_params=pltpu.CompilerParams(
            dimension_semantics=("parallel",)),
    )(flat_ids, combined)

    return out_flat[:n].reshape(b, r, c, EMBEDDING_SIZE)


if __name__ == "__main__":
    key = jax.random.PRNGKey(0)
    k_ids, k_tab, k_w = jax.random.split(key, 3)

    B = 2
    token_ids = jax.random.randint(
        k_ids, (B, NUM_ROWS + 1, NUM_COLS, SEQ), 0, VOCAB, dtype=jnp.int32)
    embed_table = (jax.random.normal(k_tab, (VOCAB, EMBEDDING_SIZE), jnp.float32)
                   * 0.02)
    proj_w = (jax.random.normal(k_w, (EMBEDDING_SIZE, EMBEDDING_SIZE), jnp.float32)
              * (1.0 / jnp.sqrt(EMBEDDING_SIZE)))

    out = embedding_forward(token_ids, embed_table, proj_w)
    jax.block_until_ready(out)

    assert out.shape == (B, NUM_ROWS + 1, NUM_COLS, EMBEDDING_SIZE), out.shape
    print("KERNEL_OK")
</pallas_src>

<mosaic_0001>
module attributes {stable_mosaic.version = 11 : i64} {
  func.func @_cell_encode_kernel(%arg0: i32, %arg1: memref<528x8xi32, #tpu.memory_space<vmem>>, %arg2: memref<128x384xf32, #tpu.memory_space<vmem>>, %arg3: memref<528x384xf32, #tpu.memory_space<vmem>>) attributes {dimension_semantics = [#tpu.dimension_semantics<parallel>], iteration_bounds = array<i64: 2>, scalar_prefetch = 0 : i64, scratch_operands = 0 : i64, tpu.core_type = #tpu.core_type<tc>, window_params = [{transform_indices = @transform_0, window_bounds = array<i64: 528, 8>}, {pipeline_mode = #tpu.pipeline_mode<synchronous>, transform_indices = @transform_1, window_bounds = array<i64: 128, 384>}, {transform_indices = @transform_2, window_bounds = array<i64: 528, 384>}]} {
    %c0 = arith.constant 0 : index
    %c0_0 = arith.constant 0 : index
    %0 = vector.load %arg1[%c0, %c0_0] : memref<528x8xi32, #tpu.memory_space<vmem>>, vector<528x8xi32>
    %1 = tpu.iota {dimensions = array<i32: 1>} : vector<528x128xi32>
    %cst = arith.constant 0.000000e+00 : f32
    %2 = vector.broadcast %cst : f32 to vector<528x128xf32>
    %3 = vector.extract_strided_slice %0 {offsets = [0, 0], sizes = [528, 1], strides = [1, 1]} : vector<528x8xi32> to vector<528x1xi32>
    %4 = vector.broadcast %3 : vector<528x1xi32> to vector<528x128xi32>
    %5 = arith.cmpi eq, %4, %1 : vector<528x128xi32>
    %6 = arith.extui %5 : vector<528x128xi1> to vector<528x128xi32>
    %7 = arith.sitofp %6 : vector<528x128xi32> to vector<528x128xf32>
    %8 = arith.addf %2, %7 : vector<528x128xf32>
    %9 = vector.extract_strided_slice %0 {offsets = [0, 1], sizes = [528, 1], strides = [1, 1]} : vector<528x8xi32> to vector<528x1xi32>
    %10 = vector.broadcast %9 : vector<528x1xi32> to vector<528x128xi32>
    %11 = arith.cmpi eq, %10, %1 : vector<528x128xi32>
    %12 = arith.extui %11 : vector<528x128xi1> to vector<528x128xi32>
    %13 = arith.sitofp %12 : vector<528x128xi32> to vector<528x128xf32>
    %14 = arith.addf %8, %13 : vector<528x128xf32>
    %15 = vector.extract_strided_slice %0 {offsets = [0, 2], sizes = [528, 1], strides = [1, 1]} : vector<528x8xi32> to vector<528x1xi32>
    %16 = vector.broadcast %15 : vector<528x1xi32> to vector<528x128xi32>
    %17 = arith.cmpi eq, %16, %1 : vector<528x128xi32>
    %18 = arith.extui %17 : vector<528x128xi1> to vector<528x128xi32>
    %19 = arith.sitofp %18 : vector<528x128xi32> to vector<528x128xf32>
    %20 = arith.addf %14, %19 : vector<528x128xf32>
    %21 = vector.extract_strided_slice %0 {offsets = [0, 3], sizes = [528, 1], strides = [1, 1]} : vector<528x8xi32> to vector<528x1xi32>
    %22 = vector.broadcast %21 : vector<528x1xi32> to vector<528x128xi32>
    %23 = arith.cmpi eq, %22, %1 : vector<528x128xi32>
    %24 = arith.extui %23 : vector<528x128xi1> to vector<528x128xi32>
    %25 = arith.sitofp %24 : vector<528x128xi32> to vector<528x128xf32>
    %26 = arith.addf %20, %25 : vector<528x128xf32>
    %27 = vector.extract_strided_slice %0 {offsets = [0, 4], sizes = [528, 1], strides = [1, 1]} : vector<528x8xi32> to vector<528x1xi32>
    %28 = vector.broadcast %27 : vector<528x1xi32> to vector<528x128xi32>
    %29 = arith.cmpi eq, %28, %1 : vector<528x128xi32>
    %30 = arith.extui %29 : vector<528x128xi1> to vector<528x128xi32>
    %31 = arith.sitofp %30 : vector<528x128xi32> to vector<528x128xf32>
    %32 = arith.addf %26, %31 : vector<528x128xf32>
    %33 = vector.extract_strided_slice %0 {offsets = [0, 5], sizes = [528, 1], strides = [1, 1]} : vector<528x8xi32> to vector<528x1xi32>
    %34 = vector.broadcast %33 : vector<528x1xi32> to vector<528x128xi32>
    %35 = arith.cmpi eq, %34, %1 : vector<528x128xi32>
    %36 = arith.extui %35 : vector<528x128xi1> to vector<528x128xi32>
    %37 = arith.sitofp %36 : vector<528x128xi32> to vector<528x128xf32>
    %38 = arith.addf %32, %37 : vector<528x128xf32>
    %39 = vector.extract_strided_slice %0 {offsets = [0, 6], sizes = [528, 1], strides = [1, 1]} : vector<528x8xi32> to vector<528x1xi32>
    %40 = vector.broadcast %39 : vector<528x1xi32> to vector<528x128xi32>
    %41 = arith.cmpi eq, %40, %1 : vector<528x128xi32>
    %42 = arith.extui %41 : vector<528x128xi1> to vector<528x128xi32>
    %43 = arith.sitofp %42 : vector<528x128xi32> to vector<528x128xf32>
    %44 = arith.addf %38, %43 : vector<528x128xf32>
    %45 = vector.extract_strided_slice %0 {offsets = [0, 7], sizes = [528, 1], strides = [1, 1]} : vector<528x8xi32> to vector<528x1xi32>
    %46 = vector.broadcast %45 : vector<528x1xi32> to vector<528x128xi32>
    %47 = arith.cmpi eq, %46, %1 : vector<528x128xi32>
    %48 = arith.extui %47 : vector<528x128xi1> to vector<528x128xi32>
    %49 = arith.sitofp %48 : vector<528x128xi32> to vector<528x128xf32>
    %50 = arith.addf %44, %49 : vector<528x128xf32>
    %c0_1 = arith.constant 0 : index
    %c0_2 = arith.constant 0 : index
    %51 = vector.load %arg2[%c0_1, %c0_2] : memref<128x384xf32, #tpu.memory_space<vmem>>, vector<128x384xf32>
    %cst_3 = arith.constant dense<0.000000e+00> : vector<528x384xf32>
    %52 = tpu.matmul %50, %51, %cst_3 {dimension_numbers = #tpu.dot_dimension_numbers<[1], [0], [0], [1], [0, 0, 1, 1], [], []>} : vector<528x128xf32>, vector<128x384xf32>, vector<528x384xf32> -> vector<528x384xf32>
    %53 = arith.mulf %52, %52 : vector<528x384xf32>
    %cst_4 = arith.constant dense<0.000000e+00> : vector<528xf32>
    %54 = vector.multi_reduction <add>, %53, %cst_4 [1] : vector<528x384xf32> to vector<528xf32>
    %55 = vector.shape_cast %54 : vector<528xf32> to vector<528x1xf32>
    %cst_5 = arith.constant 9.99999996E-13 : f32
    %56 = vector.broadcast %cst_5 : f32 to vector<528x1xf32>
    %57 = arith.addf %55, %56 : vector<528x1xf32>
    %58 = math.rsqrt %57 : vector<528x1xf32>
    %59 = vector.broadcast %58 : vector<528x1xf32> to vector<528x384xf32>
    %60 = arith.mulf %52, %59 : vector<528x384xf32>
    %c0_6 = arith.constant 0 : index
    %c0_7 = arith.constant 0 : index
    %61 = vector.load %arg3[%c0_6, %c0_7] : memref<528x384xf32, #tpu.memory_space<vmem>>, vector<528x384xf32>
    tpu.vector_store %arg3[%c0_6, %c0_7], %60 {strides = array<i32>} : memref<528x384xf32, #tpu.memory_space<vmem>>, vector<528x384xf32>,
    return
  }
  func.func @transform_0(%arg0: i32) -> (i32, i32) {
    %c0_i32 = arith.constant 0 : i32
    %c0_i32_0 = arith.constant 0 : i32
    return %arg0, %c0_i32 : i32, i32
  }
  func.func @transform_1(%arg0: i32) -> (i32, i32) {
    %c0_i32 = arith.constant 0 : i32
    %c0_i32_0 = arith.constant 0 : i32
    %c0_i32_1 = arith.constant 0 : i32
    return %c0_i32, %c0_i32_0 : i32, i32
  }
  func.func @transform_2(%arg0: i32) -> (i32, i32) {
    %c0_i32 = arith.constant 0 : i32
    %c0_i32_0 = arith.constant 0 : i32
    return %arg0, %c0_i32 : i32, i32
  }
}

</mosaic_0001>

<llo_original>
// kernel: tpu_custom_call.1
$region0: #{tpu_custom_call.1}
  #allocation0 [shape = 'u32[]', space=smem, size = 0x4, offset = 0x4, fixed_abs, tag = 'smem constant byte address 0x4 - core index']
  #allocation1 [shape = 'u32[144,128]{1,0:T(1,128)}', space=vmem, size = 0x12000, scoped, tag = 'internal scratch']
  %s0 = inlined_call_operand.vmem [shape: s32[1056,8], index: 0, kind: input, shape index: {}]
  %s1 = inlined_call_operand.hbm [shape: f32[128,384], index: 1, kind: input, shape index: {}]
  %s2 = inlined_call_operand.hbm [shape: f32[1056,384], index: 2, kind: output, shape index: {}]
  %s3 = sld [smem:[#allocation0]]
  $region45: #{tpu_custom_call.1} parent=0
    _
  %s5 = ssub.s32 1, %s3
  %s6 = scalar_select 0, %s5, %s3
  $region1: #{tpu_custom_call.1} parent=0
    #allocation2 [shape = 'u8[196608]{0}', space=vmem, size = 0x30000, scoped, tag = 'input window, operand 1, single buffered']
    #allocation3 [shape = 's32[2]{0}', space=sflag, size = 0x8, scoped, tag = 'scoped memory for tpu_custom_call.1']
    #allocation4 [shape = 's32[2]{0}', space=sflag, size = 0x8, scoped, tag = 'scoped memory for tpu_custom_call.1']
    #allocation5 [shape = 'u8[1622016]{0}', space=vmem, size = 0x18c000, scoped, tag = 'output window, operand 0']
    %7 = vsyncpa [#allocation3], 0
    %8 = vsyncpa [#allocation4], 0
    %s9 = scalar_lea.sflag [#allocation4], 1
    %10 = vsyncpa %s9, 0
    loop: start=0, step=1, limit=4
    $region2: #{tpu_custom_call.1} parent=1 // loop_pre_header
      _
    $region3: #{tpu_custom_call.1} parent=1 // loop_header
      %s12 = sphi 0, %s16
      %p13 = scmp.ge.s32.totalorder %s12, 4
      %s22 = sphi 0, %s24
      %s25 = sphi 0, %s22
      %s26 = sphi 0, %s25
      %s42 = sphi 0, %s26
      %s46 = sphi 0, %s46
      %s48 = sphi 0, %s46
      %s49 = sphi 0, %s48
      %s63 = sphi 0, %s49
      %s69 = sphi 0, %s71
      %s72 = sphi 0, %s69
      %s73 = sphi 0, %s72
      %s89 = sphi 0, %s73
    $region4: #{tpu_custom_call.1} parent=1 // loop_header_branch
      %15 = sbr.rel (%p13) target = $region8
    $region5: #{tpu_custom_call.1} parent=1 // loop_body
      %s17 = ssub.s32 %s12, 1
      %s18 = ssub.s32 %s12, 2
      %s19 = sadd.s32 %s12, 1
      %s20 = ssub.s32 %s12, %s19
      %p21 = scmp.eq.s32.totalorder %s20, 0
      %s23 = sadd.s32 %s22, 1
      %s24 = scalar_select %p21, %s22, %s23
      %p27 = pneg %p21
      %p28 = scmp.eq.s32.totalorder %s12, 1
      %p29 = por %p27, %p28
      %p30 = scmp.ne.s32.totalorder %s22, %s25
      %p31 = scmp.eq.s32.totalorder %s12, 0
      %p32 = por %p30, %p31
      %p33 = scmp.ne.s32.totalorder %s22, %s25
      %p34 = scmp.eq.s32.totalorder %s17, 1
      %p35 = por %p33, %p34
      %p36 = scmp.ne.s32.totalorder %s25, %s26
      %p37 = scmp.eq.s32.totalorder %s17, 0
      %p38 = por %p36, %p37
      %p39 = scmp.ne.s32.totalorder %s25, %s26
      %p40 = scmp.eq.s32.totalorder %s18, 1
      %p41 = por %p39, %p40
      %p43 = scmp.ne.s32.totalorder %s26, %s42
      %p44 = scmp.eq.s32.totalorder %s18, 0
      %p45 = por %p43, %p44
      %s47 = sadd.s32 %s46, 1
      %p50 = scmp.eq.s32.totalorder %s12, 1
      %p51 = scmp.ne.s32.totalorder %s46, %s48
      %p52 = scmp.eq.s32.totalorder %s12, 0
      %p53 = por %p51, %p52
      %p54 = scmp.ne.s32.totalorder %s46, %s48
      %p55 = scmp.eq.s32.totalorder %s17, 1
      %p56 = por %p54, %p55
      %p57 = scmp.ne.s32.totalorder %s48, %s49
      %p58 = scmp.eq.s32.totalorder %s17, 0
      %p59 = por %p57, %p58
      %p60 = scmp.ne.s32.totalorder %s48, %s49
      %p61 = scmp.eq.s32.totalorder %s18, 1
      %p62 = por %p60, %p61
      %p64 = scmp.ne.s32.totalorder %s49, %s63
      %p65 = scmp.eq.s32.totalorder %s18, 0
      %p66 = por %p64, %p65
      %s67 = ssub.s32 %s12, %s19
      %p68 = scmp.eq.s32.totalorder %s67, 0
      %s70 = sadd.s32 %s69, 1
      %s71 = scalar_select %p68, %s69, %s70
      %p74 = pneg %p68
      %p75 = scmp.eq.s32.totalorder %s12, 1
      %p76 = por %p74, %p75
      %p77 = scmp.ne.s32.totalorder %s69, %s72
      %p78 = scmp.eq.s32.totalorder %s12, 0
      %p79 = por %p77, %p78
      %p80 = scmp.ne.s32.totalorder %s69, %s72
      %p81 = scmp.eq.s32.totalorder %s17, 1
      %p82 = por %p80, %p81
      %p83 = scmp.ne.s32.totalorder %s72, %s73
      %p84 = scmp.eq.s32.totalorder %s17, 0
      %p85 = por %p83, %p84
      %p86 = scmp.ne.s32.totalorder %s72, %s73
      %p87 = scmp.eq.s32.totalorder %s18, 1
      %p88 = por %p86, %p87
      %p90 = scmp.ne.s32.totalorder %s73, %s89
      %p91 = scmp.eq.s32.totalorder %s18, 0
      %p92 = por %p90, %p91
      %p93 = scmp.le.s32.totalorder 1, %s12
      %p94 = scmp.lt.s32.totalorder %s12, 3
      %p95 = pnand %p93, %p94
      %p96 = pneg %p95
      // Predicated region
      $region9: #{tpu_custom_call.1} parent=5 // pred_check
        _
      $region10: #{tpu_custom_call.1} parent=5 // pred_check_branch
        %98 = sbr.rel (%p95) target = $region12
      $region11: #{tpu_custom_call.1} parent=5 // pred_region
        %s99 = ssub.s32 %s12, 1
        // Predicated region
        $region13: #{tpu_custom_call.1} parent=11 // pred_check
          %p100 = pneg %p59
        $region14: #{tpu_custom_call.1} parent=11 // pred_check_branch
          %102 = sbr.rel (%p100) target = $region16
        $region15: #{tpu_custom_call.1} parent=11 // pred_region
          %s104 = ssub.s32 6144, 6144
          %105 = vsyncadd [#allocation3], %s104
          %s106 = sshll.u32 [#allocation2], 4
          %s107 = int_to_ptr.vmem [resolvable:$true] %s106
          %112 = dma.hbm_to_vmem [thread:$0]  %s1, 6144, %s107, [#allocation3], 384, 384, 24
        $region16: #{tpu_custom_call.1} parent=11 // pred_fallthru
          _
      $region12: #{tpu_custom_call.1} parent=5 // pred_fallthru
        _
      %p113 = scmp.lt.s32.totalorder %s12, 2
      // Predicated region
      $region17: #{tpu_custom_call.1} parent=5 // pred_check
        %p114 = pneg %p113
      $region18: #{tpu_custom_call.1} parent=5 // pred_check_branch
        %116 = sbr.rel (%p114) target = $region20
      $region19: #{tpu_custom_call.1} parent=5 // pred_region
        // Predicated region
        $region21: #{tpu_custom_call.1} parent=19 // pred_check
          %p117 = pneg %p32
        $region22: #{tpu_custom_call.1} parent=19 // pred_check_branch
          %119 = sbr.rel (%p117) target = $region24
        $region23: #{tpu_custom_call.1} parent=19 // pred_region
          %s120 = smul.u32 66, %s12
          %p121 = scmp.lt.s32.totalorder %s120, 131
          %s122 = scalar_select %p121, %s120, 131
          %s123 = smul.addr %s122, 8
          %s124 = scalar_lea.vmem %s0, %s123
          %s125 = smul.u32 66, %s12
        $region24: #{tpu_custom_call.1} parent=19 // pred_fallthru
          _
      $region20: #{tpu_custom_call.1} parent=5 // pred_fallthru
        _
      %p126 = scmp.le.s32.totalorder 1, %s12
      %p127 = scmp.lt.s32.totalorder %s12, 3
      %p128 = pnand %p126, %p127
      %p129 = pneg %p128
      // Predicated region
      $region25: #{tpu_custom_call.1} parent=5 // pred_check
        _
      $region26: #{tpu_custom_call.1} parent=5 // pred_check_branch
        %131 = sbr.rel (%p128) target = $region28
      $region27: #{tpu_custom_call.1} parent=5 // pred_region
        %s132 = ssub.s32 %s12, 1
        // Predicated region
        $region29: #{tpu_custom_call.1} parent=27 // pred_check
          %p133 = pneg %p59
        $region30: #{tpu_custom_call.1} parent=27 // pred_check_branch
          %135 = sbr.rel (%p133) target = $region32
        $region31: #{tpu_custom_call.1} parent=27 // pred_region
          %136 = dma.done [#allocation3], 6144
        $region32: #{tpu_custom_call.1} parent=27 // pred_fallthru
          _
        %s137 = smul.u32 66, %s17
        %p138 = scmp.lt.s32.totalorder %s137, 131
        %s139 = scalar_select %p138, %s137, 131
        %s140 = smul.addr %s139, 8
        %s141 = scalar_lea.vmem %s0, %s140
        %p142 = pneg %p38
        %p143 = pneg %p35
        %p144 = pneg %p59
        %p145 = pneg %p56
        %p146 = pneg %p85
        %p147 = pneg %p82
        %s148 = sand.u32 %s72, 1
        %s149 = scalar_lea.sflag [#allocation4], %s148
        %s150 = sand.u32 %s72, 1
        %s151 = smul.addr %s150, 1584
        %s152 = scalar_lea.vmem [#allocation5], %s151
        %s153 = smul.u32 66, %s17
        %p154 = scmp.lt.s32.totalorder %s153, 131
        %s155 = scalar_select %p154, %s153, 131
        %s156 = smul.addr %s155, 8
        %s157 = scalar_lea.vmem %s0, %s156
        %s158 = smul.u32 66, %s17
        %s159 = smul.u32 66, %s17
        %v160 = vld [vmem:[%s157] sm:$0xff]
        %v161 = vld [vmem:[%s157 + $0x8] sm:$0xff]
        %v162 = vld [vmem:[%s157 + $0x10] sm:$0xff]
        %v163 = vld [vmem:[%s157 + $0x18] sm:$0xff]
        %v164 = vld [vmem:[%s157 + $0x20] sm:$0xff]
        %v165 = vld [vmem:[%s157 + $0x28] sm:$0xff]
        %v166 = vld [vmem:[%s157 + $0x30] sm:$0xff]
        %v167 = vld [vmem:[%s157 + $0x38] sm:$0xff]
        %v168 = vld [vmem:[%s157 + $0x40] sm:$0xff]
        %v169 = vld [vmem:[%s157 + $0x48] sm:$0xff]
        %v170 = vld [vmem:[%s157 + $0x50] sm:$0xff]
        %v171 = vld [vmem:[%s157 + $0x58] sm:$0xff]
        %v172 = vld [vmem:[%s157 + $0x60] sm:$0xff]
        %v173 = vld [vmem:[%s157 + $0x68] sm:$0xff]
        %v174 = vld [vmem:[%s157 + $0x70] sm:$0xff]
        %v175 = vld [vmem:[%s157 + $0x78] sm:$0xff]
        %v176 = vld [vmem:[%s157 + $0x80] sm:$0xff]
        %v177 = vld [vmem:[%s157 + $0x88] sm:$0xff]
        %v178 = vld [vmem:[%s157 + $0x90] sm:$0xff]
        %v179 = vld [vmem:[%s157 + $0x98] sm:$0xff]
        %v180 = vld [vmem:[%s157 + $0xa0] sm:$0xff]
        %v181 = vld [vmem:[%s157 + $0xa8] sm:$0xff]
        %v182 = vld [vmem:[%s157 + $0xb0] sm:$0xff]
        %v183 = vld [vmem:[%s157 + $0xb8] sm:$0xff]
        %v184 = vld [vmem:[%s157 + $0xc0] sm:$0xff]
        %v185 = vld [vmem:[%s157 + $0xc8] sm:$0xff]
        %v186 = vld [vmem:[%s157 + $0xd0] sm:$0xff]
        %v187 = vld [vmem:[%s157 + $0xd8] sm:$0xff]
        %v188 = vld [vmem:[%s157 + $0xe0] sm:$0xff]
        %v189 = vld [vmem:[%s157 + $0xe8] sm:$0xff]
        %v190 = vld [vmem:[%s157 + $0xf0] sm:$0xff]
        %v191 = vld [vmem:[%s157 + $0xf8] sm:$0xff]
        %v192 = vld [vmem:[%s157 + $0x100] sm:$0xff]
        %v193 = vld [vmem:[%s157 + $0x108] sm:$0xff]
        %v194 = vld [vmem:[%s157 + $0x110] sm:$0xff]
        %v195 = vld [vmem:[%s157 + $0x118] sm:$0xff]
        %v196 = vld [vmem:[%s157 + $0x120] sm:$0xff]
        %v197 = vld [vmem:[%s157 + $0x128] sm:$0xff]
        %v198 = vld [vmem:[%s157 + $0x130] sm:$0xff]
        %v199 = vld [vmem:[%s157 + $0x138] sm:$0xff]
        %v200 = vld [vmem:[%s157 + $0x140] sm:$0xff]
        %v201 = vld [vmem:[%s157 + $0x148] sm:$0xff]
        %v202 = vld [vmem:[%s157 + $0x150] sm:$0xff]
        %v203 = vld [vmem:[%s157 + $0x158] sm:$0xff]
        %v204 = vld [vmem:[%s157 + $0x160] sm:$0xff]
        %v205 = vld [vmem:[%s157 + $0x168] sm:$0xff]
        %v206 = vld [vmem:[%s157 + $0x170] sm:$0xff]
        %v207 = vld [vmem:[%s157 + $0x178] sm:$0xff]
        %v208 = vld [vmem:[%s157 + $0x180] sm:$0xff]
        %v209 = vld [vmem:[%s157 + $0x188] sm:$0xff]
        %v210 = vld [vmem:[%s157 + $0x190] sm:$0xff]
        %v211 = vld [vmem:[%s157 + $0x198] sm:$0xff]
        %v212 = vld [vmem:[%s157 + $0x1a0] sm:$0xff]
        %v213 = vld [vmem:[%s157 + $0x1a8] sm:$0xff]
        %v214 = vld [vmem:[%s157 + $0x1b0] sm:$0xff]
        %v215 = vld [vmem:[%s157 + $0x1b8] sm:$0xff]
        %v216 = vld [vmem:[%s157 + $0x1c0] sm:$0xff]
        %v217 = vld [vmem:[%s157 + $0x1c8] sm:$0xff]
        %v218 = vld [vmem:[%s157 + $0x1d0] sm:$0xff]
        %v219 = vld [vmem:[%s157 + $0x1d8] sm:$0xff]
        %v220 = vld [vmem:[%s157 + $0x1e0] sm:$0xff]
        %v221 = vld [vmem:[%s157 + $0x1e8] sm:$0xff]
        %v222 = vld [vmem:[%s157 + $0x1f0] sm:$0xff]
        %v223 = vld [vmem:[%s157 + $0x1f8] sm:$0xff]
        %v224 = vld [vmem:[%s157 + $0x200] sm:$0xff]
        %v225 = vld [vmem:[%s157 + $0x208] sm:$0xff]
        %v226 = vlaneseq
        %v227 = vand.u32 %v226, 127
        %228 = vset.pattern.permute.xlu0 0
        %229 = vperm.xlu0 %228, %v160
        %v230 = vpop.permute.xlu0 %229
        %231 = vset.pattern.permute.xlu0 0
        %232 = vperm.xlu0 %231, %v161
        %v233 = vpop.permute.xlu0 %232
        %234 = vset.pattern.permute.xlu0 0
        %235 = vperm.xlu0 %234, %v162
        %v236 = vpop.permute.xlu0 %235
        %237 = vset.pattern.permute.xlu0 0
        %238 = vperm.xlu0 %237, %v163
        %v239 = vpop.permute.xlu0 %238
        %240 = vset.pattern.permute.xlu0 0
        %241 = vperm.xlu0 %240, %v164
        %v242 = vpop.permute.xlu0 %241
        %243 = vset.pattern.permute.xlu0 0
        %244 = vperm.xlu0 %243, %v165
        %v245 = vpop.permute.xlu0 %244
        %246 = vset.pattern.permute.xlu0 0
        %247 = vperm.xlu0 %246, %v166
        %v248 = vpop.permute.xlu0 %247
        %249 = vset.pattern.permute.xlu0 0
        %250 = vperm.xlu0 %249, %v167
        %v251 = vpop.permute.xlu0 %250
        %252 = vset.pattern.permute.xlu0 0
        %253 = vperm.xlu0 %252, %v168
        %v254 = vpop.permute.xlu0 %253
        %255 = vset.pattern.permute.xlu0 0
        %256 = vperm.xlu0 %255, %v169
        %v257 = vpop.permute.xlu0 %256
        %258 = vset.pattern.permute.xlu0 0
        %259 = vperm.xlu0 %258, %v170
        %v260 = vpop.permute.xlu0 %259
        %261 = vset.pattern.permute.xlu0 0
        %262 = vperm.xlu0 %261, %v171
        %v263 = vpop.permute.xlu0 %262
        %264 = vset.pattern.permute.xlu0 0
        %265 = vperm.xlu0 %264, %v172
        %v266 = vpop.permute.xlu0 %265
        %267 = vset.pattern.permute.xlu0 0
        %268 = vperm.xlu0 %267, %v173
        %v269 = vpop.permute.xlu0 %268
        %270 = vset.pattern.permute.xlu0 0
        %271 = vperm.xlu0 %270, %v174
        %v272 = vpop.permute.xlu0 %271
        %273 = vset.pattern.permute.xlu0 0
        %274 = vperm.xlu0 %273, %v175
        %v275 = vpop.permute.xlu0 %274
        %276 = vset.pattern.permute.xlu0 0
        %277 = vperm.xlu0 %276, %v176
        %v278 = vpop.permute.xlu0 %277
        %279 = vset.pattern.permute.xlu0 0
        %280 = vperm.xlu0 %279, %v177
        %v281 = vpop.permute.xlu0 %280
        %282 = vset.pattern.permute.xlu0 0
        %283 = vperm.xlu0 %282, %v178
        %v284 = vpop.permute.xlu0 %283
        %285 = vset.pattern.permute.xlu0 0
        %286 = vperm.xlu0 %285, %v179
        %v287 = vpop.permute.xlu0 %286
        %288 = vset.pattern.permute.xlu0 0
        %289 = vperm.xlu0 %288, %v180
        %v290 = vpop.permute.xlu0 %289
        %291 = vset.pattern.permute.xlu0 0
        %292 = vperm.xlu0 %291, %v181
        %v293 = vpop.permute.xlu0 %292
        %294 = vset.pattern.permute.xlu0 0
        %295 = vperm.xlu0 %294, %v182
        %v296 = vpop.permute.xlu0 %295
        %297 = vset.pattern.permute.xlu0 0
        %298 = vperm.xlu0 %297, %v183
        %v299 = vpop.permute.xlu0 %298
        %300 = vset.pattern.permute.xlu0 0
        %301 = vperm.xlu0 %300, %v184
        %v302 = vpop.permute.xlu0 %301
        %303 = vset.pattern.permute.xlu0 0
        %304 = vperm.xlu0 %303, %v185
        %v305 = vpop.permute.xlu0 %304
        %306 = vset.pattern.permute.xlu0 0
        %307 = vperm.xlu0 %306, %v186
        %v308 = vpop.permute.xlu0 %307
        %309 = vset.pattern.permute.xlu0 0
        %310 = vperm.xlu0 %309, %v187
        %v311 = vpop.permute.xlu0 %310
        %312 = vset.pattern.permute.xlu0 0
        %313 = vperm.xlu0 %312, %v188
        %v314 = vpop.permute.xlu0 %313
        %315 = vset.pattern.permute.xlu0 0
        %316 = vperm.xlu0 %315, %v189
        %v317 = vpop.permute.xlu0 %316
        %318 = vset.pattern.permute.xlu0 0
        %319 = vperm.xlu0 %318, %v190
        %v320 = vpop.permute.xlu0 %319
        %321 = vset.pattern.permute.xlu0 0
        %322 = vperm.xlu0 %321, %v191
        %v323 = vpop.permute.xlu0 %322
        %324 = vset.pattern.permute.xlu0 0
        %325 = vperm.xlu0 %324, %v192
        %v326 = vpop.permute.xlu0 %325
        %327 = vset.pattern.permute.xlu0 0
        %328 = vperm.xlu0 %327, %v193
        %v329 = vpop.permute.xlu0 %328
        %330 = vset.pattern.permute.xlu0 0
        %331 = vperm.xlu0 %330, %v194
        %v332 = vpop.permute.xlu0 %331
        %333 = vset.pattern.permute.xlu0 0
        %334 = vperm.xlu0 %333, %v195
        %v335 = vpop.permute.xlu0 %334
        %336 = vset.pattern.permute.xlu0 0
        %337 = vperm.xlu0 %336, %v196
        %v338 = vpop.permute.xlu0 %337
        %339 = vset.pattern.permute.xlu0 0
        %340 = vperm.xlu0 %339, %v197
        %v341 = vpop.permute.xlu0 %340
        %342 = vset.pattern.permute.xlu0 0
        %343 = vperm.xlu0 %342, %v198
        %v344 = vpop.permute.xlu0 %343
        %345 = vset.pattern.permute.xlu0 0
        %346 = vperm.xlu0 %345, %v199
        %v347 = vpop.permute.xlu0 %346
        %348 = vset.pattern.permute.xlu0 0
        %349 = vperm.xlu0 %348, %v200
        %v350 = vpop.permute.xlu0 %349
        %351 = vset.pattern.permute.xlu0 0
        %352 = vperm.xlu0 %351, %v201
        %v353 = vpop.permute.xlu0 %352
        %354 = vset.pattern.permute.xlu0 0
        %355 = vperm.xlu0 %354, %v202
        %v356 = vpop.permute.xlu0 %355
        %357 = vset.pattern.permute.xlu0 0
        %358 = vperm.xlu0 %357, %v203
        %v359 = vpop.permute.xlu0 %358
        %360 = vset.pattern.permute.xlu0 0
        %361 = vperm.xlu0 %360, %v204
        %v362 = vpop.permute.xlu0 %361
        %363 = vset.pattern.permute.xlu0 0
        %364 = vperm.xlu0 %363, %v205
        %v365 = vpop.permute.xlu0 %364
        %366 = vset.pattern.permute.xlu0 0
        %367 = vperm.xlu0 %366, %v206
        %v368 = vpop.permute.xlu0 %367
        %369 = vset.pattern.permute.xlu0 0
        %370 = vperm.xlu0 %369, %v207
        %v371 = vpop.permute.xlu0 %370
        %372 = vset.pattern.permute.xlu0 0
        %373 = vperm.xlu0 %372, %v208
        %v374 = vpop.permute.xlu0 %373
        %375 = vset.pattern.permute.xlu0 0
        %376 = vperm.xlu0 %375, %v209
        %v377 = vpop.permute.xlu0 %376
        %378 = vset.pattern.permute.xlu0 0
        %379 = vperm.xlu0 %378, %v210
        %v380 = vpop.permute.xlu0 %379
        %381 = vset.pattern.permute.xlu0 0
        %382 = vperm.xlu0 %381, %v211
        %v383 = vpop.permute.xlu0 %382
        %384 = vset.pattern.permute.xlu0 0
        %385 = vperm.xlu0 %384, %v212
        %v386 = vpop.permute.xlu0 %385
        %387 = vset.pattern.permute.xlu0 0
        %388 = vperm.xlu0 %387, %v213
        %v389 = vpop.permute.xlu0 %388
        %390 = vset.pattern.permute.xlu0 0
        %391 = vperm.xlu0 %390, %v214
        %v392 = vpop.permute.xlu0 %391
        %393 = vset.pattern.permute.xlu0 0
        %394 = vperm.xlu0 %393, %v215
        %v395 = vpop.permute.xlu0 %394
        %396 = vset.pattern.permute.xlu0 0
        %397 = vperm.xlu0 %396, %v216
        %v398 = vpop.permute.xlu0 %397
        %399 = vset.pattern.permute.xlu0 0
        %400 = vperm.xlu0 %399, %v217
        %v401 = vpop.permute.xlu0 %400
        %402 = vset.pattern.permute.xlu0 0
        %403 = vperm.xlu0 %402, %v218
        %v404 = vpop.permute.xlu0 %403
        %405 = vset.pattern.permute.xlu0 0
        %406 = vperm.xlu0 %405, %v219
        %v407 = vpop.permute.xlu0 %406
        %408 = vset.pattern.permute.xlu0 0
        %409 = vperm.xlu0 %408, %v220
        %v410 = vpop.permute.xlu0 %409
        %411 = vset.pattern.permute.xlu0 0
        %412 = vperm.xlu0 %411, %v221
        %v413 = vpop.permute.xlu0 %412
        %414 = vset.pattern.permute.xlu0 0
        %415 = vperm.xlu0 %414, %v222
        %v416 = vpop.permute.xlu0 %415
        %417 = vset.pattern.permute.xlu0 0
        %418 = vperm.xlu0 %417, %v223
        %v419 = vpop.permute.xlu0 %418
        %420 = vset.pattern.permute.xlu0 0
        %421 = vperm.xlu0 %420, %v224
        %v422 = vpop.permute.xlu0 %421
        %423 = vset.pattern.permute.xlu0 0
        %424 = vperm.xlu0 %423, %v225
        %v425 = vpop.permute.xlu0 %424
        %vm426 = vcmp.eq.s32.totalorder %v230, %v227
        %vm427 = vcmp.eq.s32.totalorder %v233, %v227
        %vm428 = vcmp.eq.s32.totalorder %v236, %v227
        %vm429 = vcmp.eq.s32.totalorder %v239, %v227
        %vm430 = vcmp.eq.s32.totalorder %v242, %v227
        %vm431 = vcmp.eq.s32.totalorder %v245, %v227
        %vm432 = vcmp.eq.s32.totalorder %v248, %v227
        %vm433 = vcmp.eq.s32.totalorder %v251, %v227
        %vm434 = vcmp.eq.s32.totalorder %v254, %v227
        %vm435 = vcmp.eq.s32.totalorder %v257, %v227
        %vm436 = vcmp.eq.s32.totalorder %v260, %v227
        %vm437 = vcmp.eq.s32.totalorder %v263, %v227
        %vm438 = vcmp.eq.s32.totalorder %v266, %v227
        %vm439 = vcmp.eq.s32.totalorder %v269, %v227
        %vm440 = vcmp.eq.s32.totalorder %v272, %v227
        %vm441 = vcmp.eq.s32.totalorder %v275, %v227
        %vm442 = vcmp.eq.s32.totalorder %v278, %v227
        %vm443 = vcmp.eq.s32.totalorder %v281, %v227
        %vm444 = vcmp.eq.s32.totalorder %v284, %v227
        %vm445 = vcmp.eq.s32.totalorder %v287, %v227
        %vm446 = vcmp.eq.s32.totalorder %v290, %v227
        %vm447 = vcmp.eq.s32.totalorder %v293, %v227
        %vm448 = vcmp.eq.s32.totalorder %v296, %v227
        %vm449 = vcmp.eq.s32.totalorder %v299, %v227
        %vm450 = vcmp.eq.s32.totalorder %v302, %v227
        %vm451 = vcmp.eq.s32.totalorder %v305, %v227
        %vm452 = vcmp.eq.s32.totalorder %v308, %v227
        %vm453 = vcmp.eq.s32.totalorder %v311, %v227
        %vm454 = vcmp.eq.s32.totalorder %v314, %v227
        %vm455 = vcmp.eq.s32.totalorder %v317, %v227
        %vm456 = vcmp.eq.s32.totalorder %v320, %v227
        %vm457 = vcmp.eq.s32.totalorder %v323, %v227
        %vm458 = vcmp.eq.s32.totalorder %v326, %v227
        %vm459 = vcmp.eq.s32.totalorder %v329, %v227
        %vm460 = vcmp.eq.s32.totalorder %v332, %v227
        %vm461 = vcmp.eq.s32.totalorder %v335, %v227
        %vm462 = vcmp.eq.s32.totalorder %v338, %v227
        %vm463 = vcmp.eq.s32.totalorder %v341, %v227
        %vm464 = vcmp.eq.s32.totalorder %v344, %v227
        %vm465 = vcmp.eq.s32.totalorder %v347, %v227
        %vm466 = vcmp.eq.s32.totalorder %v350, %v227
        %vm467 = vcmp.eq.s32.totalorder %v353, %v227
        %vm468 = vcmp.eq.s32.totalorder %v356, %v227
        %vm469 = vcmp.eq.s32.totalorder %v359, %v227
        %vm470 = vcmp.eq.s32.totalorder %v362, %v227
        %vm471 = vcmp.eq.s32.totalorder %v365, %v227
        %vm472 = vcmp.eq.s32.totalorder %v368, %v227
        %vm473 = vcmp.eq.s32.totalorder %v371, %v227
        %vm474 = vcmp.eq.s32.totalorder %v374, %v227
        %vm475 = vcmp.eq.s32.totalorder %v377, %v227
        %vm476 = vcmp.eq.s32.totalorder %v380, %v227
        %vm477 = vcmp.eq.s32.totalorder %v383, %v227
        %vm478 = vcmp.eq.s32.totalorder %v386, %v227
        %vm479 = vcmp.eq.s32.totalorder %v389, %v227
        %vm480 = vcmp.eq.s32.totalorder %v392, %v227
        %vm481 = vcmp.eq.s32.totalorder %v395, %v227
        %vm482 = vcmp.eq.s32.totalorder %v398, %v227
        %vm483 = vcmp.eq.s32.totalorder %v401, %v227
        %vm484 = vcmp.eq.s32.totalorder %v404, %v227
        %vm485 = vcmp.eq.s32.totalorder %v407, %v227
        %vm486 = vcmp.eq.s32.totalorder %v410, %v227
        %vm487 = vcmp.eq.s32.totalorder %v413, %v227
        %vm488 = vcmp.eq.s32.totalorder %v416, %v227
        %vm489 = vcmp.eq.s32.totalorder %v419, %v227
        %vm490 = vcmp.eq.s32.totalorder %v422, %v227
        %vm491 = vcmp.eq.s32.totalorder %v425, %v227
        %v492 = vsel %vm426, 1, 0
        %v493 = vsel %vm427, 1, 0
        %v494 = vsel %vm428, 1, 0
        %v495 = vsel %vm429, 1, 0
        %v496 = vsel %vm430, 1, 0
        %v497 = vsel %vm431, 1, 0
        %v498 = vsel %vm432, 1, 0
        %v499 = vsel %vm433, 1, 0
        %v500 = vsel %vm434, 1, 0
        %v501 = vsel %vm435, 1, 0
        %v502 = vsel %vm436, 1, 0
        %v503 = vsel %vm437, 1, 0
        %v504 = vsel %vm438, 1, 0
        %v505 = vsel %vm439, 1, 0
        %v506 = vsel %vm440, 1, 0
        %v507 = vsel %vm441, 1, 0
        %v508 = vsel %vm442, 1, 0
        %v509 = vsel %vm443, 1, 0
        %v510 = vsel %vm444, 1, 0
        %v511 = vsel %vm445, 1, 0
        %v512 = vsel %vm446, 1, 0
        %v513 = vsel %vm447, 1, 0
        %v514 = vsel %vm448, 1, 0
        %v515 = vsel %vm449, 1, 0
        %v516 = vsel %vm450, 1, 0
        %v517 = vsel %vm451, 1, 0
        %v518 = vsel %vm452, 1, 0
        %v519 = vsel %vm453, 1, 0
        %v520 = vsel %vm454, 1, 0
        %v521 = vsel %vm455, 1, 0
        %v522 = vsel %vm456, 1, 0
        %v523 = vsel %vm457, 1, 0
        %v524 = vsel %vm458, 1, 0
        %v525 = vsel %vm459, 1, 0
        %v526 = vsel %vm460, 1, 0
        %v527 = vsel %vm461, 1, 0
        %v528 = vsel %vm462, 1, 0
        %v529 = vsel %vm463, 1, 0
        %v530 = vsel %vm464, 1, 0
        %v531 = vsel %vm465, 1, 0
        %v532 = vsel %vm466, 1, 0
        %v533 = vsel %vm467, 1, 0
        %v534 = vsel %vm468, 1, 0
        %v535 = vsel %vm469, 1, 0
        %v536 = vsel %vm470, 1, 0
        %v537 = vsel %vm471, 1, 0
        %v538 = vsel %vm472, 1, 0
        %v539 = vsel %vm473, 1, 0
        %v540 = vsel %vm474, 1, 0
        %v541 = vsel %vm475, 1, 0
        %v542 = vsel %vm476, 1, 0
        %v543 = vsel %vm477, 1, 0
        %v544 = vsel %vm478, 1, 0
        %v545 = vsel %vm479, 1, 0
        %v546 = vsel %vm480, 1, 0
        %v547 = vsel %vm481, 1, 0
        %v548 = vsel %vm482, 1, 0
        %v549 = vsel %vm483, 1, 0
        %v550 = vsel %vm484, 1, 0
        %v551 = vsel %vm485, 1, 0
        %v552 = vsel %vm486, 1, 0
        %v553 = vsel %vm487, 1, 0
        %v554 = vsel %vm488, 1, 0
        %v555 = vsel %vm489, 1, 0
        %v556 = vsel %vm490, 1, 0
        %v557 = vsel %vm491, 1, 0
        %v558 = vcvt.s32.f32 %v492
        %v559 = vcvt.s32.f32 %v493
        %v560 = vcvt.s32.f32 %v494
        %v561 = vcvt.s32.f32 %v495
        %v562 = vcvt.s32.f32 %v496
        %v563 = vcvt.s32.f32 %v497
        %v564 = vcvt.s32.f32 %v498
        %v565 = vcvt.s32.f32 %v499
        %v566 = vcvt.s32.f32 %v500
        %v567 = vcvt.s32.f32 %v501
        %v568 = vcvt.s32.f32 %v502
        %v569 = vcvt.s32.f32 %v503
        %v570 = vcvt.s32.f32 %v504
        %v571 = vcvt.s32.f32 %v505
        %v572 = vcvt.s32.f32 %v506
        %v573 = vcvt.s32.f32 %v507
        %v574 = vcvt.s32.f32 %v508
        %v575 = vcvt.s32.f32 %v509
        %v576 = vcvt.s32.f32 %v510
        %v577 = vcvt.s32.f32 %v511
        %v578 = vcvt.s32.f32 %v512
        %v579 = vcvt.s32.f32 %v513
        %v580 = vcvt.s32.f32 %v514
        %v581 = vcvt.s32.f32 %v515
        %v582 = vcvt.s32.f32 %v516
        %v583 = vcvt.s32.f32 %v517
        %v584 = vcvt.s32.f32 %v518
        %v585 = vcvt.s32.f32 %v519
        %v586 = vcvt.s32.f32 %v520
        %v587 = vcvt.s32.f32 %v521
        %v588 = vcvt.s32.f32 %v522
        %v589 = vcvt.s32.f32 %v523
        %v590 = vcvt.s32.f32 %v524
        %v591 = vcvt.s32.f32 %v525
        %v592 = vcvt.s32.f32 %v526
        %v593 = vcvt.s32.f32 %v527
        %v594 = vcvt.s32.f32 %v528
        %v595 = vcvt.s32.f32 %v529
        %v596 = vcvt.s32.f32 %v530
        %v597 = vcvt.s32.f32 %v531
        %v598 = vcvt.s32.f32 %v532
        %v599 = vcvt.s32.f32 %v533
        %v600 = vcvt.s32.f32 %v534
        %v601 = vcvt.s32.f32 %v535
        %v602 = vcvt.s32.f32 %v536
        %v603 = vcvt.s32.f32 %v537
        %v604 = vcvt.s32.f32 %v538
        %v605 = vcvt.s32.f32 %v539
        %v606 = vcvt.s32.f32 %v540
        %v607 = vcvt.s32.f32 %v541
        %v608 = vcvt.s32.f32 %v542
        %v609 = vcvt.s32.f32 %v543
        %v610 = vcvt.s32.f32 %v544
        %v611 = vcvt.s32.f32 %v545
        %v612 = vcvt.s32.f32 %v546
        %v613 = vcvt.s32.f32 %v547
        %v614 = vcvt.s32.f32 %v548
        %v615 = vcvt.s32.f32 %v549
        %v616 = vcvt.s32.f32 %v550
        %v617 = vcvt.s32.f32 %v551
        %v618 = vcvt.s32.f32 %v552
        %v619 = vcvt.s32.f32 %v553
        %v620 = vcvt.s32.f32 %v554
        %v621 = vcvt.s32.f32 %v555
        %v622 = vcvt.s32.f32 %v556
        %v623 = vcvt.s32.f32 %v557
        %v624 = vadd.f32 %v558, 0.0
        %v625 = vadd.f32 %v559, 0.0
        %v626 = vadd.f32 %v560, 0.0
        %v627 = vadd.f32 %v561, 0.0
        %v628 = vadd.f32 %v562, 0.0
        %v629 = vadd.f32 %v563, 0.0
        %v630 = vadd.f32 %v564, 0.0
        %v631 = vadd.f32 %v565, 0.0
        %v632 = vadd.f32 %v566, 0.0
        %v633 = vadd.f32 %v567, 0.0
        %v634 = vadd.f32 %v568, 0.0
        %v635 = vadd.f32 %v569, 0.0
        %v636 = vadd.f32 %v570, 0.0
        %v637 = vadd.f32 %v571, 0.0
        %v638 = vadd.f32 %v572, 0.0
        %v639 = vadd.f32 %v573, 0.0
        %v640 = vadd.f32 %v574, 0.0
        %v641 = vadd.f32 %v575, 0.0
        %v642 = vadd.f32 %v576, 0.0
        %v643 = vadd.f32 %v577, 0.0
        %v644 = vadd.f32 %v578, 0.0
        %v645 = vadd.f32 %v579, 0.0
        %v646 = vadd.f32 %v580, 0.0
        %v647 = vadd.f32 %v581, 0.0
        %v648 = vadd.f32 %v582, 0.0
        %v649 = vadd.f32 %v583, 0.0
        %v650 = vadd.f32 %v584, 0.0
        %v651 = vadd.f32 %v585, 0.0
        %v652 = vadd.f32 %v586, 0.0
        %v653 = vadd.f32 %v587, 0.0
        %v654 = vadd.f32 %v588, 0.0
        %v655 = vadd.f32 %v589, 0.0
        %v656 = vadd.f32 %v590, 0.0
        %v657 = vadd.f32 %v591, 0.0
        %v658 = vadd.f32 %v592, 0.0
        %v659 = vadd.f32 %v593, 0.0
        %v660 = vadd.f32 %v594, 0.0
        %v661 = vadd.f32 %v595, 0.0
        %v662 = vadd.f32 %v596, 0.0
        %v663 = vadd.f32 %v597, 0.0
        %v664 = vadd.f32 %v598, 0.0
        %v665 = vadd.f32 %v599, 0.0
        %v666 = vadd.f32 %v600, 0.0
        %v667 = vadd.f32 %v601, 0.0
        %v668 = vadd.f32 %v602, 0.0
        %v669 = vadd.f32 %v603, 0.0
        %v670 = vadd.f32 %v604, 0.0
        %v671 = vadd.f32 %v605, 0.0
        %v672 = vadd.f32 %v606, 0.0
        %v673 = vadd.f32 %v607, 0.0
        %v674 = vadd.f32 %v608, 0.0
        %v675 = vadd.f32 %v609, 0.0
        %v676 = vadd.f32 %v610, 0.0
        %v677 = vadd.f32 %v611, 0.0
        %v678 = vadd.f32 %v612, 0.0
        %v679 = vadd.f32 %v613, 0.0
        %v680 = vadd.f32 %v614, 0.0
        %v681 = vadd.f32 %v615, 0.0
        %v682 = vadd.f32 %v616, 0.0
        %v683 = vadd.f32 %v617, 0.0
        %v684 = vadd.f32 %v618, 0.0
        %v685 = vadd.f32 %v619, 0.0
        %v686 = vadd.f32 %v620, 0.0
        %v687 = vadd.f32 %v621, 0.0
        %v688 = vadd.f32 %v622, 0.0
        %v689 = vadd.f32 %v623, 0.0
        %690 = vset.pattern.permute.xlu0 1
        %691 = vperm.xlu0 %690, %v160
        %v692 = vpop.permute.xlu0 %691
        %693 = vset.pattern.permute.xlu0 1
        %694 = vperm.xlu0 %693, %v161
        %v695 = vpop.permute.xlu0 %694
        %696 = vset.pattern.permute.xlu0 1
        %697 = vperm.xlu0 %696, %v162
        %v698 = vpop.permute.xlu0 %697
        %699 = vset.pattern.permute.xlu0 1
        %700 = vperm.xlu0 %699, %v163
        %v701 = vpop.permute.xlu0 %700
        %702 = vset.pattern.permute.xlu0 1
        %703 = vperm.xlu0 %702, %v164
        %v704 = vpop.permute.xlu0 %703
        %705 = vset.pattern.permute.xlu0 1
        %706 = vperm.xlu0 %705, %v165
        %v707 = vpop.permute.xlu0 %706
        %708 = vset.pattern.permute.xlu0 1
        %709 = vperm.xlu0 %708, %v166
        %v710 = vpop.permute.xlu0 %709
        %711 = vset.pattern.permute.xlu0 1
        %712 = vperm.xlu0 %711, %v167
        %v713 = vpop.permute.xlu0 %712
        %714 = vset.pattern.permute.xlu0 1
        %715 = vperm.xlu0 %714, %v168
        %v716 = vpop.permute.xlu0 %715
        %717 = vset.pattern.permute.xlu0 1
        %718 = vperm.xlu0 %717, %v169
        %v719 = vpop.permute.xlu0 %718
        %720 = vset.pattern.permute.xlu0 1
        %721 = vperm.xlu0 %720, %v170
        %v722 = vpop.permute.xlu0 %721
        %723 = vset.pattern.permute.xlu0 1
        %724 = vperm.xlu0 %723, %v171
        %v725 = vpop.permute.xlu0 %724
        %726 = vset.pattern.permute.xlu0 1
        %727 = vperm.xlu0 %726, %v172
        %v728 = vpop.permute.xlu0 %727
        %729 = vset.pattern.permute.xlu0 1
        %730 = vperm.xlu0 %729, %v173
        %v731 = vpop.permute.xlu0 %730
        %732 = vset.pattern.permute.xlu0 1
        %733 = vperm.xlu0 %732, %v174
        %v734 = vpop.permute.xlu0 %733
        %735 = vset.pattern.permute.xlu0 1
        %736 = vperm.xlu0 %735, %v175
        %v737 = vpop.permute.xlu0 %736
        %738 = vset.pattern.permute.xlu0 1
        %739 = vperm.xlu0 %738, %v176
        %v740 = vpop.permute.xlu0 %739
        %741 = vset.pattern.permute.xlu0 1
        %742 = vperm.xlu0 %741, %v177
        %v743 = vpop.permute.xlu0 %742
        %744 = vset.pattern.permute.xlu0 1
        %745 = vperm.xlu0 %744, %v178
        %v746 = vpop.permute.xlu0 %745
        %747 = vset.pattern.permute.xlu0 1
        %748 = vperm.xlu0 %747, %v179
        %v749 = vpop.permute.xlu0 %748
        %750 = vset.pattern.permute.xlu0 1
        %751 = vperm.xlu0 %750, %v180
        %v752 = vpop.permute.xlu0 %751
        %753 = vset.pattern.permute.xlu0 1
        %754 = vperm.xlu0 %753, %v181
        %v755 = vpop.permute.xlu0 %754
        %756 = vset.pattern.permute.xlu0 1
        %757 = vperm.xlu0 %756, %v182
        %v758 = vpop.permute.xlu0 %757
        %759 = vset.pattern.permute.xlu0 1
        %760 = vperm.xlu0 %759, %v183
        %v761 = vpop.permute.xlu0 %760
        %762 = vset.pattern.permute.xlu0 1
        %763 = vperm.xlu0 %762, %v184
        %v764 = vpop.permute.xlu0 %763
        %765 = vset.pattern.permute.xlu0 1
        %766 = vperm.xlu0 %765, %v185
        %v767 = vpop.permute.xlu0 %766
        %768 = vset.pattern.permute.xlu0 1
        %769 = vperm.xlu0 %768, %v186
        %v770 = vpop.permute.xlu0 %769
        %771 = vset.pattern.permute.xlu0 1
        %772 = vperm.xlu0 %771, %v187
        %v773 = vpop.permute.xlu0 %772
        %774 = vset.pattern.permute.xlu0 1
        %775 = vperm.xlu0 %774, %v188
        %v776 = vpop.permute.xlu0 %775
        %777 = vset.pattern.permute.xlu0 1
        %778 = vperm.xlu0 %777, %v189
        %v779 = vpop.permute.xlu0 %778
        %780 = vset.pattern.permute.xlu0 1
        %781 = vperm.xlu0 %780, %v190
        %v782 = vpop.permute.xlu0 %781
        %783 = vset.pattern.permute.xlu0 1
        %784 = vperm.xlu0 %783, %v191
        %v785 = vpop.permute.xlu0 %784
        %786 = vset.pattern.permute.xlu0 1
        %787 = vperm.xlu0 %786, %v192
        %v788 = vpop.permute.xlu0 %787
        %789 = vset.pattern.permute.xlu0 1
        %790 = vperm.xlu0 %789, %v193
        %v791 = vpop.permute.xlu0 %790
        %792 = vset.pattern.permute.xlu0 1
        %793 = vperm.xlu0 %792, %v194
        %v794 = vpop.permute.xlu0 %793
        %795 = vset.pattern.permute.xlu0 1
        %796 = vperm.xlu0 %795, %v195
        %v797 = vpop.permute.xlu0 %796
        %798 = vset.pattern.permute.xlu0 1
        %799 = vperm.xlu0 %798, %v196
        %v800 = vpop.permute.xlu0 %799
        %801 = vset.pattern.permute.xlu0 1
        %802 = vperm.xlu0 %801, %v197
        %v803 = vpop.permute.xlu0 %802
        %804 = vset.pattern.permute.xlu0 1
        %805 = vperm.xlu0 %804, %v198
        %v806 = vpop.permute.xlu0 %805
        %807 = vset.pattern.permute.xlu0 1
        %808 = vperm.xlu0 %807, %v199
        %v809 = vpop.permute.xlu0 %808
        %810 = vset.pattern.permute.xlu0 1
        %811 = vperm.xlu0 %810, %v200
        %v812 = vpop.permute.xlu0 %811
        %813 = vset.pattern.permute.xlu0 1
        %814 = vperm.xlu0 %813, %v201
        %v815 = vpop.permute.xlu0 %814
        %816 = vset.pattern.permute.xlu0 1
        %817 = vperm.xlu0 %816, %v202
        %v818 = vpop.permute.xlu0 %817
        %819 = vset.pattern.permute.xlu0 1
        %820 = vperm.xlu0 %819, %v203
        %v821 = vpop.permute.xlu0 %820
        %822 = vset.pattern.permute.xlu0 1
        %823 = vperm.xlu0 %822, %v204
        %v824 = vpop.permute.xlu0 %823
        %825 = vset.pattern.permute.xlu0 1
        %826 = vperm.xlu0 %825, %v205
        %v827 = vpop.permute.xlu0 %826
        %828 = vset.pattern.permute.xlu0 1
        %829 = vperm.xlu0 %828, %v206
        %v830 = vpop.permute.xlu0 %829
        %831 = vset.pattern.permute.xlu0 1
        %832 = vperm.xlu0 %831, %v207
        %v833 = vpop.permute.xlu0 %832
        %834 = vset.pattern.permute.xlu0 1
        %835 = vperm.xlu0 %834, %v208
        %v836 = vpop.permute.xlu0 %835
        %837 = vset.pattern.permute.xlu0 1
        %838 = vperm.xlu0 %837, %v209
        %v839 = vpop.permute.xlu0 %838
        %840 = vset.pattern.permute.xlu0 1
        %841 = vperm.xlu0 %840, %v210
        %v842 = vpop.permute.xlu0 %841
        %843 = vset.pattern.permute.xlu0 1
        %844 = vperm.xlu0 %843, %v211
        %v845 = vpop.permute.xlu0 %844
        %846 = vset.pattern.permute.xlu0 1
        %847 = vperm.xlu0 %846, %v212
        %v848 = vpop.permute.xlu0 %847
        %849 = vset.pattern.permute.xlu0 1
        %850 = vperm.xlu0 %849, %v213
        %v851 = vpop.permute.xlu0 %850
        %852 = vset.pattern.permute.xlu0 1
        %853 = vperm.xlu0 %852, %v214
        %v854 = vpop.permute.xlu0 %853
        %855 = vset.pattern.permute.xlu0 1
        %856 = vperm.xlu0 %855, %v215
        %v857 = vpop.permute.xlu0 %856
        %858 = vset.pattern.permute.xlu0 1
        %859 = vperm.xlu0 %858, %v216
        %v860 = vpop.permute.xlu0 %859
        %861 = vset.pattern.permute.xlu0 1
        %862 = vperm.xlu0 %861, %v217
        %v863 = vpop.permute.xlu0 %862
        %864 = vset.pattern.permute.xlu0 1
        %865 = vperm.xlu0 %864, %v218
        %v866 = vpop.permute.xlu0 %865
        %867 = vset.pattern.permute.xlu0 1
        %868 = vperm.xlu0 %867, %v219
        %v869 = vpop.permute.xlu0 %868
        %870 = vset.pattern.permute.xlu0 1
        %871 = vperm.xlu0 %870, %v220
        %v872 = vpop.permute.xlu0 %871
        %873 = vset.pattern.permute.xlu0 1
        %874 = vperm.xlu0 %873, %v221
        %v875 = vpop.permute.xlu0 %874
        %876 = vset.pattern.permute.xlu0 1
        %877 = vperm.xlu0 %876, %v222
        %v878 = vpop.permute.xlu0 %877
        %879 = vset.pattern.permute.xlu0 1
        %880 = vperm.xlu0 %879, %v223
        %v881 = vpop.permute.xlu0 %880
        %882 = vset.pattern.permute.xlu0 1
        %883 = vperm.xlu0 %882, %v224
        %v884 = vpop.permute.xlu0 %883
        %885 = vset.pattern.permute.xlu0 1
        %886 = vperm.xlu0 %885, %v225
        %v887 = vpop.permute.xlu0 %886
        %vm888 = vcmp.eq.s32.totalorder %v692, %v227
        %vm889 = vcmp.eq.s32.totalorder %v695, %v227
        %vm890 = vcmp.eq.s32.totalorder %v698, %v227
        %vm891 = vcmp.eq.s32.totalorder %v701, %v227
        %vm892 = vcmp.eq.s32.totalorder %v704, %v227
        %vm893 = vcmp.eq.s32.totalorder %v707, %v227
        %vm894 = vcmp.eq.s32.totalorder %v710, %v227
        %vm895 = vcmp.eq.s32.totalorder %v713, %v227
        %vm896 = vcmp.eq.s32.totalorder %v716, %v227
        %vm897 = vcmp.eq.s32.totalorder %v719, %v227
        %vm898 = vcmp.eq.s32.totalorder %v722, %v227
        %vm899 = vcmp.eq.s32.totalorder %v725, %v227
        %vm900 = vcmp.eq.s32.totalorder %v728, %v227
        %vm901 = vcmp.eq.s32.totalorder %v731, %v227
        %vm902 = vcmp.eq.s32.totalorder %v734, %v227
        %vm903 = vcmp.eq.s32.totalorder %v737, %v227
        %vm904 = vcmp.eq.s32.totalorder %v740, %v227
        %vm905 = vcmp.eq.s32.totalorder %v743, %v227
        %vm906 = vcmp.eq.s32.totalorder %v746, %v227
        %vm907 = vcmp.eq.s32.totalorder %v749, %v227
        %vm908 = vcmp.eq.s32.totalorder %v752, %v227
        %vm909 = vcmp.eq.s32.totalorder %v755, %v227
        %vm910 = vcmp.eq.s32.totalorder %v758, %v227
        %vm911 = vcmp.eq.s32.totalorder %v761, %v227
        %vm912 = vcmp.eq.s32.totalorder %v764, %v227
        %vm913 = vcmp.eq.s32.totalorder %v767, %v227
        %vm914 = vcmp.eq.s32.totalorder %v770, %v227
        %vm915 = vcmp.eq.s32.totalorder %v773, %v227
        %vm916 = vcmp.eq.s32.totalorder %v776, %v227
        %vm917 = vcmp.eq.s32.totalorder %v779, %v227
        %vm918 = vcmp.eq.s32.totalorder %v782, %v227
        %vm919 = vcmp.eq.s32.totalorder %v785, %v227
        %vm920 = vcmp.eq.s32.totalorder %v788, %v227
        %vm921 = vcmp.eq.s32.totalorder %v791, %v227
        %vm922 = vcmp.eq.s32.totalorder %v794, %v227
        %vm923 = vcmp.eq.s32.totalorder %v797, %v227
        %vm924 = vcmp.eq.s32.totalorder %v800, %v227
        %vm925 = vcmp.eq.s32.totalorder %v803, %v227
        %vm926 = vcmp.eq.s32.totalorder %v806, %v227
        %vm927 = vcmp.eq.s32.totalorder %v809, %v227
        %vm928 = vcmp.eq.s32.totalorder %v812, %v227
        %vm929 = vcmp.eq.s32.totalorder %v815, %v227
        %vm930 = vcmp.eq.s32.totalorder %v818, %v227
        %vm931 = vcmp.eq.s32.totalorder %v821, %v227
        %vm932 = vcmp.eq.s32.totalorder %v824, %v227
        %vm933 = vcmp.eq.s32.totalorder %v827, %v227
        %vm934 = vcmp.eq.s32.totalorder %v830, %v227
        %vm935 = vcmp.eq.s32.totalorder %v833, %v227
        %vm936 = vcmp.eq.s32.totalorder %v836, %v227
        %vm937 = vcmp.eq.s32.totalorder %v839, %v227
        %vm938 = vcmp.eq.s32.totalorder %v842, %v227
        %vm939 = vcmp.eq.s32.totalorder %v845, %v227
        %vm940 = vcmp.eq.s32.totalorder %v848, %v227
        %vm941 = vcmp.eq.s32.totalorder %v851, %v227
        %vm942 = vcmp.eq.s32.totalorder %v854, %v227
        %vm943 = vcmp.eq.s32.totalorder %v857, %v227
        %vm944 = vcmp.eq.s32.totalorder %v860, %v227
        %vm945 = vcmp.eq.s32.totalorder %v863, %v227
        %vm946 = vcmp.eq.s32.totalorder %v866, %v227
        %vm947 = vcmp.eq.s32.totalorder %v869, %v227
        %vm948 = vcmp.eq.s32.totalorder %v872, %v227
        %vm949 = vcmp.eq.s32.totalorder %v875, %v227
        %vm950 = vcmp.eq.s32.totalorder %v878, %v227
        %vm951 = vcmp.eq.s32.totalorder %v881, %v227
        %vm952 = vcmp.eq.s32.totalorder %v884, %v227
        %vm953 = vcmp.eq.s32.totalorder %v887, %v227
        %v954 = vsel %vm888, 1, 0
        %v955 = vsel %vm889, 1, 0
        %v956 = vsel %vm890, 1, 0
        %v957 = vsel %vm891, 1, 0
        %v958 = vsel %vm892, 1, 0
        %v959 = vsel %vm893, 1, 0
        %v960 = vsel %vm894, 1, 0
        %v961 = vsel %vm895, 1, 0
        %v962 = vsel %vm896, 1, 0
        %v963 = vsel %vm897, 1, 0
        %v964 = vsel %vm898, 1, 0
        %v965 = vsel %vm899, 1, 0
        %v966 = vsel %vm900, 1, 0
        %v967 = vsel %vm901, 1, 0
        %v968 = vsel %vm902, 1, 0
        %v969 = vsel %vm903, 1, 0
        %v970 = vsel %vm904, 1, 0
        %v971 = vsel %vm905, 1, 0
        %v972 = vsel %vm906, 1, 0
        %v973 = vsel %vm907, 1, 0
        %v974 = vsel %vm908, 1, 0
        %v975 = vsel %vm909, 1, 0
        %v976 = vsel %vm910, 1, 0
        %v977 = vsel %vm911, 1, 0
        %v978 = vsel %vm912, 1, 0
        %v979 = vsel %vm913, 1, 0
        %v980 = vsel %vm914, 1, 0
        %v981 = vsel %vm915, 1, 0
        %v982 = vsel %vm916, 1, 0
        %v983 = vsel %vm917, 1, 0
        %v984 = vsel %vm918, 1, 0
        %v985 = vsel %vm919, 1, 0
        %v986 = vsel %vm920, 1, 0
        %v987 = vsel %vm921, 1, 0
        %v988 = vsel %vm922, 1, 0
        %v989 = vsel %vm923, 1, 0
        %v990 = vsel %vm924, 1, 0
        %v991 = vsel %vm925, 1, 0
        %v992 = vsel %vm926, 1, 0
        %v993 = vsel %vm927, 1, 0
        %v994 = vsel %vm928, 1, 0
        %v995 = vsel %vm929, 1, 0
        %v996 = vsel %vm930, 1, 0
        %v997 = vsel %vm931, 1, 0
        %v998 = vsel %vm932, 1, 0
        %v999 = vsel %vm933, 1, 0
        %v1000 = vsel %vm934, 1, 0
        %v1001 = vsel %vm935, 1, 0
        %v1002 = vsel %vm936, 1, 0
        %v1003 = vsel %vm937, 1, 0
        %v1004 = vsel %vm938, 1, 0
        %v1005 = vsel %vm939, 1, 0
        %v1006 = vsel %vm940, 1, 0
        %v1007 = vsel %vm941, 1, 0
        %v1008 = vsel %vm942, 1, 0
        %v1009 = vsel %vm943, 1, 0
        %v1010 = vsel %vm944, 1, 0
        %v1011 = vsel %vm945, 1, 0
        %v1012 = vsel %vm946, 1, 0
        %v1013 = vsel %vm947, 1, 0
        %v1014 = vsel %vm948, 1, 0
        %v1015 = vsel %vm949, 1, 0
        %v1016 = vsel %vm950, 1, 0
        %v1017 = vsel %vm951, 1, 0
        %v1018 = vsel %vm952, 1, 0
        %v1019 = vsel %vm953, 1, 0
        %v1020 = vcvt.s32.f32 %v954
        %v1021 = vcvt.s32.f32 %v955
        %v1022 = vcvt.s32.f32 %v956
        %v1023 = vcvt.s32.f32 %v957
        %v1024 = vcvt.s32.f32 %v958
        %v1025 = vcvt.s32.f32 %v959
        %v1026 = vcvt.s32.f32 %v960
        %v1027 = vcvt.s32.f32 %v961
        %v1028 = vcvt.s32.f32 %v962
        %v1029 = vcvt.s32.f32 %v963
        %v1030 = vcvt.s32.f32 %v964
        %v1031 = vcvt.s32.f32 %v965
        %v1032 = vcvt.s32.f32 %v966
        %v1033 = vcvt.s32.f32 %v967
        %v1034 = vcvt.s32.f32 %v968
        %v1035 = vcvt.s32.f32 %v969
        %v1036 = vcvt.s32.f32 %v970
        %v1037 = vcvt.s32.f32 %v971
        %v1038 = vcvt.s32.f32 %v972
        %v1039 = vcvt.s32.f32 %v973
        %v1040 = vcvt.s32.f32 %v974
        %v1041 = vcvt.s32.f32 %v975
        %v1042 = vcvt.s32.f32 %v976
        %v1043 = vcvt.s32.f32 %v977
        %v1044 = vcvt.s32.f32 %v978
        %v1045 = vcvt.s32.f32 %v979
        %v1046 = vcvt.s32.f32 %v980
        %v1047 = vcvt.s32.f32 %v981
        %v1048 = vcvt.s32.f32 %v982
        %v1049 = vcvt.s32.f32 %v983
        %v1050 = vcvt.s32.f32 %v984
        %v1051 = vcvt.s32.f32 %v985
        %v1052 = vcvt.s32.f32 %v986
        %v1053 = vcvt.s32.f32 %v987
        %v1054 = vcvt.s32.f32 %v988
        %v1055 = vcvt.s32.f32 %v989
        %v1056 = vcvt.s32.f32 %v990
        %v1057 = vcvt.s32.f32 %v991
        %v1058 = vcvt.s32.f32 %v992
        %v1059 = vcvt.s32.f32 %v993
        %v1060 = vcvt.s32.f32 %v994
        %v1061 = vcvt.s32.f32 %v995
        %v1062 = vcvt.s32.f32 %v996
        %v1063 = vcvt.s32.f32 %v997
        %v1064 = vcvt.s32.f32 %v998
        %v1065 = vcvt.s32.f32 %v999
        %v1066 = vcvt.s32.f32 %v1000
        %v1067 = vcvt.s32.f32 %v1001
        %v1068 = vcvt.s32.f32 %v1002
        %v1069 = vcvt.s32.f32 %v1003
        %v1070 = vcvt.s32.f32 %v1004
        %v1071 = vcvt.s32.f32 %v1005
        %v1072 = vcvt.s32.f32 %v1006
        %v1073 = vcvt.s32.f32 %v1007
        %v1074 = vcvt.s32.f32 %v1008
        %v1075 = vcvt.s32.f32 %v1009
        %v1076 = vcvt.s32.f32 %v1010
        %v1077 = vcvt.s32.f32 %v1011
        %v1078 = vcvt.s32.f32 %v1012
        %v1079 = vcvt.s32.f32 %v1013
        %v1080 = vcvt.s32.f32 %v1014
        %v1081 = vcvt.s32.f32 %v1015
        %v1082 = vcvt.s32.f32 %v1016
        %v1083 = vcvt.s32.f32 %v1017
        %v1084 = vcvt.s32.f32 %v1018
        %v1085 = vcvt.s32.f32 %v1019
        %v1086 = vadd.f32 %v624, %v1020
        %v1087 = vadd.f32 %v625, %v1021
        %v1088 = vadd.f32 %v626, %v1022
        %v1089 = vadd.f32 %v627, %v1023
        %v1090 = vadd.f32 %v628, %v1024
        %v1091 = vadd.f32 %v629, %v1025
        %v1092 = vadd.f32 %v630, %v1026
        %v1093 = vadd.f32 %v631, %v1027
        %v1094 = vadd.f32 %v632, %v1028
        %v1095 = vadd.f32 %v633, %v1029
        %v1096 = vadd.f32 %v634, %v1030
        %v1097 = vadd.f32 %v635, %v1031
        %v1098 = vadd.f32 %v636, %v1032
        %v1099 = vadd.f32 %v637, %v1033
        %v1100 = vadd.f32 %v638, %v1034
        %v1101 = vadd.f32 %v639, %v1035
        %v1102 = vadd.f32 %v640, %v1036
        %v1103 = vadd.f32 %v641, %v1037
        %v1104 = vadd.f32 %v642, %v1038
        %v1105 = vadd.f32 %v643, %v1039
        %v1106 = vadd.f32 %v644, %v1040
        %v1107 = vadd.f32 %v645, %v1041
        %v1108 = vadd.f32 %v646, %v1042
        %v1109 = vadd.f32 %v647, %v1043
        %v1110 = vadd.f32 %v648, %v1044
        %v1111 = vadd.f32 %v649, %v1045
        %v1112 = vadd.f32 %v650, %v1046
        %v1113 = vadd.f32 %v651, %v1047
        %v1114 = vadd.f32 %v652, %v1048
        %v1115 = vadd.f32 %v653, %v1049
        %v1116 = vadd.f32 %v654, %v1050
        %v1117 = vadd.f32 %v655, %v1051
        %v1118 = vadd.f32 %v656, %v1052
        %v1119 = vadd.f32 %v657, %v1053
        %v1120 = vadd.f32 %v658, %v1054
        %v1121 = vadd.f32 %v659, %v1055
        %v1122 = vadd.f32 %v660, %v1056
        %v1123 = vadd.f32 %v661, %v1057
        %v1124 = vadd.f32 %v662, %v1058
        %v1125 = vadd.f32 %v663, %v1059
        %v1126 = vadd.f32 %v664, %v1060
        %v1127 = vadd.f32 %v665, %v1061
        %v1128 = vadd.f32 %v666, %v1062
        %v1129 = vadd.f32 %v667, %v1063
        %v1130 = vadd.f32 %v668, %v1064
        %v1131 = vadd.f32 %v669, %v1065
        %v1132 = vadd.f32 %v670, %v1066
        %v1133 = vadd.f32 %v671, %v1067
        %v1134 = vadd.f32 %v672, %v1068
        %v1135 = vadd.f32 %v673, %v1069
        %v1136 = vadd.f32 %v674, %v1070
        %v1137 = vadd.f32 %v675, %v1071
        %v1138 = vadd.f32 %v676, %v1072
        %v1139 = vadd.f32 %v677, %v1073
        %v1140 = vadd.f32 %v678, %v1074
        %v1141 = vadd.f32 %v679, %v1075
        %v1142 = vadd.f32 %v680, %v1076
        %v1143 = vadd.f32 %v681, %v1077
        %v1144 = vadd.f32 %v682, %v1078
        %v1145 = vadd.f32 %v683, %v1079
        %v1146 = vadd.f32 %v684, %v1080
        %v1147 = vadd.f32 %v685, %v1081
        %v1148 = vadd.f32 %v686, %v1082
        %v1149 = vadd.f32 %v687, %v1083
        %v1150 = vadd.f32 %v688, %v1084
        %v1151 = vadd.f32 %v689, %v1085
        %1152 = vset.pattern.permute.xlu0 2
        %1153 = vperm.xlu0 %1152, %v160
        %v1154 = vpop.permute.xlu0 %1153
        %1155 = vset.pattern.permute.xlu0 2
        %1156 = vperm.xlu0 %1155, %v161
        %v1157 = vpop.permute.xlu0 %1156
        %1158 = vset.pattern.permute.xlu0 2
        %1159 = vperm.xlu0 %1158, %v162
        %v1160 = vpop.permute.xlu0 %1159
        %1161 = vset.pattern.permute.xlu0 2
        %1162 = vperm.xlu0 %1161, %v163
        %v1163 = vpop.permute.xlu0 %1162
        %1164 = vset.pattern.permute.xlu0 2
        %1165 = vperm.xlu0 %1164, %v164
        %v1166 = vpop.permute.xlu0 %1165
        %1167 = vset.pattern.permute.xlu0 2
        %1168 = vperm.xlu0 %1167, %v165
        %v1169 = vpop.permute.xlu0 %1168
        %1170 = vset.pattern.permute.xlu0 2
        %1171 = vperm.xlu0 %1170, %v166
        %v1172 = vpop.permute.xlu0 %1171
        %1173 = vset.pattern.permute.xlu0 2
        %1174 = vperm.xlu0 %1173, %v167
        %v1175 = vpop.permute.xlu0 %1174
        %1176 = vset.pattern.permute.xlu0 2
        %1177 = vperm.xlu0 %1176, %v168
        %v1178 = vpop.permute.xlu0 %1177
        %1179 = vset.pattern.permute.xlu0 2
        %1180 = vperm.xlu0 %1179, %v169
        %v1181 = vpop.permute.xlu0 %1180
        %1182 = vset.pattern.permute.xlu0 2
        %1183 = vperm.xlu0 %1182, %v170
        %v1184 = vpop.permute.xlu0 %1183
        %1185 = vset.pattern.permute.xlu0 2
        %1186 = vperm.xlu0 %1185, %v171
        %v1187 = vpop.permute.xlu0 %1186
        %1188 = vset.pattern.permute.xlu0 2
        %1189 = vperm.xlu0 %1188, %v172
        %v1190 = vpop.permute.xlu0 %1189
        %1191 = vset.pattern.permute.xlu0 2
        %1192 = vperm.xlu0 %1191, %v173
        %v1193 = vpop.permute.xlu0 %1192
        %1194 = vset.pattern.permute.xlu0 2
        %1195 = vperm.xlu0 %1194, %v174
        %v1196 = vpop.permute.xlu0 %1195
        %1197 = vset.pattern.permute.xlu0 2
        %1198 = vperm.xlu0 %1197, %v175
        %v1199 = vpop.permute.xlu0 %1198
        %1200 = vset.pattern.permute.xlu0 2
        %1201 = vperm.xlu0 %1200, %v176
        %v1202 = vpop.permute.xlu0 %1201
        %1203 = vset.pattern.permute.xlu0 2
        %1204 = vperm.xlu0 %1203, %v177
        %v1205 = vpop.permute.xlu0 %1204
        %1206 = vset.pattern.permute.xlu0 2
        %1207 = vperm.xlu0 %1206, %v178
        %v1208 = vpop.permute.xlu0 %1207
        %1209 = vset.pattern.permute.xlu0 2
        %1210 = vperm.xlu0 %1209, %v179
        %v1211 = vpop.permute.xlu0 %1210
        %1212 = vset.pattern.permute.xlu0 2
        %1213 = vperm.xlu0 %1212, %v180
        %v1214 = vpop.permute.xlu0 %1213
        %1215 = vset.pattern.permute.xlu0 2
        %1216 = vperm.xlu0 %1215, %v181
        %v1217 = vpop.permute.xlu0 %1216
        %1218 = vset.pattern.permute.xlu0 2
        %1219 = vperm.xlu0 %1218, %v182
        %v1220 = vpop.permute.xlu0 %1219
        %1221 = vset.pattern.permute.xlu0 2
        %1222 = vperm.xlu0 %1221, %v183
        %v1223 = vpop.permute.xlu0 %1222
        %1224 = vset.pattern.permute.xlu0 2
        %1225 = vperm.xlu0 %1224, %v184
        %v1226 = vpop.permute.xlu0 %1225
        %1227 = vset.pattern.permute.xlu0 2
        %1228 = vperm.xlu0 %1227, %v185
        %v1229 = vpop.permute.xlu0 %1228
        %1230 = vset.pattern.permute.xlu0 2
        %1231 = vperm.xlu0 %1230, %v186
        %v1232 = vpop.permute.xlu0 %1231
        %1233 = vset.pattern.permute.xlu0 2
        %1234 = vperm.xlu0 %1233, %v187
        %v1235 = vpop.permute.xlu0 %1234
        %1236 = vset.pattern.permute.xlu0 2
        %1237 = vperm.xlu0 %1236, %v188
        %v1238 = vpop.permute.xlu0 %1237
        %1239 = vset.pattern.permute.xlu0 2
        %1240 = vperm.xlu0 %1239, %v189
        %v1241 = vpop.permute.xlu0 %1240
        %1242 = vset.pattern.permute.xlu0 2
        %1243 = vperm.xlu0 %1242, %v190
        %v1244 = vpop.permute.xlu0 %1243
        %1245 = vset.pattern.permute.xlu0 2
        %1246 = vperm.xlu0 %1245, %v191
        %v1247 = vpop.permute.xlu0 %1246
        %1248 = vset.pattern.permute.xlu0 2
        %1249 = vperm.xlu0 %1248, %v192
        %v1250 = vpop.permute.xlu0 %1249
        %1251 = vset.pattern.permute.xlu0 2
        %1252 = vperm.xlu0 %1251, %v193
        %v1253 = vpop.permute.xlu0 %1252
        %1254 = vset.pattern.permute.xlu0 2
        %1255 = vperm.xlu0 %1254, %v194
        %v1256 = vpop.permute.xlu0 %1255
        %1257 = vset.pattern.permute.xlu0 2
        %1258 = vperm.xlu0 %1257, %v195
        %v1259 = vpop.permute.xlu0 %1258
        %1260 = vset.pattern.permute.xlu0 2
        %1261 = vperm.xlu0 %1260, %v196
        %v1262 = vpop.permute.xlu0 %1261
        %1263 = vset.pattern.permute.xlu0 2
        %1264 = vperm.xlu0 %1263, %v197
        %v1265 = vpop.permute.xlu0 %1264
        %1266 = vset.pattern.permute.xlu0 2
        %1267 = vperm.xlu0 %1266, %v198
        %v1268 = vpop.permute.xlu0 %1267
        %1269 = vset.pattern.permute.xlu0 2
        %1270 = vperm.xlu0 %1269, %v199
        %v1271 = vpop.permute.xlu0 %1270
        %1272 = vset.pattern.permute.xlu0 2
        %1273 = vperm.xlu0 %1272, %v200
        %v1274 = vpop.permute.xlu0 %1273
        %1275 = vset.pattern.permute.xlu0 2
        %1276 = vperm.xlu0 %1275, %v201
        %v1277 = vpop.permute.xlu0 %1276
        %1278 = vset.pattern.permute.xlu0 2
        %1279 = vperm.xlu0 %1278, %v202
        %v1280 = vpop.permute.xlu0 %1279
        %1281 = vset.pattern.permute.xlu0 2
        %1282 = vperm.xlu0 %1281, %v203
        %v1283 = vpop.permute.xlu0 %1282
        %1284 = vset.pattern.permute.xlu0 2
        %1285 = vperm.xlu0 %1284, %v204
        %v1286 = vpop.permute.xlu0 %1285
        %1287 = vset.pattern.permute.xlu0 2
        %1288 = vperm.xlu0 %1287, %v205
        %v1289 = vpop.permute.xlu0 %1288
        %1290 = vset.pattern.permute.xlu0 2
        %1291 = vperm.xlu0 %1290, %v206
        %v1292 = vpop.permute.xlu0 %1291
        %1293 = vset.pattern.permute.xlu0 2
        %1294 = vperm.xlu0 %1293, %v207
        %v1295 = vpop.permute.xlu0 %1294
        %1296 = vset.pattern.permute.xlu0 2
        %1297 = vperm.xlu0 %1296, %v208
        %v1298 = vpop.permute.xlu0 %1297
        %1299 = vset.pattern.permute.xlu0 2
        %1300 = vperm.xlu0 %1299, %v209
        %v1301 = vpop.permute.xlu0 %1300
        %1302 = vset.pattern.permute.xlu0 2
        %1303 = vperm.xlu0 %1302, %v210
        %v1304 = vpop.permute.xlu0 %1303
        %1305 = vset.pattern.permute.xlu0 2
        %1306 = vperm.xlu0 %1305, %v211
        %v1307 = vpop.permute.xlu0 %1306
        %1308 = vset.pattern.permute.xlu0 2
        %1309 = vperm.xlu0 %1308, %v212
        %v1310 = vpop.permute.xlu0 %1309
        %1311 = vset.pattern.permute.xlu0 2
        %1312 = vperm.xlu0 %1311, %v213
        %v1313 = vpop.permute.xlu0 %1312
        %1314 = vset.pattern.permute.xlu0 2
        %1315 = vperm.xlu0 %1314, %v214
        %v1316 = vpop.permute.xlu0 %1315
        %1317 = vset.pattern.permute.xlu0 2
        %1318 = vperm.xlu0 %1317, %v215
        %v1319 = vpop.permute.xlu0 %1318
        %1320 = vset.pattern.permute.xlu0 2
        %1321 = vperm.xlu0 %1320, %v216
        %v1322 = vpop.permute.xlu0 %1321
        %1323 = vset.pattern.permute.xlu0 2
        %1324 = vperm.xlu0 %1323, %v217
        %v1325 = vpop.permute.xlu0 %1324
        %1326 = vset.pattern.permute.xlu0 2
        %1327 = vperm.xlu0 %1326, %v218
        %v1328 = vpop.permute.xlu0 %1327
        %1329 = vset.pattern.permute.xlu0 2
        %1330 = vperm.xlu0 %1329, %v219
        %v1331 = vpop.permute.xlu0 %1330
        %1332 = vset.pattern.permute.xlu0 2
        %1333 = vperm.xlu0 %1332, %v220
        %v1334 = vpop.permute.xlu0 %1333
        %1335 = vset.pattern.permute.xlu0 2
        %1336 = vperm.xlu0 %1335, %v221
        %v1337 = vpop.permute.xlu0 %1336
        %1338 = vset.pattern.permute.xlu0 2
        %1339 = vperm.xlu0 %1338, %v222
        %v1340 = vpop.permute.xlu0 %1339
        %1341 = vset.pattern.permute.xlu0 2
        %1342 = vperm.xlu0 %1341, %v223
        %v1343 = vpop.permute.xlu0 %1342
        %1344 = vset.pattern.permute.xlu0 2
        %1345 = vperm.xlu0 %1344, %v224
        %v1346 = vpop.permute.xlu0 %1345
        %1347 = vset.pattern.permute.xlu0 2
        %1348 = vperm.xlu0 %1347, %v225
        %v1349 = vpop.permute.xlu0 %1348
        %vm1350 = vcmp.eq.s32.totalorder %v1154, %v227
        %vm1351 = vcmp.eq.s32.totalorder %v1157, %v227
        %vm1352 = vcmp.eq.s32.totalorder %v1160, %v227
        %vm1353 = vcmp.eq.s32.totalorder %v1163, %v227
        %vm1354 = vcmp.eq.s32.totalorder %v1166, %v227
        %vm1355 = vcmp.eq.s32.totalorder %v1169, %v227
        %vm1356 = vcmp.eq.s32.totalorder %v1172, %v227
        %vm1357 = vcmp.eq.s32.totalorder %v1175, %v227
        %vm1358 = vcmp.eq.s32.totalorder %v1178, %v227
        %vm1359 = vcmp.eq.s32.totalorder %v1181, %v227
        %vm1360 = vcmp.eq.s32.totalorder %v1184, %v227
        %vm1361 = vcmp.eq.s32.totalorder %v1187, %v227
        %vm1362 = vcmp.eq.s32.totalorder %v1190, %v227
        %vm1363 = vcmp.eq.s32.totalorder %v1193, %v227
        %vm1364 = vcmp.eq.s32.totalorder %v1196, %v227
        %vm1365 = vcmp.eq.s32.totalorder %v1199, %v227
        %vm1366 = vcmp.eq.s32.totalorder %v1202, %v227
        %vm1367 = vcmp.eq.s32.totalorder %v1205, %v227
        %vm1368 = vcmp.eq.s32.totalorder %v1208, %v227
        %vm1369 = vcmp.eq.s32.totalorder %v1211, %v227
        %vm1370 = vcmp.eq.s32.totalorder %v1214, %v227
        %vm1371 = vcmp.eq.s32.totalorder %v1217, %v227
        %vm1372 = vcmp.eq.s32.totalorder %v1220, %v227
        %vm1373 = vcmp.eq.s32.totalorder %v1223, %v227
        %vm1374 = vcmp.eq.s32.totalorder %v1226, %v227
        %vm1375 = vcmp.eq.s32.totalorder %v1229, %v227
        %vm1376 = vcmp.eq.s32.totalorder %v1232, %v227
        %vm1377 = vcmp.eq.s32.totalorder %v1235, %v227
        %vm1378 = vcmp.eq.s32.totalorder %v1238, %v227
        %vm1379 = vcmp.eq.s32.totalorder %v1241, %v227
        %vm1380 = vcmp.eq.s32.totalorder %v1244, %v227
        %vm1381 = vcmp.eq.s32.totalorder %v1247, %v227
        %vm1382 = vcmp.eq.s32.totalorder %v1250, %v227
        %vm1383 = vcmp.eq.s32.totalorder %v1253, %v227
        %vm1384 = vcmp.eq.s32.totalorder %v1256, %v227
        %vm1385 = vcmp.eq.s32.totalorder %v1259, %v227
        %vm1386 = vcmp.eq.s32.totalorder %v1262, %v227
        %vm1387 = vcmp.eq.s32.totalorder %v1265, %v227
        %vm1388 = vcmp.eq.s32.totalorder %v1268, %v227
        %vm1389 = vcmp.eq.s32.totalorder %v1271, %v227
        %vm1390 = vcmp.eq.s32.totalorder %v1274, %v227
        %vm1391 = vcmp.eq.s32.totalorder %v1277, %v227
        %vm1392 = vcmp.eq.s32.totalorder %v1280, %v227
        %vm1393 = vcmp.eq.s32.totalorder %v1283, %v227
        %vm1394 = vcmp.eq.s32.totalorder %v1286, %v227
        %vm1395 = vcmp.eq.s32.totalorder %v1289, %v227
        %vm1396 = vcmp.eq.s32.totalorder %v1292, %v227
        %vm1397 = vcmp.eq.s32.totalorder %v1295, %v227
        %vm1398 = vcmp.eq.s32.totalorder %v1298, %v227
        %vm1399 = vcmp.eq.s32.totalorder %v1301, %v227
        %vm1400 = vcmp.eq.s32.totalorder %v1304, %v227
        %vm1401 = vcmp.eq.s32.totalorder %v1307, %v227
        %vm1402 = vcmp.eq.s32.totalorder %v1310, %v227
        %vm1403 = vcmp.eq.s32.totalorder %v1313, %v227
        %vm1404 = vcmp.eq.s32.totalorder %v1316, %v227
        %vm1405 = vcmp.eq.s32.totalorder %v1319, %v227
        %vm1406 = vcmp.eq.s32.totalorder %v1322, %v227
        %vm1407 = vcmp.eq.s32.totalorder %v1325, %v227
        %vm1408 = vcmp.eq.s32.totalorder %v1328, %v227
        %vm1409 = vcmp.eq.s32.totalorder %v1331, %v227
        %vm1410 = vcmp.eq.s32.totalorder %v1334, %v227
        %vm1411 = vcmp.eq.s32.totalorder %v1337, %v227
        %vm1412 = vcmp.eq.s32.totalorder %v1340, %v227
        %vm1413 = vcmp.eq.s32.totalorder %v1343, %v227
        %vm1414 = vcmp.eq.s32.totalorder %v1346, %v227
        %vm1415 = vcmp.eq.s32.totalorder %v1349, %v227
        %v1416 = vsel %vm1350, 1, 0
        %v1417 = vsel %vm1351, 1, 0
        %v1418 = vsel %vm1352, 1, 0
        %v1419 = vsel %vm1353, 1, 0
        %v1420 = vsel %vm1354, 1, 0
        %v1421 = vsel %vm1355, 1, 0
        %v1422 = vsel %vm1356, 1, 0
        %v1423 = vsel %vm1357, 1, 0
        %v1424 = vsel %vm1358, 1, 0
        %v1425 = vsel %vm1359, 1, 0
        %v1426 = vsel %vm1360, 1, 0
        %v1427 = vsel %vm1361, 1, 0
        %v1428 = vsel %vm1362, 1, 0
        %v1429 = vsel %vm1363, 1, 0
        %v1430 = vsel %vm1364, 1, 0
        %v1431 = vsel %vm1365, 1, 0
        %v1432 = vsel %vm1366, 1, 0
        %v1433 = vsel %vm1367, 1, 0
        %v1434 = vsel %vm1368, 1, 0
        %v1435 = vsel %vm1369, 1, 0
        %v1436 = vsel %vm1370, 1, 0
        %v1437 = vsel %vm1371, 1, 0
        %v1438 = vsel %vm1372, 1, 0
        %v1439 = vsel %vm1373, 1, 0
        %v1440 = vsel %vm1374, 1, 0
        %v1441 = vsel %vm1375, 1, 0
        %v1442 = vsel %vm1376, 1, 0
        %v1443 = vsel %vm1377, 1, 0
        %v1444 = vsel %vm1378, 1, 0
        %v1445 = vsel %vm1379, 1, 0
        %v1446 = vsel %vm1380, 1, 0
        %v1447 = vsel %vm1381, 1, 0
        %v1448 = vsel %vm1382, 1, 0
        %v1449 = vsel %vm1383, 1, 0
        %v1450 = vsel %vm1384, 1, 0
        %v1451 = vsel %vm1385, 1, 0
        %v1452 = vsel %vm1386, 1, 0
        %v1453 = vsel %vm1387, 1, 0
        %v1454 = vsel %vm1388, 1, 0
        %v1455 = vsel %vm1389, 1, 0
        %v1456 = vsel %vm1390, 1, 0
        %v1457 = vsel %vm1391, 1, 0
        %v1458 = vsel %vm1392, 1, 0
        %v1459 = vsel %vm1393, 1, 0
        %v1460 = vsel %vm1394, 1, 0
        %v1461 = vsel %vm1395, 1, 0
        %v1462 = vsel %vm1396, 1, 0
        %v1463 = vsel %vm1397, 1, 0
        %v1464 = vsel %vm1398, 1, 0
        %v1465 = vsel %vm1399, 1, 0
        %v1466 = vsel %vm1400, 1, 0
        %v1467 = vsel %vm1401, 1, 0
        %v1468 = vsel %vm1402, 1, 0
        %v1469 = vsel %vm1403, 1, 0
        %v1470 = vsel %vm1404, 1, 0
        %v1471 = vsel %vm1405, 1, 0
        %v1472 = vsel %vm1406, 1, 0
        %v1473 = vsel %vm1407, 1, 0
        %v1474 = vsel %vm1408, 1, 0
        %v1475 = vsel %vm1409, 1, 0
        %v1476 = vsel %vm1410, 1, 0
        %v1477 = vsel %vm1411, 1, 0
        %v1478 = vsel %vm1412, 1, 0
        %v1479 = vsel %vm1413, 1, 0
        %v1480 = vsel %vm1414, 1, 0
        %v1481 = vsel %vm1415, 1, 0
        %v1482 = vcvt.s32.f32 %v1416
        %v1483 = vcvt.s32.f32 %v1417
        %v1484 = vcvt.s32.f32 %v1418
        %v1485 = vcvt.s32.f32 %v1419
        %v1486 = vcvt.s32.f32 %v1420
        %v1487 = vcvt.s32.f32 %v1421
        %v1488 = vcvt.s32.f32 %v1422
        %v1489 = vcvt.s32.f32 %v1423
        %v1490 = vcvt.s32.f32 %v1424
        %v1491 = vcvt.s32.f32 %v1425
        %v1492 = vcvt.s32.f32 %v1426
        %v1493 = vcvt.s32.f32 %v1427
        %v1494 = vcvt.s32.f32 %v1428
        %v1495 = vcvt.s32.f32 %v1429
        %v1496 = vcvt.s32.f32 %v1430
        %v1497 = vcvt.s32.f32 %v1431
        %v1498 = vcvt.s32.f32 %v1432
        %v1499 = vcvt.s32.f32 %v1433
        %v1500 = vcvt.s32.f32 %v1434
        %v1501 = vcvt.s32.f32 %v1435
        %v1502 = vcvt.s32.f32 %v1436
        %v1503 = vcvt.s32.f32 %v1437
        %v1504 = vcvt.s32.f32 %v1438
        %v1505 = vcvt.s32.f32 %v1439
        %v1506 = vcvt.s32.f32 %v1440
        %v1507 = vcvt.s32.f32 %v1441
        %v1508 = vcvt.s32.f32 %v1442
        %v1509 = vcvt.s32.f32 %v1443
        %v1510 = vcvt.s32.f32 %v1444
        %v1511 = vcvt.s32.f32 %v1445
        %v1512 = vcvt.s32.f32 %v1446
        %v1513 = vcvt.s32.f32 %v1447
        %v1514 = vcvt.s32.f32 %v1448
        %v1515 = vcvt.s32.f32 %v1449
        %v1516 = vcvt.s32.f32 %v1450
        %v1517 = vcvt.s32.f32 %v1451
        %v1518 = vcvt.s32.f32 %v1452
        %v1519 = vcvt.s32.f32 %v1453
        %v1520 = vcvt.s32.f32 %v1454
        %v1521 = vcvt.s32.f32 %v1455
        %v1522 = vcvt.s32.f32 %v1456
        %v1523 = vcvt.s32.f32 %v1457
        %v1524 = vcvt.s32.f32 %v1458
        %v1525 = vcvt.s32.f32 %v1459
        %v1526 = vcvt.s32.f32 %v1460
        %v1527 = vcvt.s32.f32 %v1461
        %v1528 = vcvt.s32.f32 %v1462
        %v1529 = vcvt.s32.f32 %v1463
        %v1530 = vcvt.s32.f32 %v1464
        %v1531 = vcvt.s32.f32 %v1465
        %v1532 = vcvt.s32.f32 %v1466
        %v1533 = vcvt.s32.f32 %v1467
        %v1534 = vcvt.s32.f32 %v1468
        %v1535 = vcvt.s32.f32 %v1469
        %v1536 = vcvt.s32.f32 %v1470
        %v1537 = vcvt.s32.f32 %v1471
        %v1538 = vcvt.s32.f32 %v1472
        %v1539 = vcvt.s32.f32 %v1473
        %v1540 = vcvt.s32.f32 %v1474
        %v1541 = vcvt.s32.f32 %v1475
        %v1542 = vcvt.s32.f32 %v1476
        %v1543 = vcvt.s32.f32 %v1477
        %v1544 = vcvt.s32.f32 %v1478
        %v1545 = vcvt.s32.f32 %v1479
        %v1546 = vcvt.s32.f32 %v1480
        %v1547 = vcvt.s32.f32 %v1481
        %v1548 = vadd.f32 %v1086, %v1482
        %v1549 = vadd.f32 %v1087, %v1483
        %v1550 = vadd.f32 %v1088, %v1484
        %v1551 = vadd.f32 %v1089, %v1485
        %v1552 = vadd.f32 %v1090, %v1486
        %v1553 = vadd.f32 %v1091, %v1487
        %v1554 = vadd.f32 %v1092, %v1488
        %v1555 = vadd.f32 %v1093, %v1489
        %v1556 = vadd.f32 %v1094, %v1490
        %v1557 = vadd.f32 %v1095, %v1491
        %v1558 = vadd.f32 %v1096, %v1492
        %v1559 = vadd.f32 %v1097, %v1493
        %v1560 = vadd.f32 %v1098, %v1494
        %v1561 = vadd.f32 %v1099, %v1495
        %v1562 = vadd.f32 %v1100, %v1496
        %v1563 = vadd.f32 %v1101, %v1497
        %v1564 = vadd.f32 %v1102, %v1498
        %v1565 = vadd.f32 %v1103, %v1499
        %v1566 = vadd.f32 %v1104, %v1500
        %v1567 = vadd.f32 %v1105, %v1501
        %v1568 = vadd.f32 %v1106, %v1502
        %v1569 = vadd.f32 %v1107, %v1503
        %v1570 = vadd.f32 %v1108, %v1504
        %v1571 = vadd.f32 %v1109, %v1505
        %v1572 = vadd.f32 %v1110, %v1506
        %v1573 = vadd.f32 %v1111, %v1507
        %v1574 = vadd.f32 %v1112, %v1508
        %v1575 = vadd.f32 %v1113, %v1509
        %v1576 = vadd.f32 %v1114, %v1510
        %v1577 = vadd.f32 %v1115, %v1511
        %v1578 = vadd.f32 %v1116, %v1512
        %v1579 = vadd.f32 %v1117, %v1513
        %v1580 = vadd.f32 %v1118, %v1514
        %v1581 = vadd.f32 %v1119, %v1515
        %v1582 = vadd.f32 %v1120, %v1516
        %v1583 = vadd.f32 %v1121, %v1517
        %v1584 = vadd.f32 %v1122, %v1518
        %v1585 = vadd.f32 %v1123, %v1519
        %v1586 = vadd.f32 %v1124, %v1520
        %v1587 = vadd.f32 %v1125, %v1521
        %v1588 = vadd.f32 %v1126, %v1522
        %v1589 = vadd.f32 %v1127, %v1523
        %v1590 = vadd.f32 %v1128, %v1524
        %v1591 = vadd.f32 %v1129, %v1525
        %v1592 = vadd.f32 %v1130, %v1526
        %v1593 = vadd.f32 %v1131, %v1527
        %v1594 = vadd.f32 %v1132, %v1528
        %v1595 = vadd.f32 %v1133, %v1529
        %v1596 = vadd.f32 %v1134, %v1530
        %v1597 = vadd.f32 %v1135, %v1531
        %v1598 = vadd.f32 %v1136, %v1532
        %v1599 = vadd.f32 %v1137, %v1533
        %v1600 = vadd.f32 %v1138, %v1534
        %v1601 = vadd.f32 %v1139, %v1535
        %v1602 = vadd.f32 %v1140, %v1536
        %v1603 = vadd.f32 %v1141, %v1537
        %v1604 = vadd.f32 %v1142, %v1538
        %v1605 = vadd.f32 %v1143, %v1539
        %v1606 = vadd.f32 %v1144, %v1540
        %v1607 = vadd.f32 %v1145, %v1541
        %v1608 = vadd.f32 %v1146, %v1542
        %v1609 = vadd.f32 %v1147, %v1543
        %v1610 = vadd.f32 %v1148, %v1544
        %v1611 = vadd.f32 %v1149, %v1545
        %v1612 = vadd.f32 %v1150, %v1546
        %v1613 = vadd.f32 %v1151, %v1547
        %1614 = vset.pattern.permute.xlu0 3
        %1615 = vperm.xlu0 %1614, %v160
        %v1616 = vpop.permute.xlu0 %1615
        %1617 = vset.pattern.permute.xlu0 3
        %1618 = vperm.xlu0 %1617, %v161
        %v1619 = vpop.permute.xlu0 %1618
        %1620 = vset.pattern.permute.xlu0 3
        %1621 = vperm.xlu0 %1620, %v162
        %v1622 = vpop.permute.xlu0 %1621
        %1623 = vset.pattern.permute.xlu0 3
        %1624 = vperm.xlu0 %1623, %v163
        %v1625 = vpop.permute.xlu0 %1624
        %1626 = vset.pattern.permute.xlu0 3
        %1627 = vperm.xlu0 %1626, %v164
        %v1628 = vpop.permute.xlu0 %1627
        %1629 = vset.pattern.permute.xlu0 3
        %1630 = vperm.xlu0 %1629, %v165
        %v1631 = vpop.permute.xlu0 %1630
        %1632 = vset.pattern.permute.xlu0 3
        %1633 = vperm.xlu0 %1632, %v166
        %v1634 = vpop.permute.xlu0 %1633
        %1635 = vset.pattern.permute.xlu0 3
        %1636 = vperm.xlu0 %1635, %v167
        %v1637 = vpop.permute.xlu0 %1636
        %1638 = vset.pattern.permute.xlu0 3
        %1639 = vperm.xlu0 %1638, %v168
        %v1640 = vpop.permute.xlu0 %1639
        %1641 = vset.pattern.permute.xlu0 3
        %1642 = vperm.xlu0 %1641, %v169
        %v1643 = vpop.permute.xlu0 %1642
        %1644 = vset.pattern.permute.xlu0 3
        %1645 = vperm.xlu0 %1644, %v170
        %v1646 = vpop.permute.xlu0 %1645
        %1647 = vset.pattern.permute.xlu0 3
        %1648 = vperm.xlu0 %1647, %v171
        %v1649 = vpop.permute.xlu0 %1648
        %1650 = vset.pattern.permute.xlu0 3
        %1651 = vperm.xlu0 %1650, %v172
        %v1652 = vpop.permute.xlu0 %1651
        %1653 = vset.pattern.permute.xlu0 3
        %1654 = vperm.xlu0 %1653, %v173
        %v1655 = vpop.permute.xlu0 %1654
        %1656 = vset.pattern.permute.xlu0 3
        %1657 = vperm.xlu0 %1656, %v174
        %v1658 = vpop.permute.xlu0 %1657
        %1659 = vset.pattern.permute.xlu0 3
        %1660 = vperm.xlu0 %1659, %v175
        %v1661 = vpop.permute.xlu0 %1660
        %1662 = vset.pattern.permute.xlu0 3
        %1663 = vperm.xlu0 %1662, %v176
        %v1664 = vpop.permute.xlu0 %1663
        %1665 = vset.pattern.permute.xlu0 3
        %1666 = vperm.xlu0 %1665, %v177
        %v1667 = vpop.permute.xlu0 %1666
        %1668 = vset.pattern.permute.xlu0 3
        %1669 = vperm.xlu0 %1668, %v178
        %v1670 = vpop.permute.xlu0 %1669
        %1671 = vset.pattern.permute.xlu0 3
        %1672 = vperm.xlu0 %1671, %v179
        %v1673 = vpop.permute.xlu0 %1672
        %1674 = vset.pattern.permute.xlu0 3
        %1675 = vperm.xlu0 %1674, %v180
        %v1676 = vpop.permute.xlu0 %1675
        %1677 = vset.pattern.permute.xlu0 3
        %1678 = vperm.xlu0 %1677, %v181
        %v1679 = vpop.permute.xlu0 %1678
        %1680 = vset.pattern.permute.xlu0 3
        %1681 = vperm.xlu0 %1680, %v182
        %v1682 = vpop.permute.xlu0 %1681
        %1683 = vset.pattern.permute.xlu0 3
        %1684 = vperm.xlu0 %1683, %v183
        %v1685 = vpop.permute.xlu0 %1684
        %1686 = vset.pattern.permute.xlu0 3
        %1687 = vperm.xlu0 %1686, %v184
        %v1688 = vpop.permute.xlu0 %1687
        %1689 = vset.pattern.permute.xlu0 3
        %1690 = vperm.xlu0 %1689, %v185
        %v1691 = vpop.permute.xlu0 %1690
        %1692 = vset.pattern.permute.xlu0 3
        %1693 = vperm.xlu0 %1692, %v186
        %v1694 = vpop.permute.xlu0 %1693
        %1695 = vset.pattern.permute.xlu0 3
        %1696 = vperm.xlu0 %1695, %v187
        %v1697 = vpop.permute.xlu0 %1696
        %1698 = vset.pattern.permute.xlu0 3
        %1699 = vperm.xlu0 %1698, %v188
        %v1700 = vpop.permute.xlu0 %1699
        %1701 = vset.pattern.permute.xlu0 3
        %1702 = vperm.xlu0 %1701, %v189
        %v1703 = vpop.permute.xlu0 %1702
        %1704 = vset.pattern.permute.xlu0 3
        %1705 = vperm.xlu0 %1704, %v190
        %v1706 = vpop.permute.xlu0 %1705
        %1707 = vset.pattern.permute.xlu0 3
        %1708 = vperm.xlu0 %1707, %v191
        %v1709 = vpop.permute.xlu0 %1708
        %1710 = vset.pattern.permute.xlu0 3
        %1711 = vperm.xlu0 %1710, %v192
        %v1712 = vpop.permute.xlu0 %1711
        %1713 = vset.pattern.permute.xlu0 3
        %1714 = vperm.xlu0 %1713, %v193
        %v1715 = vpop.permute.xlu0 %1714
        %1716 = vset.pattern.permute.xlu0 3
        %1717 = vperm.xlu0 %1716, %v194
        %v1718 = vpop.permute.xlu0 %1717
        %1719 = vset.pattern.permute.xlu0 3
        %1720 = vperm.xlu0 %1719, %v195
        %v1721 = vpop.permute.xlu0 %1720
        %1722 = vset.pattern.permute.xlu0 3
        %1723 = vperm.xlu0 %1722, %v196
        %v1724 = vpop.permute.xlu0 %1723
        %1725 = vset.pattern.permute.xlu0 3
        %1726 = vperm.xlu0 %1725, %v197
        %v1727 = vpop.permute.xlu0 %1726
        %1728 = vset.pattern.permute.xlu0 3
        %1729 = vperm.xlu0 %1728, %v198
        %v1730 = vpop.permute.xlu0 %1729
        %1731 = vset.pattern.permute.xlu0 3
        %1732 = vperm.xlu0 %1731, %v199
        %v1733 = vpop.permute.xlu0 %1732
        %1734 = vset.pattern.permute.xlu0 3
        %1735 = vperm.xlu0 %1734, %v200
        %v1736 = vpop.permute.xlu0 %1735
        %1737 = vset.pattern.permute.xlu0 3
        %1738 = vperm.xlu0 %1737, %v201
        %v1739 = vpop.permute.xlu0 %1738
        %1740 = vset.pattern.permute.xlu0 3
        %1741 = vperm.xlu0 %1740, %v202
        %v1742 = vpop.permute.xlu0 %1741
        %1743 = vset.pattern.permute.xlu0 3
        %1744 = vperm.xlu0 %1743, %v203
        %v1745 = vpop.permute.xlu0 %1744
        %1746 = vset.pattern.permute.xlu0 3
        %1747 = vperm.xlu0 %1746, %v204
        %v1748 = vpop.permute.xlu0 %1747
        %1749 = vset.pattern.permute.xlu0 3
        %1750 = vperm.xlu0 %1749, %v205
        %v1751 = vpop.permute.xlu0 %1750
        %1752 = vset.pattern.permute.xlu0 3
        %1753 = vperm.xlu0 %1752, %v206
        %v1754 = vpop.permute.xlu0 %1753
        %1755 = vset.pattern.permute.xlu0 3
        %1756 = vperm.xlu0 %1755, %v207
        %v1757 = vpop.permute.xlu0 %1756
        %1758 = vset.pattern.permute.xlu0 3
        %1759 = vperm.xlu0 %1758, %v208
        %v1760 = vpop.permute.xlu0 %1759
        %1761 = vset.pattern.permute.xlu0 3
        %1762 = vperm.xlu0 %1761, %v209
        %v1763 = vpop.permute.xlu0 %1762
        %1764 = vset.pattern.permute.xlu0 3
        %1765 = vperm.xlu0 %1764, %v210
        %v1766 = vpop.permute.xlu0 %1765
        %1767 = vset.pattern.permute.xlu0 3
        %1768 = vperm.xlu0 %1767, %v211
        %v1769 = vpop.permute.xlu0 %1768
        %1770 = vset.pattern.permute.xlu0 3
        %1771 = vperm.xlu0 %1770, %v212
        %v1772 = vpop.permute.xlu0 %1771
        %1773 = vset.pattern.permute.xlu0 3
        %1774 = vperm.xlu0 %1773, %v213
        %v1775 = vpop.permute.xlu0 %1774
        %1776 = vset.pattern.permute.xlu0 3
        %1777 = vperm.xlu0 %1776, %v214
        %v1778 = vpop.permute.xlu0 %1777
        %1779 = vset.pattern.permute.xlu0 3
        %1780 = vperm.xlu0 %1779, %v215
        %v1781 = vpop.permute.xlu0 %1780
        %1782 = vset.pattern.permute.xlu0 3
        %1783 = vperm.xlu0 %1782, %v216
        %v1784 = vpop.permute.xlu0 %1783
        %1785 = vset.pattern.permute.xlu0 3
        %1786 = vperm.xlu0 %1785, %v217
        %v1787 = vpop.permute.xlu0 %1786
        %1788 = vset.pattern.permute.xlu0 3
        %1789 = vperm.xlu0 %1788, %v218
        %v1790 = vpop.permute.xlu0 %1789
        %1791 = vset.pattern.permute.xlu0 3
        %1792 = vperm.xlu0 %1791, %v219
        %v1793 = vpop.permute.xlu0 %1792
        %1794 = vset.pattern.permute.xlu0 3
        %1795 = vperm.xlu0 %1794, %v220
        %v1796 = vpop.permute.xlu0 %1795
        %1797 = vset.pattern.permute.xlu0 3
        %1798 = vperm.xlu0 %1797, %v221
        %v1799 = vpop.permute.xlu0 %1798
        %1800 = vset.pattern.permute.xlu0 3
        %1801 = vperm.xlu0 %1800, %v222
        %v1802 = vpop.permute.xlu0 %1801
        %1803 = vset.pattern.permute.xlu0 3
        %1804 = vperm.xlu0 %1803, %v223
        %v1805 = vpop.permute.xlu0 %1804
        %1806 = vset.pattern.permute.xlu0 3
        %1807 = vperm.xlu0 %1806, %v224
        %v1808 = vpop.permute.xlu0 %1807
        %1809 = vset.pattern.permute.xlu0 3
        %1810 = vperm.xlu0 %1809, %v225
        %v1811 = vpop.permute.xlu0 %1810
        %vm1812 = vcmp.eq.s32.totalorder %v1616, %v227
        %vm1813 = vcmp.eq.s32.totalorder %v1619, %v227
        %vm1814 = vcmp.eq.s32.totalorder %v1622, %v227
        %vm1815 = vcmp.eq.s32.totalorder %v1625, %v227
        %vm1816 = vcmp.eq.s32.totalorder %v1628, %v227
        %vm1817 = vcmp.eq.s32.totalorder %v1631, %v227
        %vm1818 = vcmp.eq.s32.totalorder %v1634, %v227
        %vm1819 = vcmp.eq.s32.totalorder %v1637, %v227
        %vm1820 = vcmp.eq.s32.totalorder %v1640, %v227
        %vm1821 = vcmp.eq.s32.totalorder %v1643, %v227
        %vm1822 = vcmp.eq.s32.totalorder %v1646, %v227
        %vm1823 = vcmp.eq.s32.totalorder %v1649, %v227
        %vm1824 = vcmp.eq.s32.totalorder %v1652, %v227
        %vm1825 = vcmp.eq.s32.totalorder %v1655, %v227
        %vm1826 = vcmp.eq.s32.totalorder %v1658, %v227
        %vm1827 = vcmp.eq.s32.totalorder %v1661, %v227
        %vm1828 = vcmp.eq.s32.totalorder %v1664, %v227
        %vm1829 = vcmp.eq.s32.totalorder %v1667, %v227
        %vm1830 = vcmp.eq.s32.totalorder %v1670, %v227
        %vm1831 = vcmp.eq.s32.totalorder %v1673, %v227
        %vm1832 = vcmp.eq.s32.totalorder %v1676, %v227
        %vm1833 = vcmp.eq.s32.totalorder %v1679, %v227
        %vm1834 = vcmp.eq.s32.totalorder %v1682, %v227
        %vm1835 = vcmp.eq.s32.totalorder %v1685, %v227
        %vm1836 = vcmp.eq.s32.totalorder %v1688, %v227
        %vm1837 = vcmp.eq.s32.totalorder %v1691, %v227
        %vm1838 = vcmp.eq.s32.totalorder %v1694, %v227
        %vm1839 = vcmp.eq.s32.totalorder %v1697, %v227
        %vm1840 = vcmp.eq.s32.totalorder %v1700, %v227
        %vm1841 = vcmp.eq.s32.totalorder %v1703, %v227
        %vm1842 = vcmp.eq.s32.totalorder %v1706, %v227
        %vm1843 = vcmp.eq.s32.totalorder %v1709, %v227
        %vm1844 = vcmp.eq.s32.totalorder %v1712, %v227
        %vm1845 = vcmp.eq.s32.totalorder %v1715, %v227
        %vm1846 = vcmp.eq.s32.totalorder %v1718, %v227
        %vm1847 = vcmp.eq.s32.totalorder %v1721, %v227
        %vm1848 = vcmp.eq.s32.totalorder %v1724, %v227
        %vm1849 = vcmp.eq.s32.totalorder %v1727, %v227
        %vm1850 = vcmp.eq.s32.totalorder %v1730, %v227
        %vm1851 = vcmp.eq.s32.totalorder %v1733, %v227
        %vm1852 = vcmp.eq.s32.totalorder %v1736, %v227
        %vm1853 = vcmp.eq.s32.totalorder %v1739, %v227
        %vm1854 = vcmp.eq.s32.totalorder %v1742, %v227
        %vm1855 = vcmp.eq.s32.totalorder %v1745, %v227
        %vm1856 = vcmp.eq.s32.totalorder %v1748, %v227
        %vm1857 = vcmp.eq.s32.totalorder %v1751, %v227
        %vm1858 = vcmp.eq.s32.totalorder %v1754, %v227
        %vm1859 = vcmp.eq.s32.totalorder %v1757, %v227
        %vm1860 = vcmp.eq.s32.totalorder %v1760, %v227
        %vm1861 = vcmp.eq.s32.totalorder %v1763, %v227
        %vm1862 = vcmp.eq.s32.totalorder %v1766, %v227
        %vm1863 = vcmp.eq.s32.totalorder %v1769, %v227
        %vm1864 = vcmp.eq.s32.totalorder %v1772, %v227
        %vm1865 = vcmp.eq.s32.totalorder %v1775, %v227
        %vm1866 = vcmp.eq.s32.totalorder %v1778, %v227
        %vm1867 = vcmp.eq.s32.totalorder %v1781, %v227
        %vm1868 = vcmp.eq.s32.totalorder %v1784, %v227
        %vm1869 = vcmp.eq.s32.totalorder %v1787, %v227
        %vm1870 = vcmp.eq.s32.totalorder %v1790, %v227
        %vm1871 = vcmp.eq.s32.totalorder %v1793, %v227
        %vm1872 = vcmp.eq.s32.totalorder %v1796, %v227
        %vm1873 = vcmp.eq.s32.totalorder %v1799, %v227
        %vm1874 = vcmp.eq.s32.totalorder %v1802, %v227
        %vm1875 = vcmp.eq.s32.totalorder %v1805, %v227
        %vm1876 = vcmp.eq.s32.totalorder %v1808, %v227
        %vm1877 = vcmp.eq.s32.totalorder %v1811, %v227
        %v1878 = vsel %vm1812, 1, 0
        %v1879 = vsel %vm1813, 1, 0
        %v1880 = vsel %vm1814, 1, 0
        %v1881 = vsel %vm1815, 1, 0
        %v1882 = vsel %vm1816, 1, 0
        %v1883 = vsel %vm1817, 1, 0
        %v1884 = vsel %vm1818, 1, 0
        %v1885 = vsel %vm1819, 1, 0
        %v1886 = vsel %vm1820, 1, 0
        %v1887 = vsel %vm1821, 1, 0
        %v1888 = vsel %vm1822, 1, 0
        %v1889 = vsel %vm1823, 1, 0
        %v1890 = vsel %vm1824, 1, 0
        %v1891 = vsel %vm1825, 1, 0
        %v1892 = vsel %vm1826, 1, 0
        %v1893 = vsel %vm1827, 1, 0
        %v1894 = vsel %vm1828, 1, 0
        %v1895 = vsel %vm1829, 1, 0
        %v1896 = vsel %vm1830, 1, 0
        %v1897 = vsel %vm1831, 1, 0
        %v1898 = vsel %vm1832, 1, 0
        %v1899 = vsel %vm1833, 1, 0
        %v1900 = vsel %vm1834, 1, 0
        %v1901 = vsel %vm1835, 1, 0
        %v1902 = vsel %vm1836, 1, 0
        %v1903 = vsel %vm1837, 1, 0
        %v1904 = vsel %vm1838, 1, 0
        %v1905 = vsel %vm1839, 1, 0
        %v1906 = vsel %vm1840, 1, 0
        %v1907 = vsel %vm1841, 1, 0
        %v1908 = vsel %vm1842, 1, 0
        %v1909 = vsel %vm1843, 1, 0
        %v1910 = vsel %vm1844, 1, 0
        %v1911 = vsel %vm1845, 1, 0
        %v1912 = vsel %vm1846, 1, 0
        %v1913 = vsel %vm1847, 1, 0
        %v1914 = vsel %vm1848, 1, 0
        %v1915 = vsel %vm1849, 1, 0
        %v1916 = vsel %vm1850, 1, 0
        %v1917 = vsel %vm1851, 1, 0
        %v1918 = vsel %vm1852, 1, 0
        %v1919 = vsel %vm1853, 1, 0
        %v1920 = vsel %vm1854, 1, 0
        %v1921 = vsel %vm1855, 1, 0
        %v1922 = vsel %vm1856, 1, 0
        %v1923 = vsel %vm1857, 1, 0
        %v1924 = vsel %vm1858, 1, 0
        %v1925 = vsel %vm1859, 1, 0
        %v1926 = vsel %vm1860, 1, 0
        %v1927 = vsel %vm1861, 1, 0
        %v1928 = vsel %vm1862, 1, 0
        %v1929 = vsel %vm1863, 1, 0
        %v1930 = vsel %vm1864, 1, 0
        %v1931 = vsel %vm1865, 1, 0
        %v1932 = vsel %vm1866, 1, 0
        %v1933 = vsel %vm1867, 1, 0
        %v1934 = vsel %vm1868, 1, 0
        %v1935 = vsel %vm1869, 1, 0
        %v1936 = vsel %vm1870, 1, 0
        %v1937 = vsel %vm1871, 1, 0
        %v1938 = vsel %vm1872, 1, 0
        %v1939 = vsel %vm1873, 1, 0
        %v1940 = vsel %vm1874, 1, 0
        %v1941 = vsel %vm1875, 1, 0
        %v1942 = vsel %vm1876, 1, 0
        %v1943 = vsel %vm1877, 1, 0
        %v1944 = vcvt.s32.f32 %v1878
        %v1945 = vcvt.s32.f32 %v1879
        %v1946 = vcvt.s32.f32 %v1880
        %v1947 = vcvt.s32.f32 %v1881
        %v1948 = vcvt.s32.f32 %v1882
        %v1949 = vcvt.s32.f32 %v1883
        %v1950 = vcvt.s32.f32 %v1884
        %v1951 = vcvt.s32.f32 %v1885
        %v1952 = vcvt.s32.f32 %v1886
        %v1953 = vcvt.s32.f32 %v1887
        %v1954 = vcvt.s32.f32 %v1888
        %v1955 = vcvt.s32.f32 %v1889
        %v1956 = vcvt.s32.f32 %v1890
        %v1957 = vcvt.s32.f32 %v1891
        %v1958 = vcvt.s32.f32 %v1892
        %v1959 = vcvt.s32.f32 %v1893
        %v1960 = vcvt.s32.f32 %v1894
        %v1961 = vcvt.s32.f32 %v1895
        %v1962 = vcvt.s32.f32 %v1896
        %v1963 = vcvt.s32.f32 %v1897
        %v1964 = vcvt.s32.f32 %v1898
        %v1965 = vcvt.s32.f32 %v1899
        %v1966 = vcvt.s32.f32 %v1900
        %v1967 = vcvt.s32.f32 %v1901
        %v1968 = vcvt.s32.f32 %v1902
        %v1969 = vcvt.s32.f32 %v1903
        %v1970 = vcvt.s32.f32 %v1904
        %v1971 = vcvt.s32.f32 %v1905
        %v1972 = vcvt.s32.f32 %v1906
        %v1973 = vcvt.s32.f32 %v1907
        %v1974 = vcvt.s32.f32 %v1908
        %v1975 = vcvt.s32.f32 %v1909
        %v1976 = vcvt.s32.f32 %v1910
        %v1977 = vcvt.s32.f32 %v1911
        %v1978 = vcvt.s32.f32 %v1912
        %v1979 = vcvt.s32.f32 %v1913
        %v1980 = vcvt.s32.f32 %v1914
        %v1981 = vcvt.s32.f32 %v1915
        %v1982 = vcvt.s32.f32 %v1916
        %v1983 = vcvt.s32.f32 %v1917
        %v1984 = vcvt.s32.f32 %v1918
        %v1985 = vcvt.s32.f32 %v1919
        %v1986 = vcvt.s32.f32 %v1920
        %v1987 = vcvt.s32.f32 %v1921
        %v1988 = vcvt.s32.f32 %v1922
        %v1989 = vcvt.s32.f32 %v1923
        %v1990 = vcvt.s32.f32 %v1924
        %v1991 = vcvt.s32.f32 %v1925
        %v1992 = vcvt.s32.f32 %v1926
        %v1993 = vcvt.s32.f32 %v1927
        %v1994 = vcvt.s32.f32 %v1928
        %v1995 = vcvt.s32.f32 %v1929
        %v1996 = vcvt.s32.f32 %v1930
        %v1997 = vcvt.s32.f32 %v1931
        %v1998 = vcvt.s32.f32 %v1932
        %v1999 = vcvt.s32.f32 %v1933
        %v2000 = vcvt.s32.f32 %v1934
        %v2001 = vcvt.s32.f32 %v1935
        %v2002 = vcvt.s32.f32 %v1936
        %v2003 = vcvt.s32.f32 %v1937
        %v2004 = vcvt.s32.f32 %v1938
        %v2005 = vcvt.s32.f32 %v1939
        %v2006 = vcvt.s32.f32 %v1940
        %v2007 = vcvt.s32.f32 %v1941
        %v2008 = vcvt.s32.f32 %v1942
        %v2009 = vcvt.s32.f32 %v1943
        %v2010 = vadd.f32 %v1548, %v1944
        %v2011 = vadd.f32 %v1549, %v1945
        %v2012 = vadd.f32 %v1550, %v1946
        %v2013 = vadd.f32 %v1551, %v1947
        %v2014 = vadd.f32 %v1552, %v1948
        %v2015 = vadd.f32 %v1553, %v1949
        %v2016 = vadd.f32 %v1554, %v1950
        %v2017 = vadd.f32 %v1555, %v1951
        %v2018 = vadd.f32 %v1556, %v1952
        %v2019 = vadd.f32 %v1557, %v1953
        %v2020 = vadd.f32 %v1558, %v1954
        %v2021 = vadd.f32 %v1559, %v1955
        %v2022 = vadd.f32 %v1560, %v1956
        %v2023 = vadd.f32 %v1561, %v1957
        %v2024 = vadd.f32 %v1562, %v1958
        %v2025 = vadd.f32 %v1563, %v1959
        %v2026 = vadd.f32 %v1564, %v1960
        %v2027 = vadd.f32 %v1565, %v1961
        %v2028 = vadd.f32 %v1566, %v1962
        %v2029 = vadd.f32 %v1567, %v1963
        %v2030 = vadd.f32 %v1568, %v1964
        %v2031 = vadd.f32 %v1569, %v1965
        %v2032 = vadd.f32 %v1570, %v1966
        %v2033 = vadd.f32 %v1571, %v1967
        %v2034 = vadd.f32 %v1572, %v1968
        %v2035 = vadd.f32 %v1573, %v1969
        %v2036 = vadd.f32 %v1574, %v1970
        %v2037 = vadd.f32 %v1575, %v1971
        %v2038 = vadd.f32 %v1576, %v1972
        %v2039 = vadd.f32 %v1577, %v1973
        %v2040 = vadd.f32 %v1578, %v1974
        %v2041 = vadd.f32 %v1579, %v1975
        %v2042 = vadd.f32 %v1580, %v1976
        %v2043 = vadd.f32 %v1581, %v1977
        %v2044 = vadd.f32 %v1582, %v1978
        %v2045 = vadd.f32 %v1583, %v1979
        %v2046 = vadd.f32 %v1584, %v1980
        %v2047 = vadd.f32 %v1585, %v1981
        %v2048 = vadd.f32 %v1586, %v1982
        %v2049 = vadd.f32 %v1587, %v1983
        %v2050 = vadd.f32 %v1588, %v1984
        %v2051 = vadd.f32 %v1589, %v1985
        %v2052 = vadd.f32 %v1590, %v1986
        %v2053 = vadd.f32 %v1591, %v1987
        %v2054 = vadd.f32 %v1592, %v1988
        %v2055 = vadd.f32 %v1593, %v1989
        %v2056 = vadd.f32 %v1594, %v1990
        %v2057 = vadd.f32 %v1595, %v1991
        %v2058 = vadd.f32 %v1596, %v1992
        %v2059 = vadd.f32 %v1597, %v1993
        %v2060 = vadd.f32 %v1598, %v1994
        %v2061 = vadd.f32 %v1599, %v1995
        %v2062 = vadd.f32 %v1600, %v1996
        %v2063 = vadd.f32 %v1601, %v1997
        %v2064 = vadd.f32 %v1602, %v1998
        %v2065 = vadd.f32 %v1603, %v1999
        %v2066 = vadd.f32 %v1604, %v2000
        %v2067 = vadd.f32 %v1605, %v2001
        %v2068 = vadd.f32 %v1606, %v2002
        %v2069 = vadd.f32 %v1607, %v2003
        %v2070 = vadd.f32 %v1608, %v2004
        %v2071 = vadd.f32 %v1609, %v2005
        %v2072 = vadd.f32 %v1610, %v2006
        %v2073 = vadd.f32 %v1611, %v2007
        %v2074 = vadd.f32 %v1612, %v2008
        %v2075 = vadd.f32 %v1613, %v2009
        %2076 = vset.pattern.permute.xlu0 4
        %2077 = vperm.xlu0 %2076, %v160
        %v2078 = vpop.permute.xlu0 %2077
        %2079 = vset.pattern.permute.xlu0 4
        %2080 = vperm.xlu0 %2079, %v161
        %v2081 = vpop.permute.xlu0 %2080
        %2082 = vset.pattern.permute.xlu0 4
        %2083 = vperm.xlu0 %2082, %v162
        %v2084 = vpop.permute.xlu0 %2083
        %2085 = vset.pattern.permute.xlu0 4
        %2086 = vperm.xlu0 %2085, %v163
        %v2087 = vpop.permute.xlu0 %2086
        %2088 = vset.pattern.permute.xlu0 4
        %2089 = vperm.xlu0 %2088, %v164
        %v2090 = vpop.permute.xlu0 %2089
        %2091 = vset.pattern.permute.xlu0 4
        %2092 = vperm.xlu0 %2091, %v165
        %v2093 = vpop.permute.xlu0 %2092
        %2094 = vset.pattern.permute.xlu0 4
        %2095 = vperm.xlu0 %2094, %v166
        %v2096 = vpop.permute.xlu0 %2095
        %2097 = vset.pattern.permute.xlu0 4
        %2098 = vperm.xlu0 %2097, %v167
        %v2099 = vpop.permute.xlu0 %2098
        %2100 = vset.pattern.permute.xlu0 4
        %2101 = vperm.xlu0 %2100, %v168
        %v2102 = vpop.permute.xlu0 %2101
        %2103 = vset.pattern.permute.xlu0 4
        %2104 = vperm.xlu0 %2103, %v169
        %v2105 = vpop.permute.xlu0 %2104
        %2106 = vset.pattern.permute.xlu0 4
        %2107 = vperm.xlu0 %2106, %v170
        %v2108 = vpop.permute.xlu0 %2107
        %2109 = vset.pattern.permute.xlu0 4
        %2110 = vperm.xlu0 %2109, %v171
        %v2111 = vpop.permute.xlu0 %2110
        %2112 = vset.pattern.permute.xlu0 4
        %2113 = vperm.xlu0 %2112, %v172
        %v2114 = vpop.permute.xlu0 %2113
        %2115 = vset.pattern.permute.xlu0 4
        %2116 = vperm.xlu0 %2115, %v173
        %v2117 = vpop.permute.xlu0 %2116
        %2118 = vset.pattern.permute.xlu0 4
        %2119 = vperm.xlu0 %2118, %v174
        %v2120 = vpop.permute.xlu0 %2119
        %2121 = vset.pattern.permute.xlu0 4
        %2122 = vperm.xlu0 %2121, %v175
        %v2123 = vpop.permute.xlu0 %2122
        %2124 = vset.pattern.permute.xlu0 4
        %2125 = vperm.xlu0 %2124, %v176
        %v2126 = vpop.permute.xlu0 %2125
        %2127 = vset.pattern.permute.xlu0 4
        %2128 = vperm.xlu0 %2127, %v177
        %v2129 = vpop.permute.xlu0 %2128
        %2130 = vset.pattern.permute.xlu0 4
        %2131 = vperm.xlu0 %2130, %v178
        %v2132 = vpop.permute.xlu0 %2131
        %2133 = vset.pattern.permute.xlu0 4
        %2134 = vperm.xlu0 %2133, %v179
        %v2135 = vpop.permute.xlu0 %2134
        %2136 = vset.pattern.permute.xlu0 4
        %2137 = vperm.xlu0 %2136, %v180
        %v2138 = vpop.permute.xlu0 %2137
        %2139 = vset.pattern.permute.xlu0 4
        %2140 = vperm.xlu0 %2139, %v181
        %v2141 = vpop.permute.xlu0 %2140
        %2142 = vset.pattern.permute.xlu0 4
        %2143 = vperm.xlu0 %2142, %v182
        %v2144 = vpop.permute.xlu0 %2143
        %2145 = vset.pattern.permute.xlu0 4
        %2146 = vperm.xlu0 %2145, %v183
        %v2147 = vpop.permute.xlu0 %2146
        %2148 = vset.pattern.permute.xlu0 4
        %2149 = vperm.xlu0 %2148, %v184
        %v2150 = vpop.permute.xlu0 %2149
        %2151 = vset.pattern.permute.xlu0 4
        %2152 = vperm.xlu0 %2151, %v185
        %v2153 = vpop.permute.xlu0 %2152
        %2154 = vset.pattern.permute.xlu0 4
        %2155 = vperm.xlu0 %2154, %v186
        %v2156 = vpop.permute.xlu0 %2155
        %2157 = vset.pattern.permute.xlu0 4
        %2158 = vperm.xlu0 %2157, %v187
        %v2159 = vpop.permute.xlu0 %2158
        %2160 = vset.pattern.permute.xlu0 4
        %2161 = vperm.xlu0 %2160, %v188
        %v2162 = vpop.permute.xlu0 %2161
        %2163 = vset.pattern.permute.xlu0 4
        %2164 = vperm.xlu0 %2163, %v189
        %v2165 = vpop.permute.xlu0 %2164
        %2166 = vset.pattern.permute.xlu0 4
        %2167 = vperm.xlu0 %2166, %v190
        %v2168 = vpop.permute.xlu0 %2167
        %2169 = vset.pattern.permute.xlu0 4
        %2170 = vperm.xlu0 %2169, %v191
        %v2171 = vpop.permute.xlu0 %2170
        %2172 = vset.pattern.permute.xlu0 4
        %2173 = vperm.xlu0 %2172, %v192
        %v2174 = vpop.permute.xlu0 %2173
        %2175 = vset.pattern.permute.xlu0 4
        %2176 = vperm.xlu0 %2175, %v193
        %v2177 = vpop.permute.xlu0 %2176
        %2178 = vset.pattern.permute.xlu0 4
        %2179 = vperm.xlu0 %2178, %v194
        %v2180 = vpop.permute.xlu0 %2179
        %2181 = vset.pattern.permute.xlu0 4
        %2182 = vperm.xlu0 %2181, %v195
        %v2183 = vpop.permute.xlu0 %2182
        %2184 = vset.pattern.permute.xlu0 4
        %2185 = vperm.xlu0 %2184, %v196
        %v2186 = vpop.permute.xlu0 %2185
        %2187 = vset.pattern.permute.xlu0 4
        %2188 = vperm.xlu0 %2187, %v197
        %v2189 = vpop.permute.xlu0 %2188
        %2190 = vset.pattern.permute.xlu0 4
        %2191 = vperm.xlu0 %2190, %v198
        %v2192 = vpop.permute.xlu0 %2191
        %2193 = vset.pattern.permute.xlu0 4
        %2194 = vperm.xlu0 %2193, %v199
        %v2195 = vpop.permute.xlu0 %2194
        %2196 = vset.pattern.permute.xlu0 4
        %2197 = vperm.xlu0 %2196, %v200
        %v2198 = vpop.permute.xlu0 %2197
        %2199 = vset.pattern.permute.xlu0 4
        %2200 = vperm.xlu0 %2199, %v201
        %v2201 = vpop.permute.xlu0 %2200
        %2202 = vset.pattern.permute.xlu0 4
        %2203 = vperm.xlu0 %2202, %v202
        %v2204 = vpop.permute.xlu0 %2203
        %2205 = vset.pattern.permute.xlu0 4
        %2206 = vperm.xlu0 %2205, %v203
        %v2207 = vpop.permute.xlu0 %2206
        %2208 = vset.pattern.permute.xlu0 4
        %2209 = vperm.xlu0 %2208, %v204
        %v2210 = vpop.permute.xlu0 %2209
        %2211 = vset.pattern.permute.xlu0 4
        %2212 = vperm.xlu0 %2211, %v205
        %v2213 = vpop.permute.xlu0 %2212
        %2214 = vset.pattern.permute.xlu0 4
        %2215 = vperm.xlu0 %2214, %v206
        %v2216 = vpop.permute.xlu0 %2215
        %2217 = vset.pattern.permute.xlu0 4
        %2218 = vperm.xlu0 %2217, %v207
        %v2219 = vpop.permute.xlu0 %2218
        %2220 = vset.pattern.permute.xlu0 4
        %2221 = vperm.xlu0 %2220, %v208
        %v2222 = vpop.permute.xlu0 %2221
        %2223 = vset.pattern.permute.xlu0 4
        %2224 = vperm.xlu0 %2223, %v209
        %v2225 = vpop.permute.xlu0 %2224
        %2226 = vset.pattern.permute.xlu0 4
        %2227 = vperm.xlu0 %2226, %v210
        %v2228 = vpop.permute.xlu0 %2227
        %2229 = vset.pattern.permute.xlu0 4
        %2230 = vperm.xlu0 %2229, %v211
        %v2231 = vpop.permute.xlu0 %2230
        %2232 = vset.pattern.permute.xlu0 4
        %2233 = vperm.xlu0 %2232, %v212
        %v2234 = vpop.permute.xlu0 %2233
        %2235 = vset.pattern.permute.xlu0 4
        %2236 = vperm.xlu0 %2235, %v213
        %v2237 = vpop.permute.xlu0 %2236
        %2238 = vset.pattern.permute.xlu0 4
        %2239 = vperm.xlu0 %2238, %v214
        %v2240 = vpop.permute.xlu0 %2239
        %2241 = vset.pattern.permute.xlu0 4
        %2242 = vperm.xlu0 %2241, %v215
        %v2243 = vpop.permute.xlu0 %2242
        %2244 = vset.pattern.permute.xlu0 4
        %2245 = vperm.xlu0 %2244, %v216
        %v2246 = vpop.permute.xlu0 %2245
        %2247 = vset.pattern.permute.xlu0 4
        %2248 = vperm.xlu0 %2247, %v217
        %v2249 = vpop.permute.xlu0 %2248
        %2250 = vset.pattern.permute.xlu0 4
        %2251 = vperm.xlu0 %2250, %v218
        %v2252 = vpop.permute.xlu0 %2251
        %2253 = vset.pattern.permute.xlu0 4
        %2254 = vperm.xlu0 %2253, %v219
        %v2255 = vpop.permute.xlu0 %2254
        %2256 = vset.pattern.permute.xlu0 4
        %2257 = vperm.xlu0 %2256, %v220
        %v2258 = vpop.permute.xlu0 %2257
        %2259 = vset.pattern.permute.xlu0 4
        %2260 = vperm.xlu0 %2259, %v221
        %v2261 = vpop.permute.xlu0 %2260
        %2262 = vset.pattern.permute.xlu0 4
        %2263 = vperm.xlu0 %2262, %v222
        %v2264 = vpop.permute.xlu0 %2263
        %2265 = vset.pattern.permute.xlu0 4
        %2266 = vperm.xlu0 %2265, %v223
        %v2267 = vpop.permute.xlu0 %2266
        %2268 = vset.pattern.permute.xlu0 4
        %2269 = vperm.xlu0 %2268, %v224
        %v2270 = vpop.permute.xlu0 %2269
        %2271 = vset.pattern.permute.xlu0 4
        %2272 = vperm.xlu0 %2271, %v225
        %v2273 = vpop.permute.xlu0 %2272
        %vm2274 = vcmp.eq.s32.totalorder %v2078, %v227
        %vm2275 = vcmp.eq.s32.totalorder %v2081, %v227
        %vm2276 = vcmp.eq.s32.totalorder %v2084, %v227
        %vm2277 = vcmp.eq.s32.totalorder %v2087, %v227
        %vm2278 = vcmp.eq.s32.totalorder %v2090, %v227
        %vm2279 = vcmp.eq.s32.totalorder %v2093, %v227
        %vm2280 = vcmp.eq.s32.totalorder %v2096, %v227
        %vm2281 = vcmp.eq.s32.totalorder %v2099, %v227
        %vm2282 = vcmp.eq.s32.totalorder %v2102, %v227
        %vm2283 = vcmp.eq.s32.totalorder %v2105, %v227
        %vm2284 = vcmp.eq.s32.totalorder %v2108, %v227
        %vm2285 = vcmp.eq.s32.totalorder %v2111, %v227
        %vm2286 = vcmp.eq.s32.totalorder %v2114, %v227
        %vm2287 = vcmp.eq.s32.totalorder %v2117, %v227
        %vm2288 = vcmp.eq.s32.totalorder %v2120, %v227
        %vm2289 = vcmp.eq.s32.totalorder %v2123, %v227
        %vm2290 = vcmp.eq.s32.totalorder %v2126, %v227
        %vm2291 = vcmp.eq.s32.totalorder %v2129, %v227
        %vm2292 = vcmp.eq.s32.totalorder %v2132, %v227
        %vm2293 = vcmp.eq.s32.totalorder %v2135, %v227
        %vm2294 = vcmp.eq.s32.totalorder %v2138, %v227
        %vm2295 = vcmp.eq.s32.totalorder %v2141, %v227
        %vm2296 = vcmp.eq.s32.totalorder %v2144, %v227
        %vm2297 = vcmp.eq.s32.totalorder %v2147, %v227
        %vm2298 = vcmp.eq.s32.totalorder %v2150, %v227
        %vm2299 = vcmp.eq.s32.totalorder %v2153, %v227
        %vm2300 = vcmp.eq.s32.totalorder %v2156, %v227
        %vm2301 = vcmp.eq.s32.totalorder %v2159, %v227
        %vm2302 = vcmp.eq.s32.totalorder %v2162, %v227
        %vm2303 = vcmp.eq.s32.totalorder %v2165, %v227
        %vm2304 = vcmp.eq.s32.totalorder %v2168, %v227
        %vm2305 = vcmp.eq.s32.totalorder %v2171, %v227
        %vm2306 = vcmp.eq.s32.totalorder %v2174, %v227
        %vm2307 = vcmp.eq.s32.totalorder %v2177, %v227
        %vm2308 = vcmp.eq.s32.totalorder %v2180, %v227
        %vm2309 = vcmp.eq.s32.totalorder %v2183, %v227
        %vm2310 = vcmp.eq.s32.totalorder %v2186, %v227
        %vm2311 = vcmp.eq.s32.totalorder %v2189, %v227
        %vm2312 = vcmp.eq.s32.totalorder %v2192, %v227
        %vm2313 = vcmp.eq.s32.totalorder %v2195, %v227
        %vm2314 = vcmp.eq.s32.totalorder %v2198, %v227
        %vm2315 = vcmp.eq.s32.totalorder %v2201, %v227
        %vm2316 = vcmp.eq.s32.totalorder %v2204, %v227
        %vm2317 = vcmp.eq.s32.totalorder %v2207, %v227
        %vm2318 = vcmp.eq.s32.totalorder %v2210, %v227
        %vm2319 = vcmp.eq.s32.totalorder %v2213, %v227
        %vm2320 = vcmp.eq.s32.totalorder %v2216, %v227
        %vm2321 = vcmp.eq.s32.totalorder %v2219, %v227
        %vm2322 = vcmp.eq.s32.totalorder %v2222, %v227
        %vm2323 = vcmp.eq.s32.totalorder %v2225, %v227
        %vm2324 = vcmp.eq.s32.totalorder %v2228, %v227
        %vm2325 = vcmp.eq.s32.totalorder %v2231, %v227
        %vm2326 = vcmp.eq.s32.totalorder %v2234, %v227
        %vm2327 = vcmp.eq.s32.totalorder %v2237, %v227
        %vm2328 = vcmp.eq.s32.totalorder %v2240, %v227
        %vm2329 = vcmp.eq.s32.totalorder %v2243, %v227
        %vm2330 = vcmp.eq.s32.totalorder %v2246, %v227
        %vm2331 = vcmp.eq.s32.totalorder %v2249, %v227
        %vm2332 = vcmp.eq.s32.totalorder %v2252, %v227
        %vm2333 = vcmp.eq.s32.totalorder %v2255, %v227
        %vm2334 = vcmp.eq.s32.totalorder %v2258, %v227
        %vm2335 = vcmp.eq.s32.totalorder %v2261, %v227
        %vm2336 = vcmp.eq.s32.totalorder %v2264, %v227
        %vm2337 = vcmp.eq.s32.totalorder %v2267, %v227
        %vm2338 = vcmp.eq.s32.totalorder %v2270, %v227
        %vm2339 = vcmp.eq.s32.totalorder %v2273, %v227
        %v2340 = vsel %vm2274, 1, 0
        %v2341 = vsel %vm2275, 1, 0
        %v2342 = vsel %vm2276, 1, 0
        %v2343 = vsel %vm2277, 1, 0
        %v2344 = vsel %vm2278, 1, 0
        %v2345 = vsel %vm2279, 1, 0
        %v2346 = vsel %vm2280, 1, 0
        %v2347 = vsel %vm2281, 1, 0
        %v2348 = vsel %vm2282, 1, 0
        %v2349 = vsel %vm2283, 1, 0
        %v2350 = vsel %vm2284, 1, 0
        %v2351 = vsel %vm2285, 1, 0
        %v2352 = vsel %vm2286, 1, 0
        %v2353 = vsel %vm2287, 1, 0
        %v2354 = vsel %vm2288, 1, 0
        %v2355 = vsel %vm2289, 1, 0
        %v2356 = vsel %vm2290, 1, 0
        %v2357 = vsel %vm2291, 1, 0
        %v2358 = vsel %vm2292, 1, 0
        %v2359 = vsel %vm2293, 1, 0
        %v2360 = vsel %vm2294, 1, 0
        %v2361 = vsel %vm2295, 1, 0
        %v2362 = vsel %vm2296, 1, 0
        %v2363 = vsel %vm2297, 1, 0
        %v2364 = vsel %vm2298, 1, 0
        %v2365 = vsel %vm2299, 1, 0
        %v2366 = vsel %vm2300, 1, 0
        %v2367 = vsel %vm2301, 1, 0
        %v2368 = vsel %vm2302, 1, 0
        %v2369 = vsel %vm2303, 1, 0
        %v2370 = vsel %vm2304, 1, 0
        %v2371 = vsel %vm2305, 1, 0
        %v2372 = vsel %vm2306, 1, 0
        %v2373 = vsel %vm2307, 1, 0
        %v2374 = vsel %vm2308, 1, 0
        %v2375 = vsel %vm2309, 1, 0
        %v2376 = vsel %vm2310, 1, 0
        %v2377 = vsel %vm2311, 1, 0
        %v2378 = vsel %vm2312, 1, 0
        %v2379 = vsel %vm2313, 1, 0
        %v2380 = vsel %vm2314, 1, 0
        %v2381 = vsel %vm2315, 1, 0
        %v2382 = vsel %vm2316, 1, 0
        %v2383 = vsel %vm2317, 1, 0
        %v2384 = vsel %vm2318, 1, 0
        %v2385 = vsel %vm2319, 1, 0
        %v2386 = vsel %vm2320, 1, 0
        %v2387 = vsel %vm2321, 1, 0
        %v2388 = vsel %vm2322, 1, 0
        %v2389 = vsel %vm2323, 1, 0
        %v2390 = vsel %vm2324, 1, 0
        %v2391 = vsel %vm2325, 1, 0
        %v2392 = vsel %vm2326, 1, 0
        %v2393 = vsel %vm2327, 1, 0
        %v2394 = vsel %vm2328, 1, 0
        %v2395 = vsel %vm2329, 1, 0
        %v2396 = vsel %vm2330, 1, 0
        %v2397 = vsel %vm2331, 1, 0
        %v2398 = vsel %vm2332, 1, 0
        %v2399 = vsel %vm2333, 1, 0
        %v2400 = vsel %vm2334, 1, 0
        %v2401 = vsel %vm2335, 1, 0
        %v2402 = vsel %vm2336, 1, 0
        %v2403 = vsel %vm2337, 1, 0
        %v2404 = vsel %vm2338, 1, 0
        %v2405 = vsel %vm2339, 1, 0
        %v2406 = vcvt.s32.f32 %v2340
        %v2407 = vcvt.s32.f32 %v2341
        %v2408 = vcvt.s32.f32 %v2342
        %v2409 = vcvt.s32.f32 %v2343
        %v2410 = vcvt.s32.f32 %v2344
        %v2411 = vcvt.s32.f32 %v2345
        %v2412 = vcvt.s32.f32 %v2346
        %v2413 = vcvt.s32.f32 %v2347
        %v2414 = vcvt.s32.f32 %v2348
        %v2415 = vcvt.s32.f32 %v2349
        %v2416 = vcvt.s32.f32 %v2350
        %v2417 = vcvt.s32.f32 %v2351
        %v2418 = vcvt.s32.f32 %v2352
        %v2419 = vcvt.s32.f32 %v2353
        %v2420 = vcvt.s32.f32 %v2354
        %v2421 = vcvt.s32.f32 %v2355
        %v2422 = vcvt.s32.f32 %v2356
        %v2423 = vcvt.s32.f32 %v2357
        %v2424 = vcvt.s32.f32 %v2358
        %v2425 = vcvt.s32.f32 %v2359
        %v2426 = vcvt.s32.f32 %v2360
        %v2427 = vcvt.s32.f32 %v2361
        %v2428 = vcvt.s32.f32 %v2362
        %v2429 = vcvt.s32.f32 %v2363
        %v2430 = vcvt.s32.f32 %v2364
        %v2431 = vcvt.s32.f32 %v2365
        %v2432 = vcvt.s32.f32 %v2366
        %v2433 = vcvt.s32.f32 %v2367
        %v2434 = vcvt.s32.f32 %v2368
        %v2435 = vcvt.s32.f32 %v2369
        %v2436 = vcvt.s32.f32 %v2370
        %v2437 = vcvt.s32.f32 %v2371
        %v2438 = vcvt.s32.f32 %v2372
        %v2439 = vcvt.s32.f32 %v2373
        %v2440 = vcvt.s32.f32 %v2374
        %v2441 = vcvt.s32.f32 %v2375
        %v2442 = vcvt.s32.f32 %v2376
        %v2443 = vcvt.s32.f32 %v2377
        %v2444 = vcvt.s32.f32 %v2378
        %v2445 = vcvt.s32.f32 %v2379
        %v2446 = vcvt.s32.f32 %v2380
        %v2447 = vcvt.s32.f32 %v2381
        %v2448 = vcvt.s32.f32 %v2382
        %v2449 = vcvt.s32.f32 %v2383
        %v2450 = vcvt.s32.f32 %v2384
        %v2451 = vcvt.s32.f32 %v2385
        %v2452 = vcvt.s32.f32 %v2386
        %v2453 = vcvt.s32.f32 %v2387
        %v2454 = vcvt.s32.f32 %v2388
        %v2455 = vcvt.s32.f32 %v2389
        %v2456 = vcvt.s32.f32 %v2390
        %v2457 = vcvt.s32.f32 %v2391
        %v2458 = vcvt.s32.f32 %v2392
        %v2459 = vcvt.s32.f32 %v2393
        %v2460 = vcvt.s32.f32 %v2394
        %v2461 = vcvt.s32.f32 %v2395
        %v2462 = vcvt.s32.f32 %v2396
        %v2463 = vcvt.s32.f32 %v2397
        %v2464 = vcvt.s32.f32 %v2398
        %v2465 = vcvt.s32.f32 %v2399
        %v2466 = vcvt.s32.f32 %v2400
        %v2467 = vcvt.s32.f32 %v2401
        %v2468 = vcvt.s32.f32 %v2402
        %v2469 = vcvt.s32.f32 %v2403
        %v2470 = vcvt.s32.f32 %v2404
        %v2471 = vcvt.s32.f32 %v2405
        %v2472 = vadd.f32 %v2010, %v2406
        %v2473 = vadd.f32 %v2011, %v2407
        %v2474 = vadd.f32 %v2012, %v2408
        %v2475 = vadd.f32 %v2013, %v2409
        %v2476 = vadd.f32 %v2014, %v2410
        %v2477 = vadd.f32 %v2015, %v2411
        %v2478 = vadd.f32 %v2016, %v2412
        %v2479 = vadd.f32 %v2017, %v2413
        %v2480 = vadd.f32 %v2018, %v2414
        %v2481 = vadd.f32 %v2019, %v2415
        %v2482 = vadd.f32 %v2020, %v2416
        %v2483 = vadd.f32 %v2021, %v2417
        %v2484 = vadd.f32 %v2022, %v2418
        %v2485 = vadd.f32 %v2023, %v2419
        %v2486 = vadd.f32 %v2024, %v2420
        %v2487 = vadd.f32 %v2025, %v2421
        %v2488 = vadd.f32 %v2026, %v2422
        %v2489 = vadd.f32 %v2027, %v2423
        %v2490 = vadd.f32 %v2028, %v2424
        %v2491 = vadd.f32 %v2029, %v2425
        %v2492 = vadd.f32 %v2030, %v2426
        %v2493 = vadd.f32 %v2031, %v2427
        %v2494 = vadd.f32 %v2032, %v2428
        %v2495 = vadd.f32 %v2033, %v2429
        %v2496 = vadd.f32 %v2034, %v2430
        %v2497 = vadd.f32 %v2035, %v2431
        %v2498 = vadd.f32 %v2036, %v2432
        %v2499 = vadd.f32 %v2037, %v2433
        %v2500 = vadd.f32 %v2038, %v2434
        %v2501 = vadd.f32 %v2039, %v2435
        %v2502 = vadd.f32 %v2040, %v2436
        %v2503 = vadd.f32 %v2041, %v2437
        %v2504 = vadd.f32 %v2042, %v2438
        %v2505 = vadd.f32 %v2043, %v2439
        %v2506 = vadd.f32 %v2044, %v2440
        %v2507 = vadd.f32 %v2045, %v2441
        %v2508 = vadd.f32 %v2046, %v2442
        %v2509 = vadd.f32 %v2047, %v2443
        %v2510 = vadd.f32 %v2048, %v2444
        %v2511 = vadd.f32 %v2049, %v2445
        %v2512 = vadd.f32 %v2050, %v2446
        %v2513 = vadd.f32 %v2051, %v2447
        %v2514 = vadd.f32 %v2052, %v2448
        %v2515 = vadd.f32 %v2053, %v2449
        %v2516 = vadd.f32 %v2054, %v2450
        %v2517 = vadd.f32 %v2055, %v2451
        %v2518 = vadd.f32 %v2056, %v2452
        %v2519 = vadd.f32 %v2057, %v2453
        %v2520 = vadd.f32 %v2058, %v2454
        %v2521 = vadd.f32 %v2059, %v2455
        %v2522 = vadd.f32 %v2060, %v2456
        %v2523 = vadd.f32 %v2061, %v2457
        %v2524 = vadd.f32 %v2062, %v2458
        %v2525 = vadd.f32 %v2063, %v2459
        %v2526 = vadd.f32 %v2064, %v2460
        %v2527 = vadd.f32 %v2065, %v2461
        %v2528 = vadd.f32 %v2066, %v2462
        %v2529 = vadd.f32 %v2067, %v2463
        %v2530 = vadd.f32 %v2068, %v2464
        %v2531 = vadd.f32 %v2069, %v2465
        %v2532 = vadd.f32 %v2070, %v2466
        %v2533 = vadd.f32 %v2071, %v2467
        %v2534 = vadd.f32 %v2072, %v2468
        %v2535 = vadd.f32 %v2073, %v2469
        %v2536 = vadd.f32 %v2074, %v2470
        %v2537 = vadd.f32 %v2075, %v2471
        %2538 = vset.pattern.permute.xlu0 5
        %2539 = vperm.xlu0 %2538, %v160
        %v2540 = vpop.permute.xlu0 %2539
        %2541 = vset.pattern.permute.xlu0 5
        %2542 = vperm.xlu0 %2541, %v161
        %v2543 = vpop.permute.xlu0 %2542
        %2544 = vset.pattern.permute.xlu0 5
        %2545 = vperm.xlu0 %2544, %v162
        %v2546 = vpop.permute.xlu0 %2545
        %2547 = vset.pattern.permute.xlu0 5
        %2548 = vperm.xlu0 %2547, %v163
        %v2549 = vpop.permute.xlu0 %2548
        %2550 = vset.pattern.permute.xlu0 5
        %2551 = vperm.xlu0 %2550, %v164
        %v2552 = vpop.permute.xlu0 %2551
        %2553 = vset.pattern.permute.xlu0 5
        %2554 = vperm.xlu0 %2553, %v165
        %v2555 = vpop.permute.xlu0 %2554
        %2556 = vset.pattern.permute.xlu0 5
        %2557 = vperm.xlu0 %2556, %v166
        %v2558 = vpop.permute.xlu0 %2557
        %2559 = vset.pattern.permute.xlu0 5
        %2560 = vperm.xlu0 %2559, %v167
        %v2561 = vpop.permute.xlu0 %2560
        %2562 = vset.pattern.permute.xlu0 5
        %2563 = vperm.xlu0 %2562, %v168
        %v2564 = vpop.permute.xlu0 %2563
        %2565 = vset.pattern.permute.xlu0 5
        %2566 = vperm.xlu0 %2565, %v169
        %v2567 = vpop.permute.xlu0 %2566
        %2568 = vset.pattern.permute.xlu0 5
        %2569 = vperm.xlu0 %2568, %v170
        %v2570 = vpop.permute.xlu0 %2569
        %2571 = vset.pattern.permute.xlu0 5
        %2572 = vperm.xlu0 %2571, %v171
        %v2573 = vpop.permute.xlu0 %2572
        %2574 = vset.pattern.permute.xlu0 5
        %2575 = vperm.xlu0 %2574, %v172
        %v2576 = vpop.permute.xlu0 %2575
        %2577 = vset.pattern.permute.xlu0 5
        %2578 = vperm.xlu0 %2577, %v173
        %v2579 = vpop.permute.xlu0 %2578
        %2580 = vset.pattern.permute.xlu0 5
        %2581 = vperm.xlu0 %2580, %v174
        %v2582 = vpop.permute.xlu0 %2581
        %2583 = vset.pattern.permute.xlu0 5
        %2584 = vperm.xlu0 %2583, %v175
        %v2585 = vpop.permute.xlu0 %2584
        %2586 = vset.pattern.permute.xlu0 5
        %2587 = vperm.xlu0 %2586, %v176
        %v2588 = vpop.permute.xlu0 %2587
        %2589 = vset.pattern.permute.xlu0 5
        %2590 = vperm.xlu0 %2589, %v177
        %v2591 = vpop.permute.xlu0 %2590
        %2592 = vset.pattern.permute.xlu0 5
        %2593 = vperm.xlu0 %2592, %v178
        %v2594 = vpop.permute.xlu0 %2593
        %2595 = vset.pattern.permute.xlu0 5
        %2596 = vperm.xlu0 %2595, %v179
        %v2597 = vpop.permute.xlu0 %2596
        %2598 = vset.pattern.permute.xlu0 5
        %2599 = vperm.xlu0 %2598, %v180
        %v2600 = vpop.permute.xlu0 %2599
        %2601 = vset.pattern.permute.xlu0 5
        %2602 = vperm.xlu0 %2601, %v181
        %v2603 = vpop.permute.xlu0 %2602
        %2604 = vset.pattern.permute.xlu0 5
        %2605 = vperm.xlu0 %2604, %v182
        %v2606 = vpop.permute.xlu0 %2605
        %2607 = vset.pattern.permute.xlu0 5
        %2608 = vperm.xlu0 %2607, %v183
        %v2609 = vpop.permute.xlu0 %2608
        %2610 = vset.pattern.permute.xlu0 5
        %2611 = vperm.xlu0 %2610, %v184
        %v2612 = vpop.permute.xlu0 %2611
        %2613 = vset.pattern.permute.xlu0 5
        %2614 = vperm.xlu0 %2613, %v185
        %v2615 = vpop.permute.xlu0 %2614
        %2616 = vset.pattern.permute.xlu0 5
        %2617 = vperm.xlu0 %2616, %v186
        %v2618 = vpop.permute.xlu0 %2617
        %2619 = vset.pattern.permute.xlu0 5
        %2620 = vperm.xlu0 %2619, %v187
        %v2621 = vpop.permute.xlu0 %2620
        %2622 = vset.pattern.permute.xlu0 5
        %2623 = vperm.xlu0 %2622, %v188
        %v2624 = vpop.permute.xlu0 %2623
        %2625 = vset.pattern.permute.xlu0 5
        %2626 = vperm.xlu0 %2625, %v189
        %v2627 = vpop.permute.xlu0 %2626
        %2628 = vset.pattern.permute.xlu0 5
        %2629 = vperm.xlu0 %2628, %v190
        %v2630 = vpop.permute.xlu0 %2629
        %2631 = vset.pattern.permute.xlu0 5
        %2632 = vperm.xlu0 %2631, %v191
        %v2633 = vpop.permute.xlu0 %2632
        %2634 = vset.pattern.permute.xlu0 5
        %2635 = vperm.xlu0 %2634, %v192
        %v2636 = vpop.permute.xlu0 %2635
        %2637 = vset.pattern.permute.xlu0 5
        %2638 = vperm.xlu0 %2637, %v193
        %v2639 = vpop.permute.xlu0 %2638
        %2640 = vset.pattern.permute.xlu0 5
        %2641 = vperm.xlu0 %2640, %v194
        %v2642 = vpop.permute.xlu0 %2641
        %2643 = vset.pattern.permute.xlu0 5
        %2644 = vperm.xlu0 %2643, %v195
        %v2645 = vpop.permute.xlu0 %2644
        %2646 = vset.pattern.permute.xlu0 5
        %2647 = vperm.xlu0 %2646, %v196
        %v2648 = vpop.permute.xlu0 %2647
        %2649 = vset.pattern.permute.xlu0 5
        %2650 = vperm.xlu0 %2649, %v197
        %v2651 = vpop.permute.xlu0 %2650
        %2652 = vset.pattern.permute.xlu0 5
        %2653 = vperm.xlu0 %2652, %v198
        %v2654 = vpop.permute.xlu0 %2653
        %2655 = vset.pattern.permute.xlu0 5
        %2656 = vperm.xlu0 %2655, %v199
        %v2657 = vpop.permute.xlu0 %2656
        %2658 = vset.pattern.permute.xlu0 5
        %2659 = vperm.xlu0 %2658, %v200
        %v2660 = vpop.permute.xlu0 %2659
        %2661 = vset.pattern.permute.xlu0 5
        %2662 = vperm.xlu0 %2661, %v201
        %v2663 = vpop.permute.xlu0 %2662
        %2664 = vset.pattern.permute.xlu0 5
        %2665 = vperm.xlu0 %2664, %v202
        %v2666 = vpop.permute.xlu0 %2665
        %2667 = vset.pattern.permute.xlu0 5
        %2668 = vperm.xlu0 %2667, %v203
        %v2669 = vpop.permute.xlu0 %2668
        %2670 = vset.pattern.permute.xlu0 5
        %2671 = vperm.xlu0 %2670, %v204
        %v2672 = vpop.permute.xlu0 %2671
        %2673 = vset.pattern.permute.xlu0 5
        %2674 = vperm.xlu0 %2673, %v205
        %v2675 = vpop.permute.xlu0 %2674
        %2676 = vset.pattern.permute.xlu0 5
        %2677 = vperm.xlu0 %2676, %v206
        %v2678 = vpop.permute.xlu0 %2677
        %2679 = vset.pattern.permute.xlu0 5
        %2680 = vperm.xlu0 %2679, %v207
        %v2681 = vpop.permute.xlu0 %2680
        %2682 = vset.pattern.permute.xlu0 5
        %2683 = vperm.xlu0 %2682, %v208
        %v2684 = vpop.permute.xlu0 %2683
        %2685 = vset.pattern.permute.xlu0 5
        %2686 = vperm.xlu0 %2685, %v209
        %v2687 = vpop.permute.xlu0 %2686
        %2688 = vset.pattern.permute.xlu0 5
        %2689 = vperm.xlu0 %2688, %v210
        %v2690 = vpop.permute.xlu0 %2689
        %2691 = vset.pattern.permute.xlu0 5
        %2692 = vperm.xlu0 %2691, %v211
        %v2693 = vpop.permute.xlu0 %2692
        %2694 = vset.pattern.permute.xlu0 5
        %2695 = vperm.xlu0 %2694, %v212
        %v2696 = vpop.permute.xlu0 %2695
        %2697 = vset.pattern.permute.xlu0 5
        %2698 = vperm.xlu0 %2697, %v213
        %v2699 = vpop.permute.xlu0 %2698
        %2700 = vset.pattern.permute.xlu0 5
        %2701 = vperm.xlu0 %2700, %v214
        %v2702 = vpop.permute.xlu0 %2701
        %2703 = vset.pattern.permute.xlu0 5
        %2704 = vperm.xlu0 %2703, %v215
        %v2705 = vpop.permute.xlu0 %2704
        %2706 = vset.pattern.permute.xlu0 5
        %2707 = vperm.xlu0 %2706, %v216
        %v2708 = vpop.permute.xlu0 %2707
        %2709 = vset.pattern.permute.xlu0 5
        %2710 = vperm.xlu0 %2709, %v217
        %v2711 = vpop.permute.xlu0 %2710
        %2712 = vset.pattern.permute.xlu0 5
        %2713 = vperm.xlu0 %2712, %v218
        %v2714 = vpop.permute.xlu0 %2713
        %2715 = vset.pattern.permute.xlu0 5
        %2716 = vperm.xlu0 %2715, %v219
        %v2717 = vpop.permute.xlu0 %2716
        %2718 = vset.pattern.permute.xlu0 5
        %2719 = vperm.xlu0 %2718, %v220
        %v2720 = vpop.permute.xlu0 %2719
        %2721 = vset.pattern.permute.xlu0 5
        %2722 = vperm.xlu0 %2721, %v221
        %v2723 = vpop.permute.xlu0 %2722
        %2724 = vset.pattern.permute.xlu0 5
        %2725 = vperm.xlu0 %2724, %v222
        %v2726 = vpop.permute.xlu0 %2725
        %2727 = vset.pattern.permute.xlu0 5
        %2728 = vperm.xlu0 %2727, %v223
        %v2729 = vpop.permute.xlu0 %2728
        %2730 = vset.pattern.permute.xlu0 5
        %2731 = vperm.xlu0 %2730, %v224
        %v2732 = vpop.permute.xlu0 %2731
        %2733 = vset.pattern.permute.xlu0 5
        %2734 = vperm.xlu0 %2733, %v225
        %v2735 = vpop.permute.xlu0 %2734
        %vm2736 = vcmp.eq.s32.totalorder %v2540, %v227
        %vm2737 = vcmp.eq.s32.totalorder %v2543, %v227
        %vm2738 = vcmp.eq.s32.totalorder %v2546, %v227
        %vm2739 = vcmp.eq.s32.totalorder %v2549, %v227
        %vm2740 = vcmp.eq.s32.totalorder %v2552, %v227
        %vm2741 = vcmp.eq.s32.totalorder %v2555, %v227
        %vm2742 = vcmp.eq.s32.totalorder %v2558, %v227
        %vm2743 = vcmp.eq.s32.totalorder %v2561, %v227
        %vm2744 = vcmp.eq.s32.totalorder %v2564, %v227
        %vm2745 = vcmp.eq.s32.totalorder %v2567, %v227
        %vm2746 = vcmp.eq.s32.totalorder %v2570, %v227
        %vm2747 = vcmp.eq.s32.totalorder %v2573, %v227
        %vm2748 = vcmp.eq.s32.totalorder %v2576, %v227
        %vm2749 = vcmp.eq.s32.totalorder %v2579, %v227
        %vm2750 = vcmp.eq.s32.totalorder %v2582, %v227
        %vm2751 = vcmp.eq.s32.totalorder %v2585, %v227
        %vm2752 = vcmp.eq.s32.totalorder %v2588, %v227
        %vm2753 = vcmp.eq.s32.totalorder %v2591, %v227
        %vm2754 = vcmp.eq.s32.totalorder %v2594, %v227
        %vm2755 = vcmp.eq.s32.totalorder %v2597, %v227
        %vm2756 = vcmp.eq.s32.totalorder %v2600, %v227
        %vm2757 = vcmp.eq.s32.totalorder %v2603, %v227
        %vm2758 = vcmp.eq.s32.totalorder %v2606, %v227
        %vm2759 = vcmp.eq.s32.totalorder %v2609, %v227
        %vm2760 = vcmp.eq.s32.totalorder %v2612, %v227
        %vm2761 = vcmp.eq.s32.totalorder %v2615, %v227
        %vm2762 = vcmp.eq.s32.totalorder %v2618, %v227
        %vm2763 = vcmp.eq.s32.totalorder %v2621, %v227
        %vm2764 = vcmp.eq.s32.totalorder %v2624, %v227
        %vm2765 = vcmp.eq.s32.totalorder %v2627, %v227
        %vm2766 = vcmp.eq.s32.totalorder %v2630, %v227
        %vm2767 = vcmp.eq.s32.totalorder %v2633, %v227
        %vm2768 = vcmp.eq.s32.totalorder %v2636, %v227
        %vm2769 = vcmp.eq.s32.totalorder %v2639, %v227
        %vm2770 = vcmp.eq.s32.totalorder %v2642, %v227
        %vm2771 = vcmp.eq.s32.totalorder %v2645, %v227
        %vm2772 = vcmp.eq.s32.totalorder %v2648, %v227
        %vm2773 = vcmp.eq.s32.totalorder %v2651, %v227
        %vm2774 = vcmp.eq.s32.totalorder %v2654, %v227
        %vm2775 = vcmp.eq.s32.totalorder %v2657, %v227
        %vm2776 = vcmp.eq.s32.totalorder %v2660, %v227
        %vm2777 = vcmp.eq.s32.totalorder %v2663, %v227
        %vm2778 = vcmp.eq.s32.totalorder %v2666, %v227
        %vm2779 = vcmp.eq.s32.totalorder %v2669, %v227
        %vm2780 = vcmp.eq.s32.totalorder %v2672, %v227
        %vm2781 = vcmp.eq.s32.totalorder %v2675, %v227
        %vm2782 = vcmp.eq.s32.totalorder %v2678, %v227
        %vm2783 = vcmp.eq.s32.totalorder %v2681, %v227
        %vm2784 = vcmp.eq.s32.totalorder %v2684, %v227
        %vm2785 = vcmp.eq.s32.totalorder %v2687, %v227
        %vm2786 = vcmp.eq.s32.totalorder %v2690, %v227
        %vm2787 = vcmp.eq.s32.totalorder %v2693, %v227
        %vm2788 = vcmp.eq.s32.totalorder %v2696, %v227
        %vm2789 = vcmp.eq.s32.totalorder %v2699, %v227
        %vm2790 = vcmp.eq.s32.totalorder %v2702, %v227
        %vm2791 = vcmp.eq.s32.totalorder %v2705, %v227
        %vm2792 = vcmp.eq.s32.totalorder %v2708, %v227
        %vm2793 = vcmp.eq.s32.totalorder %v2711, %v227
        %vm2794 = vcmp.eq.s32.totalorder %v2714, %v227
        %vm2795 = vcmp.eq.s32.totalorder %v2717, %v227
        %vm2796 = vcmp.eq.s32.totalorder %v2720, %v227
        %vm2797 = vcmp.eq.s32.totalorder %v2723, %v227
        %vm2798 = vcmp.eq.s32.totalorder %v2726, %v227
        %vm2799 = vcmp.eq.s32.totalorder %v2729, %v227
        %vm2800 = vcmp.eq.s32.totalorder %v2732, %v227
        %vm2801 = vcmp.eq.s32.totalorder %v2735, %v227
        %v2802 = vsel %vm2736, 1, 0
        %v2803 = vsel %vm2737, 1, 0
        %v2804 = vsel %vm2738, 1, 0
        %v2805 = vsel %vm2739, 1, 0
        %v2806 = vsel %vm2740, 1, 0
        %v2807 = vsel %vm2741, 1, 0
        %v2808 = vsel %vm2742, 1, 0
        %v2809 = vsel %vm2743, 1, 0
        %v2810 = vsel %vm2744, 1, 0
        %v2811 = vsel %vm2745, 1, 0
        %v2812 = vsel %vm2746, 1, 0
        %v2813 = vsel %vm2747, 1, 0
        %v2814 = vsel %vm2748, 1, 0
        %v2815 = vsel %vm2749, 1, 0
        %v2816 = vsel %vm2750, 1, 0
        %v2817 = vsel %vm2751, 1, 0
        %v2818 = vsel %vm2752, 1, 0
        %v2819 = vsel %vm2753, 1, 0
        %v2820 = vsel %vm2754, 1, 0
        %v2821 = vsel %vm2755, 1, 0
        %v2822 = vsel %vm2756, 1, 0
        %v2823 = vsel %vm2757, 1, 0
        %v2824 = vsel %vm2758, 1, 0
        %v2825 = vsel %vm2759, 1, 0
        %v2826 = vsel %vm2760, 1, 0
        %v2827 = vsel %vm2761, 1, 0
        %v2828 = vsel %vm2762, 1, 0
        %v2829 = vsel %vm2763, 1, 0
        %v2830 = vsel %vm2764, 1, 0
        %v2831 = vsel %vm2765, 1, 0
        %v2832 = vsel %vm2766, 1, 0
        %v2833 = vsel %vm2767, 1, 0
        %v2834 = vsel %vm2768, 1, 0
        %v2835 = vsel %vm2769, 1, 0
        %v2836 = vsel %vm2770, 1, 0
        %v2837 = vsel %vm2771, 1, 0
        %v2838 = vsel %vm2772, 1, 0
        %v2839 = vsel %vm2773, 1, 0
        %v2840 = vsel %vm2774, 1, 0
        %v2841 = vsel %vm2775, 1, 0
        %v2842 = vsel %vm2776, 1, 0
        %v2843 = vsel %vm2777, 1, 0
        %v2844 = vsel %vm2778, 1, 0
        %v2845 = vsel %vm2779, 1, 0
        %v2846 = vsel %vm2780, 1, 0
        %v2847 = vsel %vm2781, 1, 0
        %v2848 = vsel %vm2782, 1, 0
        %v2849 = vsel %vm2783, 1, 0
        %v2850 = vsel %vm2784, 1, 0
        %v2851 = vsel %vm2785, 1, 0
        %v2852 = vsel %vm2786, 1, 0
        %v2853 = vsel %vm2787, 1, 0
        %v2854 = vsel %vm2788, 1, 0
        %v2855 = vsel %vm2789, 1, 0
        %v2856 = vsel %vm2790, 1, 0
        %v2857 = vsel %vm2791, 1, 0
        %v2858 = vsel %vm2792, 1, 0
        %v2859 = vsel %vm2793, 1, 0
        %v2860 = vsel %vm2794, 1, 0
        %v2861 = vsel %vm2795, 1, 0
        %v2862 = vsel %vm2796, 1, 0
        %v2863 = vsel %vm2797, 1, 0
        %v2864 = vsel %vm2798, 1, 0
        %v2865 = vsel %vm2799, 1, 0
        %v2866 = vsel %vm2800, 1, 0
        %v2867 = vsel %vm2801, 1, 0
        %v2868 = vcvt.s32.f32 %v2802
        %v2869 = vcvt.s32.f32 %v2803
        %v2870 = vcvt.s32.f32 %v2804
        %v2871 = vcvt.s32.f32 %v2805
        %v2872 = vcvt.s32.f32 %v2806
        %v2873 = vcvt.s32.f32 %v2807
        %v2874 = vcvt.s32.f32 %v2808
        %v2875 = vcvt.s32.f32 %v2809
        %v2876 = vcvt.s32.f32 %v2810
        %v2877 = vcvt.s32.f32 %v2811
        %v2878 = vcvt.s32.f32 %v2812
        %v2879 = vcvt.s32.f32 %v2813
        %v2880 = vcvt.s32.f32 %v2814
        %v2881 = vcvt.s32.f32 %v2815
        %v2882 = vcvt.s32.f32 %v2816
        %v2883 = vcvt.s32.f32 %v2817
        %v2884 = vcvt.s32.f32 %v2818
        %v2885 = vcvt.s32.f32 %v2819
        %v2886 = vcvt.s32.f32 %v2820
        %v2887 = vcvt.s32.f32 %v2821
        %v2888 = vcvt.s32.f32 %v2822
        %v2889 = vcvt.s32.f32 %v2823
        %v2890 = vcvt.s32.f32 %v2824
        %v2891 = vcvt.s32.f32 %v2825
        %v2892 = vcvt.s32.f32 %v2826
        %v2893 = vcvt.s32.f32 %v2827
        %v2894 = vcvt.s32.f32 %v2828
        %v2895 = vcvt.s32.f32 %v2829
        %v2896 = vcvt.s32.f32 %v2830
        %v2897 = vcvt.s32.f32 %v2831
        %v2898 = vcvt.s32.f32 %v2832
        %v2899 = vcvt.s32.f32 %v2833
        %v2900 = vcvt.s32.f32 %v2834
        %v2901 = vcvt.s32.f32 %v2835
        %v2902 = vcvt.s32.f32 %v2836
        %v2903 = vcvt.s32.f32 %v2837
        %v2904 = vcvt.s32.f32 %v2838
        %v2905 = vcvt.s32.f32 %v2839
        %v2906 = vcvt.s32.f32 %v2840
        %v2907 = vcvt.s32.f32 %v2841
        %v2908 = vcvt.s32.f32 %v2842
        %v2909 = vcvt.s32.f32 %v2843
        %v2910 = vcvt.s32.f32 %v2844
        %v2911 = vcvt.s32.f32 %v2845
        %v2912 = vcvt.s32.f32 %v2846
        %v2913 = vcvt.s32.f32 %v2847
        %v2914 = vcvt.s32.f32 %v2848
        %v2915 = vcvt.s32.f32 %v2849
        %v2916 = vcvt.s32.f32 %v2850
        %v2917 = vcvt.s32.f32 %v2851
        %v2918 = vcvt.s32.f32 %v2852
        %v2919 = vcvt.s32.f32 %v2853
        %v2920 = vcvt.s32.f32 %v2854
        %v2921 = vcvt.s32.f32 %v2855
        %v2922 = vcvt.s32.f32 %v2856
        %v2923 = vcvt.s32.f32 %v2857
        %v2924 = vcvt.s32.f32 %v2858
        %v2925 = vcvt.s32.f32 %v2859
        %v2926 = vcvt.s32.f32 %v2860
        %v2927 = vcvt.s32.f32 %v2861
        %v2928 = vcvt.s32.f32 %v2862
        %v2929 = vcvt.s32.f32 %v2863
        %v2930 = vcvt.s32.f32 %v2864
        %v2931 = vcvt.s32.f32 %v2865
        %v2932 = vcvt.s32.f32 %v2866
        %v2933 = vcvt.s32.f32 %v2867
        %v2934 = vadd.f32 %v2472, %v2868
        %v2935 = vadd.f32 %v2473, %v2869
        %v2936 = vadd.f32 %v2474, %v2870
        %v2937 = vadd.f32 %v2475, %v2871
        %v2938 = vadd.f32 %v2476, %v2872
        %v2939 = vadd.f32 %v2477, %v2873
        %v2940 = vadd.f32 %v2478, %v2874
        %v2941 = vadd.f32 %v2479, %v2875
        %v2942 = vadd.f32 %v2480, %v2876
        %v2943 = vadd.f32 %v2481, %v2877
        %v2944 = vadd.f32 %v2482, %v2878
        %v2945 = vadd.f32 %v2483, %v2879
        %v2946 = vadd.f32 %v2484, %v2880
        %v2947 = vadd.f32 %v2485, %v2881
        %v2948 = vadd.f32 %v2486, %v2882
        %v2949 = vadd.f32 %v2487, %v2883
        %v2950 = vadd.f32 %v2488, %v2884
        %v2951 = vadd.f32 %v2489, %v2885
        %v2952 = vadd.f32 %v2490, %v2886
        %v2953 = vadd.f32 %v2491, %v2887
        %v2954 = vadd.f32 %v2492, %v2888
        %v2955 = vadd.f32 %v2493, %v2889
        %v2956 = vadd.f32 %v2494, %v2890
        %v2957 = vadd.f32 %v2495, %v2891
        %v2958 = vadd.f32 %v2496, %v2892
        %v2959 = vadd.f32 %v2497, %v2893
        %v2960 = vadd.f32 %v2498, %v2894
        %v2961 = vadd.f32 %v2499, %v2895
        %v2962 = vadd.f32 %v2500, %v2896
        %v2963 = vadd.f32 %v2501, %v2897
        %v2964 = vadd.f32 %v2502, %v2898
        %v2965 = vadd.f32 %v2503, %v2899
        %v2966 = vadd.f32 %v2504, %v2900
        %v2967 = vadd.f32 %v2505, %v2901
        %v2968 = vadd.f32 %v2506, %v2902
        %v2969 = vadd.f32 %v2507, %v2903
        %v2970 = vadd.f32 %v2508, %v2904
        %v2971 = vadd.f32 %v2509, %v2905
        %v2972 = vadd.f32 %v2510, %v2906
        %v2973 = vadd.f32 %v2511, %v2907
        %v2974 = vadd.f32 %v2512, %v2908
        %v2975 = vadd.f32 %v2513, %v2909
        %v2976 = vadd.f32 %v2514, %v2910
        %v2977 = vadd.f32 %v2515, %v2911
        %v2978 = vadd.f32 %v2516, %v2912
        %v2979 = vadd.f32 %v2517, %v2913
        %v2980 = vadd.f32 %v2518, %v2914
        %v2981 = vadd.f32 %v2519, %v2915
        %v2982 = vadd.f32 %v2520, %v2916
        %v2983 = vadd.f32 %v2521, %v2917
        %v2984 = vadd.f32 %v2522, %v2918
        %v2985 = vadd.f32 %v2523, %v2919
        %v2986 = vadd.f32 %v2524, %v2920
        %v2987 = vadd.f32 %v2525, %v2921
        %v2988 = vadd.f32 %v2526, %v2922
        %v2989 = vadd.f32 %v2527, %v2923
        %v2990 = vadd.f32 %v2528, %v2924
        %v2991 = vadd.f32 %v2529, %v2925
        %v2992 = vadd.f32 %v2530, %v2926
        %v2993 = vadd.f32 %v2531, %v2927
        %v2994 = vadd.f32 %v2532, %v2928
        %v2995 = vadd.f32 %v2533, %v2929
        %v2996 = vadd.f32 %v2534, %v2930
        %v2997 = vadd.f32 %v2535, %v2931
        %v2998 = vadd.f32 %v2536, %v2932
        %v2999 = vadd.f32 %v2537, %v2933
        %3000 = vset.pattern.permute.xlu0 6
        %3001 = vperm.xlu0 %3000, %v160
        %v3002 = vpop.permute.xlu0 %3001
        %3003 = vset.pattern.permute.xlu0 6
        %3004 = vperm.xlu0 %3003, %v161
        %v3005 = vpop.permute.xlu0 %3004
        %3006 = vset.pattern.permute.xlu0 6
        %3007 = vperm.xlu0 %3006, %v162
        %v3008 = vpop.permute.xlu0 %3007
        %3009 = vset.pattern.permute.xlu0 6
        %3010 = vperm.xlu0 %3009, %v163
        %v3011 = vpop.permute.xlu0 %3010
        %3012 = vset.pattern.permute.xlu0 6
        %3013 = vperm.xlu0 %3012, %v164
        %v3014 = vpop.permute.xlu0 %3013
        %3015 = vset.pattern.permute.xlu0 6
        %3016 = vperm.xlu0 %3015, %v165
        %v3017 = vpop.permute.xlu0 %3016
        %3018 = vset.pattern.permute.xlu0 6
        %3019 = vperm.xlu0 %3018, %v166
        %v3020 = vpop.permute.xlu0 %3019
        %3021 = vset.pattern.permute.xlu0 6
        %3022 = vperm.xlu0 %3021, %v167
        %v3023 = vpop.permute.xlu0 %3022
        %3024 = vset.pattern.permute.xlu0 6
        %3025 = vperm.xlu0 %3024, %v168
        %v3026 = vpop.permute.xlu0 %3025
        %3027 = vset.pattern.permute.xlu0 6
        %3028 = vperm.xlu0 %3027, %v169
        %v3029 = vpop.permute.xlu0 %3028
        %3030 = vset.pattern.permute.xlu0 6
        %3031 = vperm.xlu0 %3030, %v170
        %v3032 = vpop.permute.xlu0 %3031
        %3033 = vset.pattern.permute.xlu0 6
        %3034 = vperm.xlu0 %3033, %v171
        %v3035 = vpop.permute.xlu0 %3034
        %3036 = vset.pattern.permute.xlu0 6
        %3037 = vperm.xlu0 %3036, %v172
        %v3038 = vpop.permute.xlu0 %3037
        %3039 = vset.pattern.permute.xlu0 6
        %3040 = vperm.xlu0 %3039, %v173
        %v3041 = vpop.permute.xlu0 %3040
        %3042 = vset.pattern.permute.xlu0 6
        %3043 = vperm.xlu0 %3042, %v174
        %v3044 = vpop.permute.xlu0 %3043
        %3045 = vset.pattern.permute.xlu0 6
        %3046 = vperm.xlu0 %3045, %v175
        %v3047 = vpop.permute.xlu0 %3046
        %3048 = vset.pattern.permute.xlu0 6
        %3049 = vperm.xlu0 %3048, %v176
        %v3050 = vpop.permute.xlu0 %3049
        %3051 = vset.pattern.permute.xlu0 6
        %3052 = vperm.xlu0 %3051, %v177
        %v3053 = vpop.permute.xlu0 %3052
        %3054 = vset.pattern.permute.xlu0 6
        %3055 = vperm.xlu0 %3054, %v178
        %v3056 = vpop.permute.xlu0 %3055
        %3057 = vset.pattern.permute.xlu0 6
        %3058 = vperm.xlu0 %3057, %v179
        %v3059 = vpop.permute.xlu0 %3058
        %3060 = vset.pattern.permute.xlu0 6
        %3061 = vperm.xlu0 %3060, %v180
        %v3062 = vpop.permute.xlu0 %3061
        %3063 = vset.pattern.permute.xlu0 6
        %3064 = vperm.xlu0 %3063, %v181
        %v3065 = vpop.permute.xlu0 %3064
        %3066 = vset.pattern.permute.xlu0 6
        %3067 = vperm.xlu0 %3066, %v182
        %v3068 = vpop.permute.xlu0 %3067
        %3069 = vset.pattern.permute.xlu0 6
        %3070 = vperm.xlu0 %3069, %v183
        %v3071 = vpop.permute.xlu0 %3070
        %3072 = vset.pattern.permute.xlu0 6
        %3073 = vperm.xlu0 %3072, %v184
        %v3074 = vpop.permute.xlu0 %3073
        %3075 = vset.pattern.permute.xlu0 6
        %3076 = vperm.xlu0 %3075, %v185
        %v3077 = vpop.permute.xlu0 %3076
        %3078 = vset.pattern.permute.xlu0 6
        %3079 = vperm.xlu0 %3078, %v186
        %v3080 = vpop.permute.xlu0 %3079
        %3081 = vset.pattern.permute.xlu0 6
        %3082 = vperm.xlu0 %3081, %v187
        %v3083 = vpop.permute.xlu0 %3082
        %3084 = vset.pattern.permute.xlu0 6
        %3085 = vperm.xlu0 %3084, %v188
        %v3086 = vpop.permute.xlu0 %3085
        %3087 = vset.pattern.permute.xlu0 6
        %3088 = vperm.xlu0 %3087, %v189
        %v3089 = vpop.permute.xlu0 %3088
        %3090 = vset.pattern.permute.xlu0 6
        %3091 = vperm.xlu0 %3090, %v190
        %v3092 = vpop.permute.xlu0 %3091
        %3093 = vset.pattern.permute.xlu0 6
        %3094 = vperm.xlu0 %3093, %v191
        %v3095 = vpop.permute.xlu0 %3094
        %3096 = vset.pattern.permute.xlu0 6
        %3097 = vperm.xlu0 %3096, %v192
        %v3098 = vpop.permute.xlu0 %3097
        %3099 = vset.pattern.permute.xlu0 6
        %3100 = vperm.xlu0 %3099, %v193
        %v3101 = vpop.permute.xlu0 %3100
        %3102 = vset.pattern.permute.xlu0 6
        %3103 = vperm.xlu0 %3102, %v194
        %v3104 = vpop.permute.xlu0 %3103
        %3105 = vset.pattern.permute.xlu0 6
        %3106 = vperm.xlu0 %3105, %v195
        %v3107 = vpop.permute.xlu0 %3106
        %3108 = vset.pattern.permute.xlu0 6
        %3109 = vperm.xlu0 %3108, %v196
        %v3110 = vpop.permute.xlu0 %3109
        %3111 = vset.pattern.permute.xlu0 6
        %3112 = vperm.xlu0 %3111, %v197
        %v3113 = vpop.permute.xlu0 %3112
        %3114 = vset.pattern.permute.xlu0 6
        %3115 = vperm.xlu0 %3114, %v198
        %v3116 = vpop.permute.xlu0 %3115
        %3117 = vset.pattern.permute.xlu0 6
        %3118 = vperm.xlu0 %3117, %v199
        %v3119 = vpop.permute.xlu0 %3118
        %3120 = vset.pattern.permute.xlu0 6
        %3121 = vperm.xlu0 %3120, %v200
        %v3122 = vpop.permute.xlu0 %3121
        %3123 = vset.pattern.permute.xlu0 6
        %3124 = vperm.xlu0 %3123, %v201
        %v3125 = vpop.permute.xlu0 %3124
        %3126 = vset.pattern.permute.xlu0 6
        %3127 = vperm.xlu0 %3126, %v202
        %v3128 = vpop.permute.xlu0 %3127
        %3129 = vset.pattern.permute.xlu0 6
        %3130 = vperm.xlu0 %3129, %v203
        %v3131 = vpop.permute.xlu0 %3130
        %3132 = vset.pattern.permute.xlu0 6
        %3133 = vperm.xlu0 %3132, %v204
        %v3134 = vpop.permute.xlu0 %3133
        %3135 = vset.pattern.permute.xlu0 6
        %3136 = vperm.xlu0 %3135, %v205
        %v3137 = vpop.permute.xlu0 %3136
        %3138 = vset.pattern.permute.xlu0 6
        %3139 = vperm.xlu0 %3138, %v206
        %v3140 = vpop.permute.xlu0 %3139
        %3141 = vset.pattern.permute.xlu0 6
        %3142 = vperm.xlu0 %3141, %v207
        %v3143 = vpop.permute.xlu0 %3142
        %3144 = vset.pattern.permute.xlu0 6
        %3145 = vperm.xlu0 %3144, %v208
        %v3146 = vpop.permute.xlu0 %3145
        %3147 = vset.pattern.permute.xlu0 6
        %3148 = vperm.xlu0 %3147, %v209
        %v3149 = vpop.permute.xlu0 %3148
        %3150 = vset.pattern.permute.xlu0 6
        %3151 = vperm.xlu0 %3150, %v210
        %v3152 = vpop.permute.xlu0 %3151
        %3153 = vset.pattern.permute.xlu0 6
        %3154 = vperm.xlu0 %3153, %v211
        %v3155 = vpop.permute.xlu0 %3154
        %3156 = vset.pattern.permute.xlu0 6
        %3157 = vperm.xlu0 %3156, %v212
        %v3158 = vpop.permute.xlu0 %3157
        %3159 = vset.pattern.permute.xlu0 6
        %3160 = vperm.xlu0 %3159, %v213
        %v3161 = vpop.permute.xlu0 %3160
        %3162 = vset.pattern.permute.xlu0 6
        %3163 = vperm.xlu0 %3162, %v214
        %v3164 = vpop.permute.xlu0 %3163
        %3165 = vset.pattern.permute.xlu0 6
        %3166 = vperm.xlu0 %3165, %v215
        %v3167 = vpop.permute.xlu0 %3166
        %3168 = vset.pattern.permute.xlu0 6
        %3169 = vperm.xlu0 %3168, %v216
        %v3170 = vpop.permute.xlu0 %3169
        %3171 = vset.pattern.permute.xlu0 6
        %3172 = vperm.xlu0 %3171, %v217
        %v3173 = vpop.permute.xlu0 %3172
        %3174 = vset.pattern.permute.xlu0 6
        %3175 = vperm.xlu0 %3174, %v218
        %v3176 = vpop.permute.xlu0 %3175
        %3177 = vset.pattern.permute.xlu0 6
        %3178 = vperm.xlu0 %3177, %v219
        %v3179 = vpop.permute.xlu0 %3178
        %3180 = vset.pattern.permute.xlu0 6
        %3181 = vperm.xlu0 %3180, %v220
        %v3182 = vpop.permute.xlu0 %3181
        %3183 = vset.pattern.permute.xlu0 6
        %3184 = vperm.xlu0 %3183, %v221
        %v3185 = vpop.permute.xlu0 %3184
        %3186 = vset.pattern.permute.xlu0 6
        %3187 = vperm.xlu0 %3186, %v222
        %v3188 = vpop.permute.xlu0 %3187
        %3189 = vset.pattern.permute.xlu0 6
        %3190 = vperm.xlu0 %3189, %v223
        %v3191 = vpop.permute.xlu0 %3190
        %3192 = vset.pattern.permute.xlu0 6
        %3193 = vperm.xlu0 %3192, %v224
        %v3194 = vpop.permute.xlu0 %3193
        %3195 = vset.pattern.permute.xlu0 6
        %3196 = vperm.xlu0 %3195, %v225
        %v3197 = vpop.permute.xlu0 %3196
        %vm3198 = vcmp.eq.s32.totalorder %v3002, %v227
        %vm3199 = vcmp.eq.s32.totalorder %v3005, %v227
        %vm3200 = vcmp.eq.s32.totalorder %v3008, %v227
        %vm3201 = vcmp.eq.s32.totalorder %v3011, %v227
        %vm3202 = vcmp.eq.s32.totalorder %v3014, %v227
        %vm3203 = vcmp.eq.s32.totalorder %v3017, %v227
        %vm3204 = vcmp.eq.s32.totalorder %v3020, %v227
        %vm3205 = vcmp.eq.s32.totalorder %v3023, %v227
        %vm3206 = vcmp.eq.s32.totalorder %v3026, %v227
        %vm3207 = vcmp.eq.s32.totalorder %v3029, %v227
        %vm3208 = vcmp.eq.s32.totalorder %v3032, %v227
        %vm3209 = vcmp.eq.s32.totalorder %v3035, %v227
        %vm3210 = vcmp.eq.s32.totalorder %v3038, %v227
        %vm3211 = vcmp.eq.s32.totalorder %v3041, %v227
        %vm3212 = vcmp.eq.s32.totalorder %v3044, %v227
        %vm3213 = vcmp.eq.s32.totalorder %v3047, %v227
        %vm3214 = vcmp.eq.s32.totalorder %v3050, %v227
        %vm3215 = vcmp.eq.s32.totalorder %v3053, %v227
        %vm3216 = vcmp.eq.s32.totalorder %v3056, %v227
        %vm3217 = vcmp.eq.s32.totalorder %v3059, %v227
        %vm3218 = vcmp.eq.s32.totalorder %v3062, %v227
        %vm3219 = vcmp.eq.s32.totalorder %v3065, %v227
        %vm3220 = vcmp.eq.s32.totalorder %v3068, %v227
        %vm3221 = vcmp.eq.s32.totalorder %v3071, %v227
        %vm3222 = vcmp.eq.s32.totalorder %v3074, %v227
        %vm3223 = vcmp.eq.s32.totalorder %v3077, %v227
        %vm3224 = vcmp.eq.s32.totalorder %v3080, %v227
        %vm3225 = vcmp.eq.s32.totalorder %v3083, %v227
        %vm3226 = vcmp.eq.s32.totalorder %v3086, %v227
        %vm3227 = vcmp.eq.s32.totalorder %v3089, %v227
        %vm3228 = vcmp.eq.s32.totalorder %v3092, %v227
        %vm3229 = vcmp.eq.s32.totalorder %v3095, %v227
        %vm3230 = vcmp.eq.s32.totalorder %v3098, %v227
        %vm3231 = vcmp.eq.s32.totalorder %v3101, %v227
        %vm3232 = vcmp.eq.s32.totalorder %v3104, %v227
        %vm3233 = vcmp.eq.s32.totalorder %v3107, %v227
        %vm3234 = vcmp.eq.s32.totalorder %v3110, %v227
        %vm3235 = vcmp.eq.s32.totalorder %v3113, %v227
        %vm3236 = vcmp.eq.s32.totalorder %v3116, %v227
        %vm3237 = vcmp.eq.s32.totalorder %v3119, %v227
        %vm3238 = vcmp.eq.s32.totalorder %v3122, %v227
        %vm3239 = vcmp.eq.s32.totalorder %v3125, %v227
        %vm3240 = vcmp.eq.s32.totalorder %v3128, %v227
        %vm3241 = vcmp.eq.s32.totalorder %v3131, %v227
        %vm3242 = vcmp.eq.s32.totalorder %v3134, %v227
        %vm3243 = vcmp.eq.s32.totalorder %v3137, %v227
        %vm3244 = vcmp.eq.s32.totalorder %v3140, %v227
        %vm3245 = vcmp.eq.s32.totalorder %v3143, %v227
        %vm3246 = vcmp.eq.s32.totalorder %v3146, %v227
        %vm3247 = vcmp.eq.s32.totalorder %v3149, %v227
        %vm3248 = vcmp.eq.s32.totalorder %v3152, %v227
        %vm3249 = vcmp.eq.s32.totalorder %v3155, %v227
        %vm3250 = vcmp.eq.s32.totalorder %v3158, %v227
        %vm3251 = vcmp.eq.s32.totalorder %v3161, %v227
        %vm3252 = vcmp.eq.s32.totalorder %v3164, %v227
        %vm3253 = vcmp.eq.s32.totalorder %v3167, %v227
        %vm3254 = vcmp.eq.s32.totalorder %v3170, %v227
        %vm3255 = vcmp.eq.s32.totalorder %v3173, %v227
        %vm3256 = vcmp.eq.s32.totalorder %v3176, %v227
        %vm3257 = vcmp.eq.s32.totalorder %v3179, %v227
        %vm3258 = vcmp.eq.s32.totalorder %v3182, %v227
        %vm3259 = vcmp.eq.s32.totalorder %v3185, %v227
        %vm3260 = vcmp.eq.s32.totalorder %v3188, %v227
        %vm3261 = vcmp.eq.s32.totalorder %v3191, %v227
        %vm3262 = vcmp.eq.s32.totalorder %v3194, %v227
        %vm3263 = vcmp.eq.s32.totalorder %v3197, %v227
        %v3264 = vsel %vm3198, 1, 0
        %v3265 = vsel %vm3199, 1, 0
        %v3266 = vsel %vm3200, 1, 0
        %v3267 = vsel %vm3201, 1, 0
        %v3268 = vsel %vm3202, 1, 0
        %v3269 = vsel %vm3203, 1, 0
        %v3270 = vsel %vm3204, 1, 0
        %v3271 = vsel %vm3205, 1, 0
        %v3272 = vsel %vm3206, 1, 0
        %v3273 = vsel %vm3207, 1, 0
        %v3274 = vsel %vm3208, 1, 0
        %v3275 = vsel %vm3209, 1, 0
        %v3276 = vsel %vm3210, 1, 0
        %v3277 = vsel %vm3211, 1, 0
        %v3278 = vsel %vm3212, 1, 0
        %v3279 = vsel %vm3213, 1, 0
        %v3280 = vsel %vm3214, 1, 0
        %v3281 = vsel %vm3215, 1, 0
        %v3282 = vsel %vm3216, 1, 0
        %v3283 = vsel %vm3217, 1, 0
        %v3284 = vsel %vm3218, 1, 0
        %v3285 = vsel %vm3219, 1, 0
        %v3286 = vsel %vm3220, 1, 0
        %v3287 = vsel %vm3221, 1, 0
        %v3288 = vsel %vm3222, 1, 0
        %v3289 = vsel %vm3223, 1, 0
        %v3290 = vsel %vm3224, 1, 0
        %v3291 = vsel %vm3225, 1, 0
        %v3292 = vsel %vm3226, 1, 0
        %v3293 = vsel %vm3227, 1, 0
        %v3294 = vsel %vm3228, 1, 0
        %v3295 = vsel %vm3229, 1, 0
        %v3296 = vsel %vm3230, 1, 0
        %v3297 = vsel %vm3231, 1, 0
        %v3298 = vsel %vm3232, 1, 0
        %v3299 = vsel %vm3233, 1, 0
        %v3300 = vsel %vm3234, 1, 0
        %v3301 = vsel %vm3235, 1, 0
        %v3302 = vsel %vm3236, 1, 0
        %v3303 = vsel %vm3237, 1, 0
        %v3304 = vsel %vm3238, 1, 0
        %v3305 = vsel %vm3239, 1, 0
        %v3306 = vsel %vm3240, 1, 0
        %v3307 = vsel %vm3241, 1, 0
        %v3308 = vsel %vm3242, 1, 0
        %v3309 = vsel %vm3243, 1, 0
        %v3310 = vsel %vm3244, 1, 0
        %v3311 = vsel %vm3245, 1, 0
        %v3312 = vsel %vm3246, 1, 0
        %v3313 = vsel %vm3247, 1, 0
        %v3314 = vsel %vm3248, 1, 0
        %v3315 = vsel %vm3249, 1, 0
        %v3316 = vsel %vm3250, 1, 0
        %v3317 = vsel %vm3251, 1, 0
        %v3318 = vsel %vm3252, 1, 0
        %v3319 = vsel %vm3253, 1, 0
        %v3320 = vsel %vm3254, 1, 0
        %v3321 = vsel %vm3255, 1, 0
        %v3322 = vsel %vm3256, 1, 0
        %v3323 = vsel %vm3257, 1, 0
        %v3324 = vsel %vm3258, 1, 0
        %v3325 = vsel %vm3259, 1, 0
        %v3326 = vsel %vm3260, 1, 0
        %v3327 = vsel %vm3261, 1, 0
        %v3328 = vsel %vm3262, 1, 0
        %v3329 = vsel %vm3263, 1, 0
        %v3330 = vcvt.s32.f32 %v3264
        %v3331 = vcvt.s32.f32 %v3265
        %v3332 = vcvt.s32.f32 %v3266
        %v3333 = vcvt.s32.f32 %v3267
        %v3334 = vcvt.s32.f32 %v3268
        %v3335 = vcvt.s32.f32 %v3269
        %v3336 = vcvt.s32.f32 %v3270
        %v3337 = vcvt.s32.f32 %v3271
        %v3338 = vcvt.s32.f32 %v3272
        %v3339 = vcvt.s32.f32 %v3273
        %v3340 = vcvt.s32.f32 %v3274
        %v3341 = vcvt.s32.f32 %v3275
        %v3342 = vcvt.s32.f32 %v3276
        %v3343 = vcvt.s32.f32 %v3277
        %v3344 = vcvt.s32.f32 %v3278
        %v3345 = vcvt.s32.f32 %v3279
        %v3346 = vcvt.s32.f32 %v3280
        %v3347 = vcvt.s32.f32 %v3281
        %v3348 = vcvt.s32.f32 %v3282
        %v3349 = vcvt.s32.f32 %v3283
        %v3350 = vcvt.s32.f32 %v3284
        %v3351 = vcvt.s32.f32 %v3285
        %v3352 = vcvt.s32.f32 %v3286
        %v3353 = vcvt.s32.f32 %v3287
        %v3354 = vcvt.s32.f32 %v3288
        %v3355 = vcvt.s32.f32 %v3289
        %v3356 = vcvt.s32.f32 %v3290
        %v3357 = vcvt.s32.f32 %v3291
        %v3358 = vcvt.s32.f32 %v3292
        %v3359 = vcvt.s32.f32 %v3293
        %v3360 = vcvt.s32.f32 %v3294
        %v3361 = vcvt.s32.f32 %v3295
        %v3362 = vcvt.s32.f32 %v3296
        %v3363 = vcvt.s32.f32 %v3297
        %v3364 = vcvt.s32.f32 %v3298
        %v3365 = vcvt.s32.f32 %v3299
        %v3366 = vcvt.s32.f32 %v3300
        %v3367 = vcvt.s32.f32 %v3301
        %v3368 = vcvt.s32.f32 %v3302
        %v3369 = vcvt.s32.f32 %v3303
        %v3370 = vcvt.s32.f32 %v3304
        %v3371 = vcvt.s32.f32 %v3305
        %v3372 = vcvt.s32.f32 %v3306
        %v3373 = vcvt.s32.f32 %v3307
        %v3374 = vcvt.s32.f32 %v3308
        %v3375 = vcvt.s32.f32 %v3309
        %v3376 = vcvt.s32.f32 %v3310
        %v3377 = vcvt.s32.f32 %v3311
        %v3378 = vcvt.s32.f32 %v3312
        %v3379 = vcvt.s32.f32 %v3313
        %v3380 = vcvt.s32.f32 %v3314
        %v3381 = vcvt.s32.f32 %v3315
        %v3382 = vcvt.s32.f32 %v3316
        %v3383 = vcvt.s32.f32 %v3317
        %v3384 = vcvt.s32.f32 %v3318
        %v3385 = vcvt.s32.f32 %v3319
        %v3386 = vcvt.s32.f32 %v3320
        %v3387 = vcvt.s32.f32 %v3321
        %v3388 = vcvt.s32.f32 %v3322
        %v3389 = vcvt.s32.f32 %v3323
        %v3390 = vcvt.s32.f32 %v3324
        %v3391 = vcvt.s32.f32 %v3325
        %v3392 = vcvt.s32.f32 %v3326
        %v3393 = vcvt.s32.f32 %v3327
        %v3394 = vcvt.s32.f32 %v3328
        %v3395 = vcvt.s32.f32 %v3329
        %v3396 = vadd.f32 %v2934, %v3330
        %v3397 = vadd.f32 %v2935, %v3331
        %v3398 = vadd.f32 %v2936, %v3332
        %v3399 = vadd.f32 %v2937, %v3333
        %v3400 = vadd.f32 %v2938, %v3334
        %v3401 = vadd.f32 %v2939, %v3335
        %v3402 = vadd.f32 %v2940, %v3336
        %v3403 = vadd.f32 %v2941, %v3337
        %v3404 = vadd.f32 %v2942, %v3338
        %v3405 = vadd.f32 %v2943, %v3339
        %v3406 = vadd.f32 %v2944, %v3340
        %v3407 = vadd.f32 %v2945, %v3341
        %v3408 = vadd.f32 %v2946, %v3342
        %v3409 = vadd.f32 %v2947, %v3343
        %v3410 = vadd.f32 %v2948, %v3344
        %v3411 = vadd.f32 %v2949, %v3345
        %v3412 = vadd.f32 %v2950, %v3346
        %v3413 = vadd.f32 %v2951, %v3347
        %v3414 = vadd.f32 %v2952, %v3348
        %v3415 = vadd.f32 %v2953, %v3349
        %v3416 = vadd.f32 %v2954, %v3350
        %v3417 = vadd.f32 %v2955, %v3351
        %v3418 = vadd.f32 %v2956, %v3352
        %v3419 = vadd.f32 %v2957, %v3353
        %v3420 = vadd.f32 %v2958, %v3354
        %v3421 = vadd.f32 %v2959, %v3355
        %v3422 = vadd.f32 %v2960, %v3356
        %v3423 = vadd.f32 %v2961, %v3357
        %v3424 = vadd.f32 %v2962, %v3358
        %v3425 = vadd.f32 %v2963, %v3359
        %v3426 = vadd.f32 %v2964, %v3360
        %v3427 = vadd.f32 %v2965, %v3361
        %v3428 = vadd.f32 %v2966, %v3362
        %v3429 = vadd.f32 %v2967, %v3363
        %v3430 = vadd.f32 %v2968, %v3364
        %v3431 = vadd.f32 %v2969, %v3365
        %v3432 = vadd.f32 %v2970, %v3366
        %v3433 = vadd.f32 %v2971, %v3367
        %v3434 = vadd.f32 %v2972, %v3368
        %v3435 = vadd.f32 %v2973, %v3369
        %v3436 = vadd.f32 %v2974, %v3370
        %v3437 = vadd.f32 %v2975, %v3371
        %v3438 = vadd.f32 %v2976, %v3372
        %v3439 = vadd.f32 %v2977, %v3373
        %v3440 = vadd.f32 %v2978, %v3374
        %v3441 = vadd.f32 %v2979, %v3375
        %v3442 = vadd.f32 %v2980, %v3376
        %v3443 = vadd.f32 %v2981, %v3377
        %v3444 = vadd.f32 %v2982, %v3378
        %v3445 = vadd.f32 %v2983, %v3379
        %v3446 = vadd.f32 %v2984, %v3380
        %v3447 = vadd.f32 %v2985, %v3381
        %v3448 = vadd.f32 %v2986, %v3382
        %v3449 = vadd.f32 %v2987, %v3383
        %v3450 = vadd.f32 %v2988, %v3384
        %v3451 = vadd.f32 %v2989, %v3385
        %v3452 = vadd.f32 %v2990, %v3386
        %v3453 = vadd.f32 %v2991, %v3387
        %v3454 = vadd.f32 %v2992, %v3388
        %v3455 = vadd.f32 %v2993, %v3389
        %v3456 = vadd.f32 %v2994, %v3390
        %v3457 = vadd.f32 %v2995, %v3391
        %v3458 = vadd.f32 %v2996, %v3392
        %v3459 = vadd.f32 %v2997, %v3393
        %v3460 = vadd.f32 %v2998, %v3394
        %v3461 = vadd.f32 %v2999, %v3395
        %3462 = vset.pattern.permute.xlu0 7
        %3463 = vperm.xlu0 %3462, %v160
        %v3464 = vpop.permute.xlu0 %3463
        %3465 = vset.pattern.permute.xlu0 7
        %3466 = vperm.xlu0 %3465, %v161
        %v3467 = vpop.permute.xlu0 %3466
        %3468 = vset.pattern.permute.xlu0 7
        %3469 = vperm.xlu0 %3468, %v162
        %v3470 = vpop.permute.xlu0 %3469
        %3471 = vset.pattern.permute.xlu0 7
        %3472 = vperm.xlu0 %3471, %v163
        %v3473 = vpop.permute.xlu0 %3472
        %3474 = vset.pattern.permute.xlu0 7
        %3475 = vperm.xlu0 %3474, %v164
        %v3476 = vpop.permute.xlu0 %3475
        %3477 = vset.pattern.permute.xlu0 7
        %3478 = vperm.xlu0 %3477, %v165
        %v3479 = vpop.permute.xlu0 %3478
        %3480 = vset.pattern.permute.xlu0 7
        %3481 = vperm.xlu0 %3480, %v166
        %v3482 = vpop.permute.xlu0 %3481
        %3483 = vset.pattern.permute.xlu0 7
        %3484 = vperm.xlu0 %3483, %v167
        %v3485 = vpop.permute.xlu0 %3484
        %3486 = vset.pattern.permute.xlu0 7
        %3487 = vperm.xlu0 %3486, %v168
        %v3488 = vpop.permute.xlu0 %3487
        %3489 = vset.pattern.permute.xlu0 7
        %3490 = vperm.xlu0 %3489, %v169
        %v3491 = vpop.permute.xlu0 %3490
        %3492 = vset.pattern.permute.xlu0 7
        %3493 = vperm.xlu0 %3492, %v170
        %v3494 = vpop.permute.xlu0 %3493
        %3495 = vset.pattern.permute.xlu0 7
        %3496 = vperm.xlu0 %3495, %v171
        %v3497 = vpop.permute.xlu0 %3496
        %3498 = vset.pattern.permute.xlu0 7
        %3499 = vperm.xlu0 %3498, %v172
        %v3500 = vpop.permute.xlu0 %3499
        %3501 = vset.pattern.permute.xlu0 7
        %3502 = vperm.xlu0 %3501, %v173
        %v3503 = vpop.permute.xlu0 %3502
        %3504 = vset.pattern.permute.xlu0 7
        %3505 = vperm.xlu0 %3504, %v174
        %v3506 = vpop.permute.xlu0 %3505
        %3507 = vset.pattern.permute.xlu0 7
        %3508 = vperm.xlu0 %3507, %v175
        %v3509 = vpop.permute.xlu0 %3508
        %3510 = vset.pattern.permute.xlu0 7
        %3511 = vperm.xlu0 %3510, %v176
        %v3512 = vpop.permute.xlu0 %3511
        %3513 = vset.pattern.permute.xlu0 7
        %3514 = vperm.xlu0 %3513, %v177
        %v3515 = vpop.permute.xlu0 %3514
        %3516 = vset.pattern.permute.xlu0 7
        %3517 = vperm.xlu0 %3516, %v178
        %v3518 = vpop.permute.xlu0 %3517
        %3519 = vset.pattern.permute.xlu0 7
        %3520 = vperm.xlu0 %3519, %v179
        %v3521 = vpop.permute.xlu0 %3520
        %3522 = vset.pattern.permute.xlu0 7
        %3523 = vperm.xlu0 %3522, %v180
        %v3524 = vpop.permute.xlu0 %3523
        %3525 = vset.pattern.permute.xlu0 7
        %3526 = vperm.xlu0 %3525, %v181
        %v3527 = vpop.permute.xlu0 %3526
        %3528 = vset.pattern.permute.xlu0 7
        %3529 = vperm.xlu0 %3528, %v182
        %v3530 = vpop.permute.xlu0 %3529
        %3531 = vset.pattern.permute.xlu0 7
        %3532 = vperm.xlu0 %3531, %v183
        %v3533 = vpop.permute.xlu0 %3532
        %3534 = vset.pattern.permute.xlu0 7
        %3535 = vperm.xlu0 %3534, %v184
        %v3536 = vpop.permute.xlu0 %3535
        %3537 = vset.pattern.permute.xlu0 7
        %3538 = vperm.xlu0 %3537, %v185
        %v3539 = vpop.permute.xlu0 %3538
        %3540 = vset.pattern.permute.xlu0 7
        %3541 = vperm.xlu0 %3540, %v186
        %v3542 = vpop.permute.xlu0 %3541
        %3543 = vset.pattern.permute.xlu0 7
        %3544 = vperm.xlu0 %3543, %v187
        %v3545 = vpop.permute.xlu0 %3544
        %3546 = vset.pattern.permute.xlu0 7
        %3547 = vperm.xlu0 %3546, %v188
        %v3548 = vpop.permute.xlu0 %3547
        %3549 = vset.pattern.permute.xlu0 7
        %3550 = vperm.xlu0 %3549, %v189
        %v3551 = vpop.permute.xlu0 %3550
        %3552 = vset.pattern.permute.xlu0 7
        %3553 = vperm.xlu0 %3552, %v190
        %v3554 = vpop.permute.xlu0 %3553
        %3555 = vset.pattern.permute.xlu0 7
        %3556 = vperm.xlu0 %3555, %v191
        %v3557 = vpop.permute.xlu0 %3556
        %3558 = vset.pattern.permute.xlu0 7
        %3559 = vperm.xlu0 %3558, %v192
        %v3560 = vpop.permute.xlu0 %3559
        %3561 = vset.pattern.permute.xlu0 7
        %3562 = vperm.xlu0 %3561, %v193
        %v3563 = vpop.permute.xlu0 %3562
        %3564 = vset.pattern.permute.xlu0 7
        %3565 = vperm.xlu0 %3564, %v194
        %v3566 = vpop.permute.xlu0 %3565
        %3567 = vset.pattern.permute.xlu0 7
        %3568 = vperm.xlu0 %3567, %v195
        %v3569 = vpop.permute.xlu0 %3568
        %3570 = vset.pattern.permute.xlu0 7
        %3571 = vperm.xlu0 %3570, %v196
        %v3572 = vpop.permute.xlu0 %3571
        %3573 = vset.pattern.permute.xlu0 7
        %3574 = vperm.xlu0 %3573, %v197
        %v3575 = vpop.permute.xlu0 %3574
        %3576 = vset.pattern.permute.xlu0 7
        %3577 = vperm.xlu0 %3576, %v198
        %v3578 = vpop.permute.xlu0 %3577
        %3579 = vset.pattern.permute.xlu0 7
        %3580 = vperm.xlu0 %3579, %v199
        %v3581 = vpop.permute.xlu0 %3580
        %3582 = vset.pattern.permute.xlu0 7
        %3583 = vperm.xlu0 %3582, %v200
        %v3584 = vpop.permute.xlu0 %3583
        %3585 = vset.pattern.permute.xlu0 7
        %3586 = vperm.xlu0 %3585, %v201
        %v3587 = vpop.permute.xlu0 %3586
        %3588 = vset.pattern.permute.xlu0 7
        %3589 = vperm.xlu0 %3588, %v202
        %v3590 = vpop.permute.xlu0 %3589
        %3591 = vset.pattern.permute.xlu0 7
        %3592 = vperm.xlu0 %3591, %v203
        %v3593 = vpop.permute.xlu0 %3592
        %3594 = vset.pattern.permute.xlu0 7
        %3595 = vperm.xlu0 %3594, %v204
        %v3596 = vpop.permute.xlu0 %3595
        %3597 = vset.pattern.permute.xlu0 7
        %3598 = vperm.xlu0 %3597, %v205
        %v3599 = vpop.permute.xlu0 %3598
        %3600 = vset.pattern.permute.xlu0 7
        %3601 = vperm.xlu0 %3600, %v206
        %v3602 = vpop.permute.xlu0 %3601
        %3603 = vset.pattern.permute.xlu0 7
        %3604 = vperm.xlu0 %3603, %v207
        %v3605 = vpop.permute.xlu0 %3604
        %3606 = vset.pattern.permute.xlu0 7
        %3607 = vperm.xlu0 %3606, %v208
        %v3608 = vpop.permute.xlu0 %3607
        %3609 = vset.pattern.permute.xlu0 7
        %3610 = vperm.xlu0 %3609, %v209
        %v3611 = vpop.permute.xlu0 %3610
        %3612 = vset.pattern.permute.xlu0 7
        %3613 = vperm.xlu0 %3612, %v210
        %v3614 = vpop.permute.xlu0 %3613
        %3615 = vset.pattern.permute.xlu0 7
        %3616 = vperm.xlu0 %3615, %v211
        %v3617 = vpop.permute.xlu0 %3616
        %3618 = vset.pattern.permute.xlu0 7
        %3619 = vperm.xlu0 %3618, %v212
        %v3620 = vpop.permute.xlu0 %3619
        %3621 = vset.pattern.permute.xlu0 7
        %3622 = vperm.xlu0 %3621, %v213
        %v3623 = vpop.permute.xlu0 %3622
        %3624 = vset.pattern.permute.xlu0 7
        %3625 = vperm.xlu0 %3624, %v214
        %v3626 = vpop.permute.xlu0 %3625
        %3627 = vset.pattern.permute.xlu0 7
        %3628 = vperm.xlu0 %3627, %v215
        %v3629 = vpop.permute.xlu0 %3628
        %3630 = vset.pattern.permute.xlu0 7
        %3631 = vperm.xlu0 %3630, %v216
        %v3632 = vpop.permute.xlu0 %3631
        %3633 = vset.pattern.permute.xlu0 7
        %3634 = vperm.xlu0 %3633, %v217
        %v3635 = vpop.permute.xlu0 %3634
        %3636 = vset.pattern.permute.xlu0 7
        %3637 = vperm.xlu0 %3636, %v218
        %v3638 = vpop.permute.xlu0 %3637
        %3639 = vset.pattern.permute.xlu0 7
        %3640 = vperm.xlu0 %3639, %v219
        %v3641 = vpop.permute.xlu0 %3640
        %3642 = vset.pattern.permute.xlu0 7
        %3643 = vperm.xlu0 %3642, %v220
        %v3644 = vpop.permute.xlu0 %3643
        %3645 = vset.pattern.permute.xlu0 7
        %3646 = vperm.xlu0 %3645, %v221
        %v3647 = vpop.permute.xlu0 %3646
        %3648 = vset.pattern.permute.xlu0 7
        %3649 = vperm.xlu0 %3648, %v222
        %v3650 = vpop.permute.xlu0 %3649
        %3651 = vset.pattern.permute.xlu0 7
        %3652 = vperm.xlu0 %3651, %v223
        %v3653 = vpop.permute.xlu0 %3652
        %3654 = vset.pattern.permute.xlu0 7
        %3655 = vperm.xlu0 %3654, %v224
        %v3656 = vpop.permute.xlu0 %3655
        %3657 = vset.pattern.permute.xlu0 7
        %3658 = vperm.xlu0 %3657, %v225
        %v3659 = vpop.permute.xlu0 %3658
        %vm3660 = vcmp.eq.s32.totalorder %v3464, %v227
        %vm3661 = vcmp.eq.s32.totalorder %v3467, %v227
        %vm3662 = vcmp.eq.s32.totalorder %v3470, %v227
        %vm3663 = vcmp.eq.s32.totalorder %v3473, %v227
        %vm3664 = vcmp.eq.s32.totalorder %v3476, %v227
        %vm3665 = vcmp.eq.s32.totalorder %v3479, %v227
        %vm3666 = vcmp.eq.s32.totalorder %v3482, %v227
        %vm3667 = vcmp.eq.s32.totalorder %v3485, %v227
        %vm3668 = vcmp.eq.s32.totalorder %v3488, %v227
        %vm3669 = vcmp.eq.s32.totalorder %v3491, %v227
        %vm3670 = vcmp.eq.s32.totalorder %v3494, %v227
        %vm3671 = vcmp.eq.s32.totalorder %v3497, %v227
        %vm3672 = vcmp.eq.s32.totalorder %v3500, %v227
        %vm3673 = vcmp.eq.s32.totalorder %v3503, %v227
        %vm3674 = vcmp.eq.s32.totalorder %v3506, %v227
        %vm3675 = vcmp.eq.s32.totalorder %v3509, %v227
        %vm3676 = vcmp.eq.s32.totalorder %v3512, %v227
        %vm3677 = vcmp.eq.s32.totalorder %v3515, %v227
        %vm3678 = vcmp.eq.s32.totalorder %v3518, %v227
        %vm3679 = vcmp.eq.s32.totalorder %v3521, %v227
        %vm3680 = vcmp.eq.s32.totalorder %v3524, %v227
        %vm3681 = vcmp.eq.s32.totalorder %v3527, %v227
        %vm3682 = vcmp.eq.s32.totalorder %v3530, %v227
        %vm3683 = vcmp.eq.s32.totalorder %v3533, %v227
        %vm3684 = vcmp.eq.s32.totalorder %v3536, %v227
        %vm3685 = vcmp.eq.s32.totalorder %v3539, %v227
        %vm3686 = vcmp.eq.s32.totalorder %v3542, %v227
        %vm3687 = vcmp.eq.s32.totalorder %v3545, %v227
        %vm3688 = vcmp.eq.s32.totalorder %v3548, %v227
        %vm3689 = vcmp.eq.s32.totalorder %v3551, %v227
        %vm3690 = vcmp.eq.s32.totalorder %v3554, %v227
        %vm3691 = vcmp.eq.s32.totalorder %v3557, %v227
        %vm3692 = vcmp.eq.s32.totalorder %v3560, %v227
        %vm3693 = vcmp.eq.s32.totalorder %v3563, %v227
        %vm3694 = vcmp.eq.s32.totalorder %v3566, %v227
        %vm3695 = vcmp.eq.s32.totalorder %v3569, %v227
        %vm3696 = vcmp.eq.s32.totalorder %v3572, %v227
        %vm3697 = vcmp.eq.s32.totalorder %v3575, %v227
        %vm3698 = vcmp.eq.s32.totalorder %v3578, %v227
        %vm3699 = vcmp.eq.s32.totalorder %v3581, %v227
        %vm3700 = vcmp.eq.s32.totalorder %v3584, %v227
        %vm3701 = vcmp.eq.s32.totalorder %v3587, %v227
        %vm3702 = vcmp.eq.s32.totalorder %v3590, %v227
        %vm3703 = vcmp.eq.s32.totalorder %v3593, %v227
        %vm3704 = vcmp.eq.s32.totalorder %v3596, %v227
        %vm3705 = vcmp.eq.s32.totalorder %v3599, %v227
        %vm3706 = vcmp.eq.s32.totalorder %v3602, %v227
        %vm3707 = vcmp.eq.s32.totalorder %v3605, %v227
        %vm3708 = vcmp.eq.s32.totalorder %v3608, %v227
        %vm3709 = vcmp.eq.s32.totalorder %v3611, %v227
        %vm3710 = vcmp.eq.s32.totalorder %v3614, %v227
        %vm3711 = vcmp.eq.s32.totalorder %v3617, %v227
        %vm3712 = vcmp.eq.s32.totalorder %v3620, %v227
        %vm3713 = vcmp.eq.s32.totalorder %v3623, %v227
        %vm3714 = vcmp.eq.s32.totalorder %v3626, %v227
        %vm3715 = vcmp.eq.s32.totalorder %v3629, %v227
        %vm3716 = vcmp.eq.s32.totalorder %v3632, %v227
        %vm3717 = vcmp.eq.s32.totalorder %v3635, %v227
        %vm3718 = vcmp.eq.s32.totalorder %v3638, %v227
        %vm3719 = vcmp.eq.s32.totalorder %v3641, %v227
        %vm3720 = vcmp.eq.s32.totalorder %v3644, %v227
        %vm3721 = vcmp.eq.s32.totalorder %v3647, %v227
        %vm3722 = vcmp.eq.s32.totalorder %v3650, %v227
        %vm3723 = vcmp.eq.s32.totalorder %v3653, %v227
        %vm3724 = vcmp.eq.s32.totalorder %v3656, %v227
        %vm3725 = vcmp.eq.s32.totalorder %v3659, %v227
        %v3726 = vsel %vm3660, 1, 0
        %v3727 = vsel %vm3661, 1, 0
        %v3728 = vsel %vm3662, 1, 0
        %v3729 = vsel %vm3663, 1, 0
        %v3730 = vsel %vm3664, 1, 0
        %v3731 = vsel %vm3665, 1, 0
        %v3732 = vsel %vm3666, 1, 0
        %v3733 = vsel %vm3667, 1, 0
        %v3734 = vsel %vm3668, 1, 0
        %v3735 = vsel %vm3669, 1, 0
        %v3736 = vsel %vm3670, 1, 0
        %v3737 = vsel %vm3671, 1, 0
        %v3738 = vsel %vm3672, 1, 0
        %v3739 = vsel %vm3673, 1, 0
        %v3740 = vsel %vm3674, 1, 0
        %v3741 = vsel %vm3675, 1, 0
        %v3742 = vsel %vm3676, 1, 0
        %v3743 = vsel %vm3677, 1, 0
        %v3744 = vsel %vm3678, 1, 0
        %v3745 = vsel %vm3679, 1, 0
        %v3746 = vsel %vm3680, 1, 0
        %v3747 = vsel %vm3681, 1, 0
        %v3748 = vsel %vm3682, 1, 0
        %v3749 = vsel %vm3683, 1, 0
        %v3750 = vsel %vm3684, 1, 0
        %v3751 = vsel %vm3685, 1, 0
        %v3752 = vsel %vm3686, 1, 0
        %v3753 = vsel %vm3687, 1, 0
        %v3754 = vsel %vm3688, 1, 0
        %v3755 = vsel %vm3689, 1, 0
        %v3756 = vsel %vm3690, 1, 0
        %v3757 = vsel %vm3691, 1, 0
        %v3758 = vsel %vm3692, 1, 0
        %v3759 = vsel %vm3693, 1, 0
        %v3760 = vsel %vm3694, 1, 0
        %v3761 = vsel %vm3695, 1, 0
        %v3762 = vsel %vm3696, 1, 0
        %v3763 = vsel %vm3697, 1, 0
        %v3764 = vsel %vm3698, 1, 0
        %v3765 = vsel %vm3699, 1, 0
        %v3766 = vsel %vm3700, 1, 0
        %v3767 = vsel %vm3701, 1, 0
        %v3768 = vsel %vm3702, 1, 0
        %v3769 = vsel %vm3703, 1, 0
        %v3770 = vsel %vm3704, 1, 0
        %v3771 = vsel %vm3705, 1, 0
        %v3772 = vsel %vm3706, 1, 0
        %v3773 = vsel %vm3707, 1, 0
        %v3774 = vsel %vm3708, 1, 0
        %v3775 = vsel %vm3709, 1, 0
        %v3776 = vsel %vm3710, 1, 0
        %v3777 = vsel %vm3711, 1, 0
        %v3778 = vsel %vm3712, 1, 0
        %v3779 = vsel %vm3713, 1, 0
        %v3780 = vsel %vm3714, 1, 0
        %v3781 = vsel %vm3715, 1, 0
        %v3782 = vsel %vm3716, 1, 0
        %v3783 = vsel %vm3717, 1, 0
        %v3784 = vsel %vm3718, 1, 0
        %v3785 = vsel %vm3719, 1, 0
        %v3786 = vsel %vm3720, 1, 0
        %v3787 = vsel %vm3721, 1, 0
        %v3788 = vsel %vm3722, 1, 0
        %v3789 = vsel %vm3723, 1, 0
        %v3790 = vsel %vm3724, 1, 0
        %v3791 = vsel %vm3725, 1, 0
        %v3792 = vcvt.s32.f32 %v3726
        %v3793 = vcvt.s32.f32 %v3727
        %v3794 = vcvt.s32.f32 %v3728
        %v3795 = vcvt.s32.f32 %v3729
        %v3796 = vcvt.s32.f32 %v3730
        %v3797 = vcvt.s32.f32 %v3731
        %v3798 = vcvt.s32.f32 %v3732
        %v3799 = vcvt.s32.f32 %v3733
        %v3800 = vcvt.s32.f32 %v3734
        %v3801 = vcvt.s32.f32 %v3735
        %v3802 = vcvt.s32.f32 %v3736
        %v3803 = vcvt.s32.f32 %v3737
        %v3804 = vcvt.s32.f32 %v3738
        %v3805 = vcvt.s32.f32 %v3739
        %v3806 = vcvt.s32.f32 %v3740
        %v3807 = vcvt.s32.f32 %v3741
        %v3808 = vcvt.s32.f32 %v3742
        %v3809 = vcvt.s32.f32 %v3743
        %v3810 = vcvt.s32.f32 %v3744
        %v3811 = vcvt.s32.f32 %v3745
        %v3812 = vcvt.s32.f32 %v3746
        %v3813 = vcvt.s32.f32 %v3747
        %v3814 = vcvt.s32.f32 %v3748
        %v3815 = vcvt.s32.f32 %v3749
        %v3816 = vcvt.s32.f32 %v3750
        %v3817 = vcvt.s32.f32 %v3751
        %v3818 = vcvt.s32.f32 %v3752
        %v3819 = vcvt.s32.f32 %v3753
        %v3820 = vcvt.s32.f32 %v3754
        %v3821 = vcvt.s32.f32 %v3755
        %v3822 = vcvt.s32.f32 %v3756
        %v3823 = vcvt.s32.f32 %v3757
        %v3824 = vcvt.s32.f32 %v3758
        %v3825 = vcvt.s32.f32 %v3759
        %v3826 = vcvt.s32.f32 %v3760
        %v3827 = vcvt.s32.f32 %v3761
        %v3828 = vcvt.s32.f32 %v3762
        %v3829 = vcvt.s32.f32 %v3763
        %v3830 = vcvt.s32.f32 %v3764
        %v3831 = vcvt.s32.f32 %v3765
        %v3832 = vcvt.s32.f32 %v3766
        %v3833 = vcvt.s32.f32 %v3767
        %v3834 = vcvt.s32.f32 %v3768
        %v3835 = vcvt.s32.f32 %v3769
        %v3836 = vcvt.s32.f32 %v3770
        %v3837 = vcvt.s32.f32 %v3771
        %v3838 = vcvt.s32.f32 %v3772
        %v3839 = vcvt.s32.f32 %v3773
        %v3840 = vcvt.s32.f32 %v3774
        %v3841 = vcvt.s32.f32 %v3775
        %v3842 = vcvt.s32.f32 %v3776
        %v3843 = vcvt.s32.f32 %v3777
        %v3844 = vcvt.s32.f32 %v3778
        %v3845 = vcvt.s32.f32 %v3779
        %v3846 = vcvt.s32.f32 %v3780
        %v3847 = vcvt.s32.f32 %v3781
        %v3848 = vcvt.s32.f32 %v3782
        %v3849 = vcvt.s32.f32 %v3783
        %v3850 = vcvt.s32.f32 %v3784
        %v3851 = vcvt.s32.f32 %v3785
        %v3852 = vcvt.s32.f32 %v3786
        %v3853 = vcvt.s32.f32 %v3787
        %v3854 = vcvt.s32.f32 %v3788
        %v3855 = vcvt.s32.f32 %v3789
        %v3856 = vcvt.s32.f32 %v3790
        %v3857 = vcvt.s32.f32 %v3791
        %v3858 = vadd.f32 %v3396, %v3792
        %v3859 = vadd.f32 %v3397, %v3793
        %v3860 = vadd.f32 %v3398, %v3794
        %v3861 = vadd.f32 %v3399, %v3795
        %v3862 = vadd.f32 %v3400, %v3796
        %v3863 = vadd.f32 %v3401, %v3797
        %v3864 = vadd.f32 %v3402, %v3798
        %v3865 = vadd.f32 %v3403, %v3799
        %v3866 = vadd.f32 %v3404, %v3800
        %v3867 = vadd.f32 %v3405, %v3801
        %v3868 = vadd.f32 %v3406, %v3802
        %v3869 = vadd.f32 %v3407, %v3803
        %v3870 = vadd.f32 %v3408, %v3804
        %v3871 = vadd.f32 %v3409, %v3805
        %v3872 = vadd.f32 %v3410, %v3806
        %v3873 = vadd.f32 %v3411, %v3807
        %v3874 = vadd.f32 %v3412, %v3808
        %v3875 = vadd.f32 %v3413, %v3809
        %v3876 = vadd.f32 %v3414, %v3810
        %v3877 = vadd.f32 %v3415, %v3811
        %v3878 = vadd.f32 %v3416, %v3812
        %v3879 = vadd.f32 %v3417, %v3813
        %v3880 = vadd.f32 %v3418, %v3814
        %v3881 = vadd.f32 %v3419, %v3815
        %v3882 = vadd.f32 %v3420, %v3816
        %v3883 = vadd.f32 %v3421, %v3817
        %v3884 = vadd.f32 %v3422, %v3818
        %v3885 = vadd.f32 %v3423, %v3819
        %v3886 = vadd.f32 %v3424, %v3820
        %v3887 = vadd.f32 %v3425, %v3821
        %v3888 = vadd.f32 %v3426, %v3822
        %v3889 = vadd.f32 %v3427, %v3823
        %v3890 = vadd.f32 %v3428, %v3824
        %v3891 = vadd.f32 %v3429, %v3825
        %v3892 = vadd.f32 %v3430, %v3826
        %v3893 = vadd.f32 %v3431, %v3827
        %v3894 = vadd.f32 %v3432, %v3828
        %v3895 = vadd.f32 %v3433, %v3829
        %v3896 = vadd.f32 %v3434, %v3830
        %v3897 = vadd.f32 %v3435, %v3831
        %v3898 = vadd.f32 %v3436, %v3832
        %v3899 = vadd.f32 %v3437, %v3833
        %v3900 = vadd.f32 %v3438, %v3834
        %v3901 = vadd.f32 %v3439, %v3835
        %v3902 = vadd.f32 %v3440, %v3836
        %v3903 = vadd.f32 %v3441, %v3837
        %v3904 = vadd.f32 %v3442, %v3838
        %v3905 = vadd.f32 %v3443, %v3839
        %v3906 = vadd.f32 %v3444, %v3840
        %v3907 = vadd.f32 %v3445, %v3841
        %v3908 = vadd.f32 %v3446, %v3842
        %v3909 = vadd.f32 %v3447, %v3843
        %v3910 = vadd.f32 %v3448, %v3844
        %v3911 = vadd.f32 %v3449, %v3845
        %v3912 = vadd.f32 %v3450, %v3846
        %v3913 = vadd.f32 %v3451, %v3847
        %v3914 = vadd.f32 %v3452, %v3848
        %v3915 = vadd.f32 %v3453, %v3849
        %v3916 = vadd.f32 %v3454, %v3850
        %v3917 = vadd.f32 %v3455, %v3851
        %v3918 = vadd.f32 %v3456, %v3852
        %v3919 = vadd.f32 %v3457, %v3853
        %v3920 = vadd.f32 %v3458, %v3854
        %v3921 = vadd.f32 %v3459, %v3855
        %v3922 = vadd.f32 %v3460, %v3856
        %v3923 = vadd.f32 %v3461, %v3857
        %v3924 = vld [vmem:[#allocation2] sm:$0xff]
        %v3925 = vld [vmem:[#allocation2 + $0x8] sm:$0xff]
        %v3926 = vld [vmem:[#allocation2 + $0x10] sm:$0xff]
        %v3927 = vld [vmem:[#allocation2 + $0x18] sm:$0xff]
        %v3928 = vld [vmem:[#allocation2 + $0x20] sm:$0xff]
        %v3929 = vld [vmem:[#allocation2 + $0x28] sm:$0xff]
        %v3930 = vld [vmem:[#allocation2 + $0x30] sm:$0xff]
        %v3931 = vld [vmem:[#allocation2 + $0x38] sm:$0xff]
        %v3932 = vld [vmem:[#allocation2 + $0x40] sm:$0xff]
        %v3933 = vld [vmem:[#allocation2 + $0x48] sm:$0xff]
        %v3934 = vld [vmem:[#allocation2 + $0x50] sm:$0xff]
        %v3935 = vld [vmem:[#allocation2 + $0x58] sm:$0xff]
        %v3936 = vld [vmem:[#allocation2 + $0x60] sm:$0xff]
        %v3937 = vld [vmem:[#allocation2 + $0x68] sm:$0xff]
        %v3938 = vld [vmem:[#allocation2 + $0x70] sm:$0xff]
        %v3939 = vld [vmem:[#allocation2 + $0x78] sm:$0xff]
        %v3940 = vld [vmem:[#allocation2 + $0x80] sm:$0xff]
        %v3941 = vld [vmem:[#allocation2 + $0x88] sm:$0xff]
        %v3942 = vld [vmem:[#allocation2 + $0x90] sm:$0xff]
        %v3943 = vld [vmem:[#allocation2 + $0x98] sm:$0xff]
        %v3944 = vld [vmem:[#allocation2 + $0xa0] sm:$0xff]
        %v3945 = vld [vmem:[#allocation2 + $0xa8] sm:$0xff]
        %v3946 = vld [vmem:[#allocation2 + $0xb0] sm:$0xff]
        %v3947 = vld [vmem:[#allocation2 + $0xb8] sm:$0xff]
        %v3948 = vld [vmem:[#allocation2 + $0xc0] sm:$0xff]
        %v3949 = vld [vmem:[#allocation2 + $0xc8] sm:$0xff]
        %v3950 = vld [vmem:[#allocation2 + $0xd0] sm:$0xff]
        %v3951 = vld [vmem:[#allocation2 + $0xd8] sm:$0xff]
        %v3952 = vld [vmem:[#allocation2 + $0xe0] sm:$0xff]
        %v3953 = vld [vmem:[#allocation2 + $0xe8] sm:$0xff]
        %v3954 = vld [vmem:[#allocation2 + $0xf0] sm:$0xff]
        %v3955 = vld [vmem:[#allocation2 + $0xf8] sm:$0xff]
        %v3956 = vld [vmem:[#allocation2 + $0x100] sm:$0xff]
        %v3957 = vld [vmem:[#allocation2 + $0x108] sm:$0xff]
        %v3958 = vld [vmem:[#allocation2 + $0x110] sm:$0xff]
        %v3959 = vld [vmem:[#allocation2 + $0x118] sm:$0xff]
        %v3960 = vld [vmem:[#allocation2 + $0x120] sm:$0xff]
        %v3961 = vld [vmem:[#allocation2 + $0x128] sm:$0xff]
        %v3962 = vld [vmem:[#allocation2 + $0x130] sm:$0xff]
        %v3963 = vld [vmem:[#allocation2 + $0x138] sm:$0xff]
        %v3964 = vld [vmem:[#allocation2 + $0x140] sm:$0xff]
        %v3965 = vld [vmem:[#allocation2 + $0x148] sm:$0xff]
        %v3966 = vld [vmem:[#allocation2 + $0x150] sm:$0xff]
        %v3967 = vld [vmem:[#allocation2 + $0x158] sm:$0xff]
        %v3968 = vld [vmem:[#allocation2 + $0x160] sm:$0xff]
        %v3969 = vld [vmem:[#allocation2 + $0x168] sm:$0xff]
        %v3970 = vld [vmem:[#allocation2 + $0x170] sm:$0xff]
        %v3971 = vld [vmem:[#allocation2 + $0x178] sm:$0xff]
        %3972 = vmatprep.subr.mxu0 %v3925
        %3973 = vmatpush1.msra.mxu0 %v3924
        %3974 = vmatprep.subr.mxu0 %v3928
        %3975 = vmatpush1.msra.mxu0 %v3927
        %3976 = vmatprep.subr.mxu0 %v3931
        %3977 = vmatpush1.msra.mxu0 %v3930
        %3978 = vmatprep.subr.mxu0 %v3934
        %3979 = vmatpush1.msra.mxu0 %v3933
        %3980 = vmatprep.subr.mxu0 %v3937
        %3981 = vmatpush1.msra.mxu0 %v3936
        %3982 = vmatprep.subr.mxu0 %v3940
        %3983 = vmatpush1.msra.mxu0 %v3939
        %3984 = vmatprep.subr.mxu0 %v3943
        %3985 = vmatpush1.msra.mxu0 %v3942
        %3986 = vmatprep.subr.mxu0 %v3946
        %3987 = vmatpush1.msra.mxu0 %v3945
        %3988 = vmatprep.subr.mxu0 %v3949
        %3989 = vmatpush1.msra.mxu0 %v3948
        %3990 = vmatprep.subr.mxu0 %v3952
        %3991 = vmatpush1.msra.mxu0 %v3951
        %3992 = vmatprep.subr.mxu0 %v3955
        %3993 = vmatpush1.msra.mxu0 %v3954
        %3994 = vmatprep.subr.mxu0 %v3958
        %3995 = vmatpush1.msra.mxu0 %v3957
        %3996 = vmatprep.subr.mxu0 %v3961
        %3997 = vmatpush1.msra.mxu0 %v3960
        %3998 = vmatprep.subr.mxu0 %v3964
        %3999 = vmatpush1.msra.mxu0 %v3963
        %4000 = vmatprep.subr.mxu0 %v3967
        %4001 = vmatpush1.msra.mxu0 %v3966
        %4002 = vmatprep.subr.mxu0 %v3970
        %4003 = vmatpush1.msra.mxu0 %v3969
        %4004 = vmatprep.subr.mxu0 0.0
        %4005 = vmatpush1.msra.mxu0 0.0
        %4006 = vmatprep.subr.mxu0 0.0
        %4007 = vmatpush1.msra.mxu0 0.0
        %4008 = vmatprep.subr.mxu0 0.0
        %4009 = vmatpush1.msra.mxu0 0.0
        %4010 = vmatprep.subr.mxu0 0.0
        %4011 = vmatpush1.msra.mxu0 0.0
        %4012 = vmatprep.subr.mxu0 0.0
        %4013 = vmatpush1.msra.mxu0 0.0
        %4014 = vmatprep.subr.mxu0 0.0
        %4015 = vmatpush1.msra.mxu0 0.0
        %4016 = vmatprep.subr.mxu0 0.0
        %4017 = vmatpush1.msra.mxu0 0.0
        %4018 = vmatprep.subr.mxu0 0.0
        %4019 = vmatpush1.msra.mxu0 0.0
        %4020 = vmatprep.subr.mxu0 0.0
        %4021 = vmatpush1.msra.mxu0 0.0
        %4022 = vmatprep.subr.mxu0 0.0
        %4023 = vmatpush1.msra.mxu0 0.0
        %4024 = vmatprep.subr.mxu0 0.0
        %4025 = vmatpush1.msra.mxu0 0.0
        %4026 = vmatprep.subr.mxu0 0.0
        %4027 = vmatpush1.msra.mxu0 0.0
        %4028 = vmatprep.subr.mxu0 0.0
        %4029 = vmatpush1.msra.mxu0 0.0
        %4030 = vmatprep.subr.mxu0 0.0
        %4031 = vmatpush1.msra.mxu0 0.0
        %4032 = vmatprep.subr.mxu0 0.0
        %4033 = vmatpush1.msra.mxu0 0.0
        %4034 = vmatprep.subr.mxu0 0.0
        %4035 = vmatpush1.msra.mxu0 0.0
        %4036 = vmatprep.mubr.f32.mxu0 0.0
        %4037 = vmatmul.mubr.f32.gmra.mrb[0].mxu0 %v3858
        %v4038 = vpop.f32.mrb[0].mxu0
        %v4039 = vadd.f32 0.0, %v4038
        %v4040 = vpop.f32.mrb[0].mxu0
        %v4041 = vadd.f32 0.0, %v4040
        %4042 = vmatprep.mubr.f32.mxu0 0.0
        %4043 = vmatmul.mubr.f32.gmra.mrb[0].mxu0 %v3859
        %v4044 = vpop.f32.mrb[0].mxu0
        %v4045 = vadd.f32 0.0, %v4044
        %v4046 = vpop.f32.mrb[0].mxu0
        %v4047 = vadd.f32 0.0, %v4046
        %4048 = vmatprep.mubr.f32.mxu0 0.0
        %4049 = vmatmul.mubr.f32.gmra.mrb[0].mxu0 %v3860
        %v4050 = vpop.f32.mrb[0].mxu0
        %v4051 = vadd.f32 0.0, %v4050
        %v4052 = vpop.f32.mrb[0].mxu0
        %v4053 = vadd.f32 0.0, %v4052
        %4054 = vmatprep.mubr.f32.mxu0 0.0
        %4055 = vmatmul.mubr.f32.gmra.mrb[0].mxu0 %v3861
        %v4056 = vpop.f32.mrb[0].mxu0
        %v4057 = vadd.f32 0.0, %v4056
        %v4058 = vpop.f32.mrb[0].mxu0
        %v4059 = vadd.f32 0.0, %v4058
        %4060 = vmatprep.mubr.f32.mxu0 0.0
        %4061 = vmatmul.mubr.f32.gmra.mrb[0].mxu0 %v3862
        %v4062 = vpop.f32.mrb[0].mxu0
        %v4063 = vadd.f32 0.0, %v4062
        %v4064 = vpop.f32.mrb[0].mxu0
        %v4065 = vadd.f32 0.0, %v4064
        %4066 = vmatprep.mubr.f32.mxu0 0.0
        %4067 = vmatmul.mubr.f32.gmra.mrb[0].mxu0 %v3863
        %v4068 = vpop.f32.mrb[0].mxu0
        %v4069 = vadd.f32 0.0, %v4068
        %v4070 = vpop.f32.mrb[0].mxu0
        %v4071 = vadd.f32 0.0, %v4070
        %4072 = vmatprep.mubr.f32.mxu0 0.0
        %4073 = vmatmul.mubr.f32.gmra.mrb[0].mxu0 %v3864
        %v4074 = vpop.f32.mrb[0].mxu0
        %v4075 = vadd.f32 0.0, %v4074
        %v4076 = vpop.f32.mrb[0].mxu0
        %v4077 = vadd.f32 0.0, %v4076
        %4078 = vmatprep.mubr.f32.mxu0 0.0
        %4079 = vmatmul.mubr.f32.gmra.mrb[0].mxu0 %v3865
        %v4080 = vpop.f32.mrb[0].mxu0
        %v4081 = vadd.f32 0.0, %v4080
        %v4082 = vpop.f32.mrb[0].mxu0
        %v4083 = vadd.f32 0.0, %v4082
        %4084 = vmatprep.mubr.f32.mxu0 0.0
        %4085 = vmatmul.mubr.f32.gmra.mrb[0].mxu0 %v3866
        %v4086 = vpop.f32.mrb[0].mxu0
        %v4087 = vadd.f32 0.0, %v4086
        %v4088 = vpop.f32.mrb[0].mxu0
        %v4089 = vadd.f32 0.0, %v4088
        %4090 = vmatprep.mubr.f32.mxu0 0.0
        %4091 = vmatmul.mubr.f32.gmra.mrb[0].mxu0 %v3867
        %v4092 = vpop.f32.mrb[0].mxu0
        %v4093 = vadd.f32 0.0, %v4092
        %v4094 = vpop.f32.mrb[0].mxu0
        %v4095 = vadd.f32 0.0, %v4094
        %4096 = vmatprep.mubr.f32.mxu0 0.0
        %4097 = vmatmul.mubr.f32.gmra.mrb[0].mxu0 %v3868
        %v4098 = vpop.f32.mrb[0].mxu0
        %v4099 = vadd.f32 0.0, %v4098
        %v4100 = vpop.f32.mrb[0].mxu0
        %v4101 = vadd.f32 0.0, %v4100
        %4102 = vmatprep.mubr.f32.mxu0 0.0
        %4103 = vmatmul.mubr.f32.gmra.mrb[0].mxu0 %v3869
        %v4104 = vpop.f32.mrb[0].mxu0
        %v4105 = vadd.f32 0.0, %v4104
        %v4106 = vpop.f32.mrb[0].mxu0
        %v4107 = vadd.f32 0.0, %v4106
        %4108 = vmatprep.mubr.f32.mxu0 0.0
        %4109 = vmatmul.mubr.f32.gmra.mrb[0].mxu0 %v3870
        %v4110 = vpop.f32.mrb[0].mxu0
        %v4111 = vadd.f32 0.0, %v4110
        %v4112 = vpop.f32.mrb[0].mxu0
        %v4113 = vadd.f32 0.0, %v4112
        %4114 = vmatprep.mubr.f32.mxu0 0.0
        %4115 = vmatmul.mubr.f32.gmra.mrb[0].mxu0 %v3871
        %v4116 = vpop.f32.mrb[0].mxu0
        %v4117 = vadd.f32 0.0, %v4116
        %v4118 = vpop.f32.mrb[0].mxu0
        %v4119 = vadd.f32 0.0, %v4118
        %4120 = vmatprep.mubr.f32.mxu0 0.0
        %4121 = vmatmul.mubr.f32.gmra.mrb[0].mxu0 %v3872
        %v4122 = vpop.f32.mrb[0].mxu0
        %v4123 = vadd.f32 0.0, %v4122
        %v4124 = vpop.f32.mrb[0].mxu0
        %v4125 = vadd.f32 0.0, %v4124
        %4126 = vmatprep.mubr.f32.mxu0 0.0
        %4127 = vmatmul.mubr.f32.gmra.mrb[0].mxu0 %v3873
        %v4128 = vpop.f32.mrb[0].mxu0
        %v4129 = vadd.f32 0.0, %v4128
        %v4130 = vpop.f32.mrb[0].mxu0
        %v4131 = vadd.f32 0.0, %v4130
        %4132 = vmatprep.mubr.f32.mxu0 0.0
        %4133 = vmatmul.mubr.f32.gmra.mrb[0].mxu0 %v3874
        %v4134 = vpop.f32.mrb[0].mxu0
        %v4135 = vadd.f32 0.0, %v4134
        %v4136 = vpop.f32.mrb[0].mxu0
        %v4137 = vadd.f32 0.0, %v4136
        %4138 = vmatprep.mubr.f32.mxu0 0.0
        %4139 = vmatmul.mubr.f32.gmra.mrb[0].mxu0 %v3875
        %v4140 = vpop.f32.mrb[0].mxu0
        %v4141 = vadd.f32 0.0, %v4140
        %v4142 = vpop.f32.mrb[0].mxu0
        %v4143 = vadd.f32 0.0, %v4142
        %4144 = vmatprep.mubr.f32.mxu0 0.0
        %4145 = vmatmul.mubr.f32.gmra.mrb[0].mxu0 %v3876
        %v4146 = vpop.f32.mrb[0].mxu0
        %v4147 = vadd.f32 0.0, %v4146
        %v4148 = vpop.f32.mrb[0].mxu0
        %v4149 = vadd.f32 0.0, %v4148
        %4150 = vmatprep.mubr.f32.mxu0 0.0
        %4151 = vmatmul.mubr.f32.gmra.mrb[0].mxu0 %v3877
        %v4152 = vpop.f32.mrb[0].mxu0
        %v4153 = vadd.f32 0.0, %v4152
        %v4154 = vpop.f32.mrb[0].mxu0
        %v4155 = vadd.f32 0.0, %v4154
        %4156 = vmatprep.mubr.f32.mxu0 0.0
        %4157 = vmatmul.mubr.f32.gmra.mrb[0].mxu0 %v3878
        %v4158 = vpop.f32.mrb[0].mxu0
        %v4159 = vadd.f32 0.0, %v4158
        %v4160 = vpop.f32.mrb[0].mxu0
        %v4161 = vadd.f32 0.0, %v4160
        %4162 = vmatprep.mubr.f32.mxu0 0.0
        %4163 = vmatmul.mubr.f32.gmra.mrb[0].mxu0 %v3879
        %v4164 = vpop.f32.mrb[0].mxu0
        %v4165 = vadd.f32 0.0, %v4164
        %v4166 = vpop.f32.mrb[0].mxu0
        %v4167 = vadd.f32 0.0, %v4166
        %4168 = vmatprep.mubr.f32.mxu0 0.0
        %4169 = vmatmul.mubr.f32.gmra.mrb[0].mxu0 %v3880
        %v4170 = vpop.f32.mrb[0].mxu0
        %v4171 = vadd.f32 0.0, %v4170
        %v4172 = vpop.f32.mrb[0].mxu0
        %v4173 = vadd.f32 0.0, %v4172
        %4174 = vmatprep.mubr.f32.mxu0 0.0
        %4175 = vmatmul.mubr.f32.gmra.mrb[0].mxu0 %v3881
        %v4176 = vpop.f32.mrb[0].mxu0
        %v4177 = vadd.f32 0.0, %v4176
        %v4178 = vpop.f32.mrb[0].mxu0
        %v4179 = vadd.f32 0.0, %v4178
        %4180 = vmatprep.mubr.f32.mxu0 0.0
        %4181 = vmatmul.mubr.f32.gmra.mrb[0].mxu0 %v3882
        %v4182 = vpop.f32.mrb[0].mxu0
        %v4183 = vadd.f32 0.0, %v4182
        %v4184 = vpop.f32.mrb[0].mxu0
        %v4185 = vadd.f32 0.0, %v4184
        %4186 = vmatprep.mubr.f32.mxu0 0.0
        %4187 = vmatmul.mubr.f32.gmra.mrb[0].mxu0 %v3883
        %v4188 = vpop.f32.mrb[0].mxu0
        %v4189 = vadd.f32 0.0, %v4188
        %v4190 = vpop.f32.mrb[0].mxu0
        %v4191 = vadd.f32 0.0, %v4190
        %4192 = vmatprep.mubr.f32.mxu0 0.0
        %4193 = vmatmul.mubr.f32.gmra.mrb[0].mxu0 %v3884
        %v4194 = vpop.f32.mrb[0].mxu0
        %v4195 = vadd.f32 0.0, %v4194
        %v4196 = vpop.f32.mrb[0].mxu0
        %v4197 = vadd.f32 0.0, %v4196
        %4198 = vmatprep.mubr.f32.mxu0 0.0
        %4199 = vmatmul.mubr.f32.gmra.mrb[0].mxu0 %v3885
        %v4200 = vpop.f32.mrb[0].mxu0
        %v4201 = vadd.f32 0.0, %v4200
        %v4202 = vpop.f32.mrb[0].mxu0
        %v4203 = vadd.f32 0.0, %v4202
        %4204 = vmatprep.mubr.f32.mxu0 0.0
        %4205 = vmatmul.mubr.f32.gmra.mrb[0].mxu0 %v3886
        %v4206 = vpop.f32.mrb[0].mxu0
        %v4207 = vadd.f32 0.0, %v4206
        %v4208 = vpop.f32.mrb[0].mxu0
        %v4209 = vadd.f32 0.0, %v4208
        %4210 = vmatprep.mubr.f32.mxu0 0.0
        %4211 = vmatmul.mubr.f32.gmra.mrb[0].mxu0 %v3887
        %v4212 = vpop.f32.mrb[0].mxu0
        %v4213 = vadd.f32 0.0, %v4212
        %v4214 = vpop.f32.mrb[0].mxu0
        %v4215 = vadd.f32 0.0, %v4214
        %4216 = vmatprep.mubr.f32.mxu0 0.0
        %4217 = vmatmul.mubr.f32.gmra.mrb[0].mxu0 %v3888
        %v4218 = vpop.f32.mrb[0].mxu0
        %v4219 = vadd.f32 0.0, %v4218
        %v4220 = vpop.f32.mrb[0].mxu0
        %v4221 = vadd.f32 0.0, %v4220
        %4222 = vmatprep.mubr.f32.mxu0 0.0
        %4223 = vmatmul.mubr.f32.gmra.mrb[0].mxu0 %v3889
        %v4224 = vpop.f32.mrb[0].mxu0
        %v4225 = vadd.f32 0.0, %v4224
        %v4226 = vpop.f32.mrb[0].mxu0
        %v4227 = vadd.f32 0.0, %v4226
        %4228 = vmatprep.mubr.f32.mxu0 0.0
        %4229 = vmatmul.mubr.f32.gmra.mrb[0].mxu0 %v3890
        %v4230 = vpop.f32.mrb[0].mxu0
        %v4231 = vadd.f32 0.0, %v4230
        %v4232 = vpop.f32.mrb[0].mxu0
        %v4233 = vadd.f32 0.0, %v4232
        %4234 = vmatprep.mubr.f32.mxu0 0.0
        %4235 = vmatmul.mubr.f32.gmra.mrb[0].mxu0 %v3891
        %v4236 = vpop.f32.mrb[0].mxu0
        %v4237 = vadd.f32 0.0, %v4236
        %v4238 = vpop.f32.mrb[0].mxu0
        %v4239 = vadd.f32 0.0, %v4238
        %4240 = vmatprep.mubr.f32.mxu0 0.0
        %4241 = vmatmul.mubr.f32.gmra.mrb[0].mxu0 %v3892
        %v4242 = vpop.f32.mrb[0].mxu0
        %v4243 = vadd.f32 0.0, %v4242
        %v4244 = vpop.f32.mrb[0].mxu0
        %v4245 = vadd.f32 0.0, %v4244
        %4246 = vmatprep.mubr.f32.mxu0 0.0
        %4247 = vmatmul.mubr.f32.gmra.mrb[0].mxu0 %v3893
        %v4248 = vpop.f32.mrb[0].mxu0
        %v4249 = vadd.f32 0.0, %v4248
        %v4250 = vpop.f32.mrb[0].mxu0
        %v4251 = vadd.f32 0.0, %v4250
        %4252 = vmatprep.mubr.f32.mxu0 0.0
        %4253 = vmatmul.mubr.f32.gmra.mrb[0].mxu0 %v3894
        %v4254 = vpop.f32.mrb[0].mxu0
        %v4255 = vadd.f32 0.0, %v4254
        %v4256 = vpop.f32.mrb[0].mxu0
        %v4257 = vadd.f32 0.0, %v4256
        %4258 = vmatprep.mubr.f32.mxu0 0.0
        %4259 = vmatmul.mubr.f32.gmra.mrb[0].mxu0 %v3895
        %v4260 = vpop.f32.mrb[0].mxu0
        %v4261 = vadd.f32 0.0, %v4260
        %v4262 = vpop.f32.mrb[0].mxu0
        %v4263 = vadd.f32 0.0, %v4262
        %4264 = vmatprep.mubr.f32.mxu0 0.0
        %4265 = vmatmul.mubr.f32.gmra.mrb[0].mxu0 %v3896
        %v4266 = vpop.f32.mrb[0].mxu0
        %v4267 = vadd.f32 0.0, %v4266
        %v4268 = vpop.f32.mrb[0].mxu0
        %v4269 = vadd.f32 0.0, %v4268
        %4270 = vmatprep.mubr.f32.mxu0 0.0
        %4271 = vmatmul.mubr.f32.gmra.mrb[0].mxu0 %v3897
        %v4272 = vpop.f32.mrb[0].mxu0
        %v4273 = vadd.f32 0.0, %v4272
        %v4274 = vpop.f32.mrb[0].mxu0
        %v4275 = vadd.f32 0.0, %v4274
        %4276 = vmatprep.mubr.f32.mxu0 0.0
        %4277 = vmatmul.mubr.f32.gmra.mrb[0].mxu0 %v3898
        %v4278 = vpop.f32.mrb[0].mxu0
        %v4279 = vadd.f32 0.0, %v4278
        %v4280 = vpop.f32.mrb[0].mxu0
        %v4281 = vadd.f32 0.0, %v4280
        %4282 = vmatprep.mubr.f32.mxu0 0.0
        %4283 = vmatmul.mubr.f32.gmra.mrb[0].mxu0 %v3899
        %v4284 = vpop.f32.mrb[0].mxu0
        %v4285 = vadd.f32 0.0, %v4284
        %v4286 = vpop.f32.mrb[0].mxu0
        %v4287 = vadd.f32 0.0, %v4286
        %4288 = vmatprep.mubr.f32.mxu0 0.0
        %4289 = vmatmul.mubr.f32.gmra.mrb[0].mxu0 %v3900
        %v4290 = vpop.f32.mrb[0].mxu0
        %v4291 = vadd.f32 0.0, %v4290
        %v4292 = vpop.f32.mrb[0].mxu0
        %v4293 = vadd.f32 0.0, %v4292
        %4294 = vmatprep.mubr.f32.mxu0 0.0
        %4295 = vmatmul.mubr.f32.gmra.mrb[0].mxu0 %v3901
        %v4296 = vpop.f32.mrb[0].mxu0
        %v4297 = vadd.f32 0.0, %v4296
        %v4298 = vpop.f32.mrb[0].mxu0
        %v4299 = vadd.f32 0.0, %v4298
        %4300 = vmatprep.mubr.f32.mxu0 0.0
        %4301 = vmatmul.mubr.f32.gmra.mrb[0].mxu0 %v3902
        %v4302 = vpop.f32.mrb[0].mxu0
        %v4303 = vadd.f32 0.0, %v4302
        %v4304 = vpop.f32.mrb[0].mxu0
        %v4305 = vadd.f32 0.0, %v4304
        %4306 = vmatprep.mubr.f32.mxu0 0.0
        %4307 = vmatmul.mubr.f32.gmra.mrb[0].mxu0 %v3903
        %v4308 = vpop.f32.mrb[0].mxu0
        %v4309 = vadd.f32 0.0, %v4308
        %v4310 = vpop.f32.mrb[0].mxu0
        %v4311 = vadd.f32 0.0, %v4310
        %4312 = vmatprep.mubr.f32.mxu0 0.0
        %4313 = vmatmul.mubr.f32.gmra.mrb[0].mxu0 %v3904
        %v4314 = vpop.f32.mrb[0].mxu0
        %v4315 = vadd.f32 0.0, %v4314
        %v4316 = vpop.f32.mrb[0].mxu0
        %v4317 = vadd.f32 0.0, %v4316
        %4318 = vmatprep.mubr.f32.mxu0 0.0
        %4319 = vmatmul.mubr.f32.gmra.mrb[0].mxu0 %v3905
        %v4320 = vpop.f32.mrb[0].mxu0
        %v4321 = vadd.f32 0.0, %v4320
        %v4322 = vpop.f32.mrb[0].mxu0
        %v4323 = vadd.f32 0.0, %v4322
        %4324 = vmatprep.mubr.f32.mxu0 0.0
        %4325 = vmatmul.mubr.f32.gmra.mrb[0].mxu0 %v3906
        %v4326 = vpop.f32.mrb[0].mxu0
        %v4327 = vadd.f32 0.0, %v4326
        %v4328 = vpop.f32.mrb[0].mxu0
        %v4329 = vadd.f32 0.0, %v4328
        %4330 = vmatprep.mubr.f32.mxu0 0.0
        %4331 = vmatmul.mubr.f32.gmra.mrb[0].mxu0 %v3907
        %v4332 = vpop.f32.mrb[0].mxu0
        %v4333 = vadd.f32 0.0, %v4332
        %v4334 = vpop.f32.mrb[0].mxu0
        %v4335 = vadd.f32 0.0, %v4334
        %4336 = vmatprep.mubr.f32.mxu0 0.0
        %4337 = vmatmul.mubr.f32.gmra.mrb[0].mxu0 %v3908
        %v4338 = vpop.f32.mrb[0].mxu0
        %v4339 = vadd.f32 0.0, %v4338
        %v4340 = vpop.f32.mrb[0].mxu0
        %v4341 = vadd.f32 0.0, %v4340
        %4342 = vmatprep.mubr.f32.mxu0 0.0
        %4343 = vmatmul.mubr.f32.gmra.mrb[0].mxu0 %v3909
        %v4344 = vpop.f32.mrb[0].mxu0
        %v4345 = vadd.f32 0.0, %v4344
        %v4346 = vpop.f32.mrb[0].mxu0
        %v4347 = vadd.f32 0.0, %v4346
        %4348 = vmatprep.mubr.f32.mxu0 0.0
        %4349 = vmatmul.mubr.f32.gmra.mrb[0].mxu0 %v3910
        %v4350 = vpop.f32.mrb[0].mxu0
        %v4351 = vadd.f32 0.0, %v4350
        %v4352 = vpop.f32.mrb[0].mxu0
        %v4353 = vadd.f32 0.0, %v4352
        %4354 = vmatprep.mubr.f32.mxu0 0.0
        %4355 = vmatmul.mubr.f32.gmra.mrb[0].mxu0 %v3911
        %v4356 = vpop.f32.mrb[0].mxu0
        %v4357 = vadd.f32 0.0, %v4356
        %v4358 = vpop.f32.mrb[0].mxu0
        %v4359 = vadd.f32 0.0, %v4358
        %4360 = vmatprep.mubr.f32.mxu0 0.0
        %4361 = vmatmul.mubr.f32.gmra.mrb[0].mxu0 %v3912
        %v4362 = vpop.f32.mrb[0].mxu0
        %v4363 = vadd.f32 0.0, %v4362
        %v4364 = vpop.f32.mrb[0].mxu0
        %v4365 = vadd.f32 0.0, %v4364
        %4366 = vmatprep.mubr.f32.mxu0 0.0
        %4367 = vmatmul.mubr.f32.gmra.mrb[0].mxu0 %v3913
        %v4368 = vpop.f32.mrb[0].mxu0
        %v4369 = vadd.f32 0.0, %v4368
        %v4370 = vpop.f32.mrb[0].mxu0
        %v4371 = vadd.f32 0.0, %v4370
        %4372 = vmatprep.mubr.f32.mxu0 0.0
        %4373 = vmatmul.mubr.f32.gmra.mrb[0].mxu0 %v3914
        %v4374 = vpop.f32.mrb[0].mxu0
        %v4375 = vadd.f32 0.0, %v4374
        %v4376 = vpop.f32.mrb[0].mxu0
        %v4377 = vadd.f32 0.0, %v4376
        %4378 = vmatprep.mubr.f32.mxu0 0.0
        %4379 = vmatmul.mubr.f32.gmra.mrb[0].mxu0 %v3915
        %v4380 = vpop.f32.mrb[0].mxu0
        %v4381 = vadd.f32 0.0, %v4380
        %v4382 = vpop.f32.mrb[0].mxu0
        %v4383 = vadd.f32 0.0, %v4382
        %4384 = vmatprep.mubr.f32.mxu0 0.0
        %4385 = vmatmul.mubr.f32.gmra.mrb[0].mxu0 %v3916
        %v4386 = vpop.f32.mrb[0].mxu0
        %v4387 = vadd.f32 0.0, %v4386
        %v4388 = vpop.f32.mrb[0].mxu0
        %v4389 = vadd.f32 0.0, %v4388
        %4390 = vmatprep.mubr.f32.mxu0 0.0
        %4391 = vmatmul.mubr.f32.gmra.mrb[0].mxu0 %v3917
        %v4392 = vpop.f32.mrb[0].mxu0
        %v4393 = vadd.f32 0.0, %v4392
        %v4394 = vpop.f32.mrb[0].mxu0
        %v4395 = vadd.f32 0.0, %v4394
        %4396 = vmatprep.mubr.f32.mxu0 0.0
        %4397 = vmatmul.mubr.f32.gmra.mrb[0].mxu0 %v3918
        %v4398 = vpop.f32.mrb[0].mxu0
        %v4399 = vadd.f32 0.0, %v4398
        %v4400 = vpop.f32.mrb[0].mxu0
        %v4401 = vadd.f32 0.0, %v4400
        %4402 = vmatprep.mubr.f32.mxu0 0.0
        %4403 = vmatmul.mubr.f32.gmra.mrb[0].mxu0 %v3919
        %v4404 = vpop.f32.mrb[0].mxu0
        %v4405 = vadd.f32 0.0, %v4404
        %v4406 = vpop.f32.mrb[0].mxu0
        %v4407 = vadd.f32 0.0, %v4406
        %4408 = vmatprep.mubr.f32.mxu0 0.0
        %4409 = vmatmul.mubr.f32.gmra.mrb[0].mxu0 %v3920
        %v4410 = vpop.f32.mrb[0].mxu0
        %v4411 = vadd.f32 0.0, %v4410
        %v4412 = vpop.f32.mrb[0].mxu0
        %v4413 = vadd.f32 0.0, %v4412
        %4414 = vmatprep.mubr.f32.mxu0 0.0
        %4415 = vmatmul.mubr.f32.gmra.mrb[0].mxu0 %v3921
        %v4416 = vpop.f32.mrb[0].mxu0
        %v4417 = vadd.f32 0.0, %v4416
        %v4418 = vpop.f32.mrb[0].mxu0
        %v4419 = vadd.f32 0.0, %v4418
        %4420 = vmatprep.mubr.f32.mxu0 0.0
        %4421 = vmatmul.mubr.f32.gmra.mrb[0].mxu0 %v3922
        %v4422 = vpop.f32.mrb[0].mxu0
        %v4423 = vadd.f32 0.0, %v4422
        %v4424 = vpop.f32.mrb[0].mxu0
        %v4425 = vadd.f32 0.0, %v4424
        %4426 = vmatprep.mubr.f32.mxu0 0.0
        %4427 = vmatmul.mubr.f32.gmra.mrb[0].mxu0 %v3923
        %v4428 = vpop.f32.mrb[0].mxu0
        %v4429 = vadd.f32 0.0, %v4428
        %v4430 = vpop.f32.mrb[0].mxu0
        %v4431 = vadd.f32 0.0, %v4430
        %4432 = vdwg.mxu0
        %4433 = vmatprep.subr.mxu0 0.0
        %4434 = vmatpush1.msra.mxu0 %v3926
        %4435 = vmatprep.subr.mxu0 0.0
        %4436 = vmatpush1.msra.mxu0 %v3929
        %4437 = vmatprep.subr.mxu0 0.0
        %4438 = vmatpush1.msra.mxu0 %v3932
        %4439 = vmatprep.subr.mxu0 0.0
        %4440 = vmatpush1.msra.mxu0 %v3935
        %4441 = vmatprep.subr.mxu0 0.0
        %4442 = vmatpush1.msra.mxu0 %v3938
        %4443 = vmatprep.subr.mxu0 0.0
        %4444 = vmatpush1.msra.mxu0 %v3941
        %4445 = vmatprep.subr.mxu0 0.0
        %4446 = vmatpush1.msra.mxu0 %v3944
        %4447 = vmatprep.subr.mxu0 0.0
        %4448 = vmatpush1.msra.mxu0 %v3947
        %4449 = vmatprep.subr.mxu0 0.0
        %4450 = vmatpush1.msra.mxu0 %v3950
        %4451 = vmatprep.subr.mxu0 0.0
        %4452 = vmatpush1.msra.mxu0 %v3953
        %4453 = vmatprep.subr.mxu0 0.0
        %4454 = vmatpush1.msra.mxu0 %v3956
        %4455 = vmatprep.subr.mxu0 0.0
        %4456 = vmatpush1.msra.mxu0 %v3959
        %4457 = vmatprep.subr.mxu0 0.0
        %4458 = vmatpush1.msra.mxu0 %v3962
        %4459 = vmatprep.subr.mxu0 0.0
        %4460 = vmatpush1.msra.mxu0 %v3965
        %4461 = vmatprep.subr.mxu0 0.0
        %4462 = vmatpush1.msra.mxu0 %v3968
        %4463 = vmatprep.subr.mxu0 0.0
        %4464 = vmatpush1.msra.mxu0 %v3971
        %4465 = vmatprep.subr.mxu0 0.0
        %4466 = vmatpush1.msra.mxu0 0.0
        %4467 = vmatprep.subr.mxu0 0.0
        %4468 = vmatpush1.msra.mxu0 0.0
        %4469 = vmatprep.subr.mxu0 0.0
        %4470 = vmatpush1.msra.mxu0 0.0
        %4471 = vmatprep.subr.mxu0 0.0
        %4472 = vmatpush1.msra.mxu0 0.0
        %4473 = vmatprep.subr.mxu0 0.0
        %4474 = vmatpush1.msra.mxu0 0.0
        %4475 = vmatprep.subr.mxu0 0.0
        %4476 = vmatpush1.msra.mxu0 0.0
        %4477 = vmatprep.subr.mxu0 0.0
        %4478 = vmatpush1.msra.mxu0 0.0
        %4479 = vmatprep.subr.mxu0 0.0
        %4480 = vmatpush1.msra.mxu0 0.0
        %4481 = vmatprep.subr.mxu0 0.0
        %4482 = vmatpush1.msra.mxu0 0.0
        %4483 = vmatprep.subr.mxu0 0.0
        %4484 = vmatpush1.msra.mxu0 0.0
        %4485 = vmatprep.subr.mxu0 0.0
        %4486 = vmatpush1.msra.mxu0 0.0
        %4487 = vmatprep.subr.mxu0 0.0
        %4488 = vmatpush1.msra.mxu0 0.0
        %4489 = vmatprep.subr.mxu0 0.0
        %4490 = vmatpush1.msra.mxu0 0.0
        %4491 = vmatprep.subr.mxu0 0.0
        %4492 = vmatpush1.msra.mxu0 0.0
        %4493 = vmatprep.subr.mxu0 0.0
        %4494 = vmatpush1.msra.mxu0 0.0
        %4495 = vmatprep.subr.mxu0 0.0
        %4496 = vmatpush1.msra.mxu0 0.0
        %4497 = vmatprep.mubr.f32.mxu0 0.0
        %4498 = vmatmul.mubr.f32.gmra.mrb[0].mxu0 %v3858
        %v4499 = vpop.f32.mrb[0].mxu0
        %v4500 = vadd.f32 0.0, %v4499
        %v4501 = vpop.f32.mrb[0].mxu0
        %4502 = vmatprep.mubr.f32.mxu0 0.0
        %4503 = vmatmul.mubr.f32.gmra.mrb[0].mxu0 %v3859
        %v4504 = vpop.f32.mrb[0].mxu0
        %v4505 = vadd.f32 0.0, %v4504
        %v4506 = vpop.f32.mrb[0].mxu0
        %4507 = vmatprep.mubr.f32.mxu0 0.0
        %4508 = vmatmul.mubr.f32.gmra.mrb[0].mxu0 %v3860
        %v4509 = vpop.f32.mrb[0].mxu0
        %v4510 = vadd.f32 0.0, %v4509
        %v4511 = vpop.f32.mrb[0].mxu0
        %4512 = vmatprep.mubr.f32.mxu0 0.0
        %4513 = vmatmul.mubr.f32.gmra.mrb[0].mxu0 %v3861
        %v4514 = vpop.f32.mrb[0].mxu0
        %v4515 = vadd.f32 0.0, %v4514
        %v4516 = vpop.f32.mrb[0].mxu0
        %4517 = vmatprep.mubr.f32.mxu0 0.0
        %4518 = vmatmul.mubr.f32.gmra.mrb[0].mxu0 %v3862
        %v4519 = vpop.f32.mrb[0].mxu0
        %v4520 = vadd.f32 0.0, %v4519
        %v4521 = vpop.f32.mrb[0].mxu0
        %4522 = vmatprep.mubr.f32.mxu0 0.0
        %4523 = vmatmul.mubr.f32.gmra.mrb[0].mxu0 %v3863
        %v4524 = vpop.f32.mrb[0].mxu0
        %v4525 = vadd.f32 0.0, %v4524
        %v4526 = vpop.f32.mrb[0].mxu0
        %4527 = vmatprep.mubr.f32.mxu0 0.0
        %4528 = vmatmul.mubr.f32.gmra.mrb[0].mxu0 %v3864
        %v4529 = vpop.f32.mrb[0].mxu0
        %v4530 = vadd.f32 0.0, %v4529
        %v4531 = vpop.f32.mrb[0].mxu0
        %4532 = vmatprep.mubr.f32.mxu0 0.0
        %4533 = vmatmul.mubr.f32.gmra.mrb[0].mxu0 %v3865
        %v4534 = vpop.f32.mrb[0].mxu0
        %v4535 = vadd.f32 0.0, %v4534
        %v4536 = vpop.f32.mrb[0].mxu0
        %4537 = vmatprep.mubr.f32.mxu0 0.0
        %4538 = vmatmul.mubr.f32.gmra.mrb[0].mxu0 %v3866
        %v4539 = vpop.f32.mrb[0].mxu0
        %v4540 = vadd.f32 0.0, %v4539
        %v4541 = vpop.f32.mrb[0].mxu0
        %4542 = vmatprep.mubr.f32.mxu0 0.0
        %4543 = vmatmul.mubr.f32.gmra.mrb[0].mxu0 %v3867
        %v4544 = vpop.f32.mrb[0].mxu0
        %v4545 = vadd.f32 0.0, %v4544
        %v4546 = vpop.f32.mrb[0].mxu0
        %4547 = vmatprep.mubr.f32.mxu0 0.0
        %4548 = vmatmul.mubr.f32.gmra.mrb[0].mxu0 %v3868
        %v4549 = vpop.f32.mrb[0].mxu0
        %v4550 = vadd.f32 0.0, %v4549
        %v4551 = vpop.f32.mrb[0].mxu0
        %4552 = vmatprep.mubr.f32.mxu0 0.0
        %4553 = vmatmul.mubr.f32.gmra.mrb[0].mxu0 %v3869
        %v4554 = vpop.f32.mrb[0].mxu0
        %v4555 = vadd.f32 0.0, %v4554
        %v4556 = vpop.f32.mrb[0].mxu0
        %4557 = vmatprep.mubr.f32.mxu0 0.0
        %4558 = vmatmul.mubr.f32.gmra.mrb[0].mxu0 %v3870
        %v4559 = vpop.f32.mrb[0].mxu0
        %v4560 = vadd.f32 0.0, %v4559
        %v4561 = vpop.f32.mrb[0].mxu0
        %4562 = vmatprep.mubr.f32.mxu0 0.0
        %4563 = vmatmul.mubr.f32.gmra.mrb[0].mxu0 %v3871
        %v4564 = vpop.f32.mrb[0].mxu0
        %v4565 = vadd.f32 0.0, %v4564
        %v4566 = vpop.f32.mrb[0].mxu0
        %4567 = vmatprep.mubr.f32.mxu0 0.0
        %4568 = vmatmul.mubr.f32.gmra.mrb[0].mxu0 %v3872
        %v4569 = vpop.f32.mrb[0].mxu0
        %v4570 = vadd.f32 0.0, %v4569
        %v4571 = vpop.f32.mrb[0].mxu0
        %4572 = vmatprep.mubr.f32.mxu0 0.0
        %4573 = vmatmul.mubr.f32.gmra.mrb[0].mxu0 %v3873
        %v4574 = vpop.f32.mrb[0].mxu0
        %v4575 = vadd.f32 0.0, %v4574
        %v4576 = vpop.f32.mrb[0].mxu0
        %4577 = vmatprep.mubr.f32.mxu0 0.0
        %4578 = vmatmul.mubr.f32.gmra.mrb[0].mxu0 %v3874
        %v4579 = vpop.f32.mrb[0].mxu0
        %v4580 = vadd.f32 0.0, %v4579
        %v4581 = vpop.f32.mrb[0].mxu0
        %4582 = vmatprep.mubr.f32.mxu0 0.0
        %4583 = vmatmul.mubr.f32.gmra.mrb[0].mxu0 %v3875
        %v4584 = vpop.f32.mrb[0].mxu0
        %v4585 = vadd.f32 0.0, %v4584
        %v4586 = vpop.f32.mrb[0].mxu0
        %4587 = vmatprep.mubr.f32.mxu0 0.0
        %4588 = vmatmul.mubr.f32.gmra.mrb[0].mxu0 %v3876
        %v4589 = vpop.f32.mrb[0].mxu0
        %v4590 = vadd.f32 0.0, %v4589
        %v4591 = vpop.f32.mrb[0].mxu0
        %4592 = vmatprep.mubr.f32.mxu0 0.0
        %4593 = vmatmul.mubr.f32.gmra.mrb[0].mxu0 %v3877
        %v4594 = vpop.f32.mrb[0].mxu0
        %v4595 = vadd.f32 0.0, %v4594
        %v4596 = vpop.f32.mrb[0].mxu0
        %4597 = vmatprep.mubr.f32.mxu0 0.0
        %4598 = vmatmul.mubr.f32.gmra.mrb[0].mxu0 %v3878
        %v4599 = vpop.f32.mrb[0].mxu0
        %v4600 = vadd.f32 0.0, %v4599
        %v4601 = vpop.f32.mrb[0].mxu0
        %4602 = vmatprep.mubr.f32.mxu0 0.0
        %4603 = vmatmul.mubr.f32.gmra.mrb[0].mxu0 %v3879
        %v4604 = vpop.f32.mrb[0].mxu0
        %v4605 = vadd.f32 0.0, %v4604
        %v4606 = vpop.f32.mrb[0].mxu0
        %4607 = vmatprep.mubr.f32.mxu0 0.0
        %4608 = vmatmul.mubr.f32.gmra.mrb[0].mxu0 %v3880
        %v4609 = vpop.f32.mrb[0].mxu0
        %v4610 = vadd.f32 0.0, %v4609
        %v4611 = vpop.f32.mrb[0].mxu0
        %4612 = vmatprep.mubr.f32.mxu0 0.0
        %4613 = vmatmul.mubr.f32.gmra.mrb[0].mxu0 %v3881
        %v4614 = vpop.f32.mrb[0].mxu0
        %v4615 = vadd.f32 0.0, %v4614
        %v4616 = vpop.f32.mrb[0].mxu0
        %4617 = vmatprep.mubr.f32.mxu0 0.0
        %4618 = vmatmul.mubr.f32.gmra.mrb[0].mxu0 %v3882
        %v4619 = vpop.f32.mrb[0].mxu0
        %v4620 = vadd.f32 0.0, %v4619
        %v4621 = vpop.f32.mrb[0].mxu0
        %4622 = vmatprep.mubr.f32.mxu0 0.0
        %4623 = vmatmul.mubr.f32.gmra.mrb[0].mxu0 %v3883
        %v4624 = vpop.f32.mrb[0].mxu0
        %v4625 = vadd.f32 0.0, %v4624
        %v4626 = vpop.f32.mrb[0].mxu0
        %4627 = vmatprep.mubr.f32.mxu0 0.0
        %4628 = vmatmul.mubr.f32.gmra.mrb[0].mxu0 %v3884
        %v4629 = vpop.f32.mrb[0].mxu0
        %v4630 = vadd.f32 0.0, %v4629
        %v4631 = vpop.f32.mrb[0].mxu0
        %4632 = vmatprep.mubr.f32.mxu0 0.0
        %4633 = vmatmul.mubr.f32.gmra.mrb[0].mxu0 %v3885
        %v4634 = vpop.f32.mrb[0].mxu0
        %v4635 = vadd.f32 0.0, %v4634
        %v4636 = vpop.f32.mrb[0].mxu0
        %4637 = vmatprep.mubr.f32.mxu0 0.0
        %4638 = vmatmul.mubr.f32.gmra.mrb[0].mxu0 %v3886
        %v4639 = vpop.f32.mrb[0].mxu0
        %v4640 = vadd.f32 0.0, %v4639
        %v4641 = vpop.f32.mrb[0].mxu0
        %4642 = vmatprep.mubr.f32.mxu0 0.0
        %4643 = vmatmul.mubr.f32.gmra.mrb[0].mxu0 %v3887
        %v4644 = vpop.f32.mrb[0].mxu0
        %v4645 = vadd.f32 0.0, %v4644
        %v4646 = vpop.f32.mrb[0].mxu0
        %4647 = vmatprep.mubr.f32.mxu0 0.0
        %4648 = vmatmul.mubr.f32.gmra.mrb[0].mxu0 %v3888
        %v4649 = vpop.f32.mrb[0].mxu0
        %v4650 = vadd.f32 0.0, %v4649
        %v4651 = vpop.f32.mrb[0].mxu0
        %4652 = vmatprep.mubr.f32.mxu0 0.0
        %4653 = vmatmul.mubr.f32.gmra.mrb[0].mxu0 %v3889
        %v4654 = vpop.f32.mrb[0].mxu0
        %v4655 = vadd.f32 0.0, %v4654
        %v4656 = vpop.f32.mrb[0].mxu0
        %4657 = vmatprep.mubr.f32.mxu0 0.0
        %4658 = vmatmul.mubr.f32.gmra.mrb[0].mxu0 %v3890
        %v4659 = vpop.f32.mrb[0].mxu0
        %v4660 = vadd.f32 0.0, %v4659
        %v4661 = vpop.f32.mrb[0].mxu0
        %4662 = vmatprep.mubr.f32.mxu0 0.0
        %4663 = vmatmul.mubr.f32.gmra.mrb[0].mxu0 %v3891
        %v4664 = vpop.f32.mrb[0].mxu0
        %v4665 = vadd.f32 0.0, %v4664
        %v4666 = vpop.f32.mrb[0].mxu0
        %4667 = vmatprep.mubr.f32.mxu0 0.0
        %4668 = vmatmul.mubr.f32.gmra.mrb[0].mxu0 %v3892
        %v4669 = vpop.f32.mrb[0].mxu0
        %v4670 = vadd.f32 0.0, %v4669
        %v4671 = vpop.f32.mrb[0].mxu0
        %4672 = vmatprep.mubr.f32.mxu0 0.0
        %4673 = vmatmul.mubr.f32.gmra.mrb[0].mxu0 %v3893
        %v4674 = vpop.f32.mrb[0].mxu0
        %v4675 = vadd.f32 0.0, %v4674
        %v4676 = vpop.f32.mrb[0].mxu0
        %4677 = vmatprep.mubr.f32.mxu0 0.0
        %4678 = vmatmul.mubr.f32.gmra.mrb[0].mxu0 %v3894
        %v4679 = vpop.f32.mrb[0].mxu0
        %v4680 = vadd.f32 0.0, %v4679
        %v4681 = vpop.f32.mrb[0].mxu0
        %4682 = vmatprep.mubr.f32.mxu0 0.0
        %4683 = vmatmul.mubr.f32.gmra.mrb[0].mxu0 %v3895
        %v4684 = vpop.f32.mrb[0].mxu0
        %v4685 = vadd.f32 0.0, %v4684
        %v4686 = vpop.f32.mrb[0].mxu0
        %4687 = vmatprep.mubr.f32.mxu0 0.0
        %4688 = vmatmul.mubr.f32.gmra.mrb[0].mxu0 %v3896
        %v4689 = vpop.f32.mrb[0].mxu0
        %v4690 = vadd.f32 0.0, %v4689
        %v4691 = vpop.f32.mrb[0].mxu0
        %4692 = vmatprep.mubr.f32.mxu0 0.0
        %4693 = vmatmul.mubr.f32.gmra.mrb[0].mxu0 %v3897
        %v4694 = vpop.f32.mrb[0].mxu0
        %v4695 = vadd.f32 0.0, %v4694
        %v4696 = vpop.f32.mrb[0].mxu0
        %4697 = vmatprep.mubr.f32.mxu0 0.0
        %4698 = vmatmul.mubr.f32.gmra.mrb[0].mxu0 %v3898
        %v4699 = vpop.f32.mrb[0].mxu0
        %v4700 = vadd.f32 0.0, %v4699
        %v4701 = vpop.f32.mrb[0].mxu0
        %4702 = vmatprep.mubr.f32.mxu0 0.0
        %4703 = vmatmul.mubr.f32.gmra.mrb[0].mxu0 %v3899
        %v4704 = vpop.f32.mrb[0].mxu0
        %v4705 = vadd.f32 0.0, %v4704
        %v4706 = vpop.f32.mrb[0].mxu0
        %4707 = vmatprep.mubr.f32.mxu0 0.0
        %4708 = vmatmul.mubr.f32.gmra.mrb[0].mxu0 %v3900
        %v4709 = vpop.f32.mrb[0].mxu0
        %v4710 = vadd.f32 0.0, %v4709
        %v4711 = vpop.f32.mrb[0].mxu0
        %4712 = vmatprep.mubr.f32.mxu0 0.0
        %4713 = vmatmul.mubr.f32.gmra.mrb[0].mxu0 %v3901
        %v4714 = vpop.f32.mrb[0].mxu0
        %v4715 = vadd.f32 0.0, %v4714
        %v4716 = vpop.f32.mrb[0].mxu0
        %4717 = vmatprep.mubr.f32.mxu0 0.0
        %4718 = vmatmul.mubr.f32.gmra.mrb[0].mxu0 %v3902
        %v4719 = vpop.f32.mrb[0].mxu0
        %v4720 = vadd.f32 0.0, %v4719
        %v4721 = vpop.f32.mrb[0].mxu0
        %4722 = vmatprep.mubr.f32.mxu0 0.0
        %4723 = vmatmul.mubr.f32.gmra.mrb[0].mxu0 %v3903
        %v4724 = vpop.f32.mrb[0].mxu0
        %v4725 = vadd.f32 0.0, %v4724
        %v4726 = vpop.f32.mrb[0].mxu0
        %4727 = vmatprep.mubr.f32.mxu0 0.0
        %4728 = vmatmul.mubr.f32.gmra.mrb[0].mxu0 %v3904
        %v4729 = vpop.f32.mrb[0].mxu0
        %v4730 = vadd.f32 0.0, %v4729
        %v4731 = vpop.f32.mrb[0].mxu0
        %4732 = vmatprep.mubr.f32.mxu0 0.0
        %4733 = vmatmul.mubr.f32.gmra.mrb[0].mxu0 %v3905
        %v4734 = vpop.f32.mrb[0].mxu0
        %v4735 = vadd.f32 0.0, %v4734
        %v4736 = vpop.f32.mrb[0].mxu0
        %4737 = vmatprep.mubr.f32.mxu0 0.0
        %4738 = vmatmul.mubr.f32.gmra.mrb[0].mxu0 %v3906
        %v4739 = vpop.f32.mrb[0].mxu0
        %v4740 = vadd.f32 0.0, %v4739
        %v4741 = vpop.f32.mrb[0].mxu0
        %4742 = vmatprep.mubr.f32.mxu0 0.0
        %4743 = vmatmul.mubr.f32.gmra.mrb[0].mxu0 %v3907
        %v4744 = vpop.f32.mrb[0].mxu0
        %v4745 = vadd.f32 0.0, %v4744
        %v4746 = vpop.f32.mrb[0].mxu0
        %4747 = vmatprep.mubr.f32.mxu0 0.0
        %4748 = vmatmul.mubr.f32.gmra.mrb[0].mxu0 %v3908
        %v4749 = vpop.f32.mrb[0].mxu0
        %v4750 = vadd.f32 0.0, %v4749
        %v4751 = vpop.f32.mrb[0].mxu0
        %4752 = vmatprep.mubr.f32.mxu0 0.0
        %4753 = vmatmul.mubr.f32.gmra.mrb[0].mxu0 %v3909
        %v4754 = vpop.f32.mrb[0].mxu0
        %v4755 = vadd.f32 0.0, %v4754
        %v4756 = vpop.f32.mrb[0].mxu0
        %4757 = vmatprep.mubr.f32.mxu0 0.0
        %4758 = vmatmul.mubr.f32.gmra.mrb[0].mxu0 %v3910
        %v4759 = vpop.f32.mrb[0].mxu0
        %v4760 = vadd.f32 0.0, %v4759
        %v4761 = vpop.f32.mrb[0].mxu0
        %4762 = vmatprep.mubr.f32.mxu0 0.0
        %4763 = vmatmul.mubr.f32.gmra.mrb[0].mxu0 %v3911
        %v4764 = vpop.f32.mrb[0].mxu0
        %v4765 = vadd.f32 0.0, %v4764
        %v4766 = vpop.f32.mrb[0].mxu0
        %4767 = vmatprep.mubr.f32.mxu0 0.0
        %4768 = vmatmul.mubr.f32.gmra.mrb[0].mxu0 %v3912
        %v4769 = vpop.f32.mrb[0].mxu0
        %v4770 = vadd.f32 0.0, %v4769
        %v4771 = vpop.f32.mrb[0].mxu0
        %4772 = vmatprep.mubr.f32.mxu0 0.0
        %4773 = vmatmul.mubr.f32.gmra.mrb[0].mxu0 %v3913
        %v4774 = vpop.f32.mrb[0].mxu0
        %v4775 = vadd.f32 0.0, %v4774
        %v4776 = vpop.f32.mrb[0].mxu0
        %4777 = vmatprep.mubr.f32.mxu0 0.0
        %4778 = vmatmul.mubr.f32.gmra.mrb[0].mxu0 %v3914
        %v4779 = vpop.f32.mrb[0].mxu0
        %v4780 = vadd.f32 0.0, %v4779
        %v4781 = vpop.f32.mrb[0].mxu0
        %4782 = vmatprep.mubr.f32.mxu0 0.0
        %4783 = vmatmul.mubr.f32.gmra.mrb[0].mxu0 %v3915
        %v4784 = vpop.f32.mrb[0].mxu0
        %v4785 = vadd.f32 0.0, %v4784
        %v4786 = vpop.f32.mrb[0].mxu0
        %4787 = vmatprep.mubr.f32.mxu0 0.0
        %4788 = vmatmul.mubr.f32.gmra.mrb[0].mxu0 %v3916
        %v4789 = vpop.f32.mrb[0].mxu0
        %v4790 = vadd.f32 0.0, %v4789
        %v4791 = vpop.f32.mrb[0].mxu0
        %4792 = vmatprep.mubr.f32.mxu0 0.0
        %4793 = vmatmul.mubr.f32.gmra.mrb[0].mxu0 %v3917
        %v4794 = vpop.f32.mrb[0].mxu0
        %v4795 = vadd.f32 0.0, %v4794
        %v4796 = vpop.f32.mrb[0].mxu0
        %4797 = vmatprep.mubr.f32.mxu0 0.0
        %4798 = vmatmul.mubr.f32.gmra.mrb[0].mxu0 %v3918
        %v4799 = vpop.f32.mrb[0].mxu0
        %v4800 = vadd.f32 0.0, %v4799
        %v4801 = vpop.f32.mrb[0].mxu0
        %4802 = vmatprep.mubr.f32.mxu0 0.0
        %4803 = vmatmul.mubr.f32.gmra.mrb[0].mxu0 %v3919
        %v4804 = vpop.f32.mrb[0].mxu0
        %v4805 = vadd.f32 0.0, %v4804
        %v4806 = vpop.f32.mrb[0].mxu0
        %4807 = vmatprep.mubr.f32.mxu0 0.0
        %4808 = vmatmul.mubr.f32.gmra.mrb[0].mxu0 %v3920
        %v4809 = vpop.f32.mrb[0].mxu0
        %v4810 = vadd.f32 0.0, %v4809
        %v4811 = vpop.f32.mrb[0].mxu0
        %4812 = vmatprep.mubr.f32.mxu0 0.0
        %4813 = vmatmul.mubr.f32.gmra.mrb[0].mxu0 %v3921
        %v4814 = vpop.f32.mrb[0].mxu0
        %v4815 = vadd.f32 0.0, %v4814
        %v4816 = vpop.f32.mrb[0].mxu0
        %4817 = vmatprep.mubr.f32.mxu0 0.0
        %4818 = vmatmul.mubr.f32.gmra.mrb[0].mxu0 %v3922
        %v4819 = vpop.f32.mrb[0].mxu0
        %v4820 = vadd.f32 0.0, %v4819
        %v4821 = vpop.f32.mrb[0].mxu0
        %4822 = vmatprep.mubr.f32.mxu0 0.0
        %4823 = vmatmul.mubr.f32.gmra.mrb[0].mxu0 %v3923
        %v4824 = vpop.f32.mrb[0].mxu0
        %v4825 = vadd.f32 0.0, %v4824
        %v4826 = vpop.f32.mrb[0].mxu0
        %4827 = vdwg.mxu0
        %v4828 = vmul.f32 %v4039, %v4039
        %v4829 = vmul.f32 %v4041, %v4041
        %v4830 = vmul.f32 %v4500, %v4500
        %v4831 = vmul.f32 %v4045, %v4045
        %v4832 = vmul.f32 %v4047, %v4047
        %v4833 = vmul.f32 %v4505, %v4505
        %v4834 = vmul.f32 %v4051, %v4051
        %v4835 = vmul.f32 %v4053, %v4053
        %v4836 = vmul.f32 %v4510, %v4510
        %v4837 = vmul.f32 %v4057, %v4057
        %v4838 = vmul.f32 %v4059, %v4059
        %v4839 = vmul.f32 %v4515, %v4515
        %v4840 = vmul.f32 %v4063, %v4063
        %v4841 = vmul.f32 %v4065, %v4065
        %v4842 = vmul.f32 %v4520, %v4520
        %v4843 = vmul.f32 %v4069, %v4069
        %v4844 = vmul.f32 %v4071, %v4071
        %v4845 = vmul.f32 %v4525, %v4525
        %v4846 = vmul.f32 %v4075, %v4075
        %v4847 = vmul.f32 %v4077, %v4077
        %v4848 = vmul.f32 %v4530, %v4530
        %v4849 = vmul.f32 %v4081, %v4081
        %v4850 = vmul.f32 %v4083, %v4083
        %v4851 = vmul.f32 %v4535, %v4535
        %v4852 = vmul.f32 %v4087, %v4087
        %v4853 = vmul.f32 %v4089, %v4089
        %v4854 = vmul.f32 %v4540, %v4540
        %v4855 = vmul.f32 %v4093, %v4093
        %v4856 = vmul.f32 %v4095, %v4095
        %v4857 = vmul.f32 %v4545, %v4545
        %v4858 = vmul.f32 %v4099, %v4099
        %v4859 = vmul.f32 %v4101, %v4101
        %v4860 = vmul.f32 %v4550, %v4550
        %v4861 = vmul.f32 %v4105, %v4105
        %v4862 = vmul.f32 %v4107, %v4107
        %v4863 = vmul.f32 %v4555, %v4555
        %v4864 = vmul.f32 %v4111, %v4111
        %v4865 = vmul.f32 %v4113, %v4113
        %v4866 = vmul.f32 %v4560, %v4560
        %v4867 = vmul.f32 %v4117, %v4117
        %v4868 = vmul.f32 %v4119, %v4119
        %v4869 = vmul.f32 %v4565, %v4565
        %v4870 = vmul.f32 %v4123, %v4123
        %v4871 = vmul.f32 %v4125, %v4125
        %v4872 = vmul.f32 %v4570, %v4570
        %v4873 = vmul.f32 %v4129, %v4129
        %v4874 = vmul.f32 %v4131, %v4131
        %v4875 = vmul.f32 %v4575, %v4575
        %v4876 = vmul.f32 %v4135, %v4135
        %v4877 = vmul.f32 %v4137, %v4137
        %v4878 = vmul.f32 %v4580, %v4580
        %v4879 = vmul.f32 %v4141, %v4141
        %v4880 = vmul.f32 %v4143, %v4143
        %v4881 = vmul.f32 %v4585, %v4585
        %v4882 = vmul.f32 %v4147, %v4147
        %v4883 = vmul.f32 %v4149, %v4149
        %v4884 = vmul.f32 %v4590, %v4590
        %v4885 = vmul.f32 %v4153, %v4153
        %v4886 = vmul.f32 %v4155, %v4155
        %v4887 = vmul.f32 %v4595, %v4595
        %v4888 = vmul.f32 %v4159, %v4159
        %v4889 = vmul.f32 %v4161, %v4161
        %v4890 = vmul.f32 %v4600, %v4600
        %v4891 = vmul.f32 %v4165, %v4165
        %v4892 = vmul.f32 %v4167, %v4167
        %v4893 = vmul.f32 %v4605, %v4605
        %v4894 = vmul.f32 %v4171, %v4171
        %v4895 = vmul.f32 %v4173, %v4173
        %v4896 = vmul.f32 %v4610, %v4610
        %v4897 = vmul.f32 %v4177, %v4177
        %v4898 = vmul.f32 %v4179, %v4179
        %v4899 = vmul.f32 %v4615, %v4615
        %v4900 = vmul.f32 %v4183, %v4183
        %v4901 = vmul.f32 %v4185, %v4185
        %v4902 = vmul.f32 %v4620, %v4620
        %v4903 = vmul.f32 %v4189, %v4189
        %v4904 = vmul.f32 %v4191, %v4191
        %v4905 = vmul.f32 %v4625, %v4625
        %v4906 = vmul.f32 %v4195, %v4195
        %v4907 = vmul.f32 %v4197, %v4197
        %v4908 = vmul.f32 %v4630, %v4630
        %v4909 = vmul.f32 %v4201, %v4201
        %v4910 = vmul.f32 %v4203, %v4203
        %v4911 = vmul.f32 %v4635, %v4635
        %v4912 = vmul.f32 %v4207, %v4207
        %v4913 = vmul.f32 %v4209, %v4209
        %v4914 = vmul.f32 %v4640, %v4640
        %v4915 = vmul.f32 %v4213, %v4213
        %v4916 = vmul.f32 %v4215, %v4215
        %v4917 = vmul.f32 %v4645, %v4645
        %v4918 = vmul.f32 %v4219, %v4219
        %v4919 = vmul.f32 %v4221, %v4221
        %v4920 = vmul.f32 %v4650, %v4650
        %v4921 = vmul.f32 %v4225, %v4225
        %v4922 = vmul.f32 %v4227, %v4227
        %v4923 = vmul.f32 %v4655, %v4655
        %v4924 = vmul.f32 %v4231, %v4231
        %v4925 = vmul.f32 %v4233, %v4233
        %v4926 = vmul.f32 %v4660, %v4660
        %v4927 = vmul.f32 %v4237, %v4237
        %v4928 = vmul.f32 %v4239, %v4239
        %v4929 = vmul.f32 %v4665, %v4665
        %v4930 = vmul.f32 %v4243, %v4243
        %v4931 = vmul.f32 %v4245, %v4245
        %v4932 = vmul.f32 %v4670, %v4670
        %v4933 = vmul.f32 %v4249, %v4249
        %v4934 = vmul.f32 %v4251, %v4251
        %v4935 = vmul.f32 %v4675, %v4675
        %v4936 = vmul.f32 %v4255, %v4255
        %v4937 = vmul.f32 %v4257, %v4257
        %v4938 = vmul.f32 %v4680, %v4680
        %v4939 = vmul.f32 %v4261, %v4261
        %v4940 = vmul.f32 %v4263, %v4263
        %v4941 = vmul.f32 %v4685, %v4685
        %v4942 = vmul.f32 %v4267, %v4267
        %v4943 = vmul.f32 %v4269, %v4269
        %v4944 = vmul.f32 %v4690, %v4690
        %v4945 = vmul.f32 %v4273, %v4273
        %v4946 = vmul.f32 %v4275, %v4275
        %v4947 = vmul.f32 %v4695, %v4695
        %v4948 = vmul.f32 %v4279, %v4279
        %v4949 = vmul.f32 %v4281, %v4281
        %v4950 = vmul.f32 %v4700, %v4700
        %v4951 = vmul.f32 %v4285, %v4285
        %v4952 = vmul.f32 %v4287, %v4287
        %v4953 = vmul.f32 %v4705, %v4705
        %v4954 = vmul.f32 %v4291, %v4291
        %v4955 = vmul.f32 %v4293, %v4293
        %v4956 = vmul.f32 %v4710, %v4710
        %v4957 = vmul.f32 %v4297, %v4297
        %v4958 = vmul.f32 %v4299, %v4299
        %v4959 = vmul.f32 %v4715, %v4715
        %v4960 = vmul.f32 %v4303, %v4303
        %v4961 = vmul.f32 %v4305, %v4305
        %v4962 = vmul.f32 %v4720, %v4720
        %v4963 = vmul.f32 %v4309, %v4309
        %v4964 = vmul.f32 %v4311, %v4311
        %v4965 = vmul.f32 %v4725, %v4725
        %v4966 = vmul.f32 %v4315, %v4315
        %v4967 = vmul.f32 %v4317, %v4317
        %v4968 = vmul.f32 %v4730, %v4730
        %v4969 = vmul.f32 %v4321, %v4321
        %v4970 = vmul.f32 %v4323, %v4323
        %v4971 = vmul.f32 %v4735, %v4735
        %v4972 = vmul.f32 %v4327, %v4327
        %v4973 = vmul.f32 %v4329, %v4329
        %v4974 = vmul.f32 %v4740, %v4740
        %v4975 = vmul.f32 %v4333, %v4333
        %v4976 = vmul.f32 %v4335, %v4335
        %v4977 = vmul.f32 %v4745, %v4745
        %v4978 = vmul.f32 %v4339, %v4339
        %v4979 = vmul.f32 %v4341, %v4341
        %v4980 = vmul.f32 %v4750, %v4750
        %v4981 = vmul.f32 %v4345, %v4345
        %v4982 = vmul.f32 %v4347, %v4347
        %v4983 = vmul.f32 %v4755, %v4755
        %v4984 = vmul.f32 %v4351, %v4351
        %v4985 = vmul.f32 %v4353, %v4353
        %v4986 = vmul.f32 %v4760, %v4760
        %v4987 = vmul.f32 %v4357, %v4357
        %v4988 = vmul.f32 %v4359, %v4359
        %v4989 = vmul.f32 %v4765, %v4765
        %v4990 = vmul.f32 %v4363, %v4363
        %v4991 = vmul.f32 %v4365, %v4365
        %v4992 = vmul.f32 %v4770, %v4770
        %v4993 = vmul.f32 %v4369, %v4369
        %v4994 = vmul.f32 %v4371, %v4371
        %v4995 = vmul.f32 %v4775, %v4775
        %v4996 = vmul.f32 %v4375, %v4375
        %v4997 = vmul.f32 %v4377, %v4377
        %v4998 = vmul.f32 %v4780, %v4780
        %v4999 = vmul.f32 %v4381, %v4381
        %v5000 = vmul.f32 %v4383, %v4383
        %v5001 = vmul.f32 %v4785, %v4785
        %v5002 = vmul.f32 %v4387, %v4387
        %v5003 = vmul.f32 %v4389, %v4389
        %v5004 = vmul.f32 %v4790, %v4790
        %v5005 = vmul.f32 %v4393, %v4393
        %v5006 = vmul.f32 %v4395, %v4395
        %v5007 = vmul.f32 %v4795, %v4795
        %v5008 = vmul.f32 %v4399, %v4399
        %v5009 = vmul.f32 %v4401, %v4401
        %v5010 = vmul.f32 %v4800, %v4800
        %v5011 = vmul.f32 %v4405, %v4405
        %v5012 = vmul.f32 %v4407, %v4407
        %v5013 = vmul.f32 %v4805, %v4805
        %v5014 = vmul.f32 %v4411, %v4411
        %v5015 = vmul.f32 %v4413, %v4413
        %v5016 = vmul.f32 %v4810, %v4810
        %v5017 = vmul.f32 %v4417, %v4417
        %v5018 = vmul.f32 %v4419, %v4419
        %v5019 = vmul.f32 %v4815, %v4815
        %v5020 = vmul.f32 %v4423, %v4423
        %v5021 = vmul.f32 %v4425, %v4425
        %v5022 = vmul.f32 %v4820, %v4820
        %v5023 = vmul.f32 %v4429, %v4429
        %v5024 = vmul.f32 %v4431, %v4431
        %v5025 = vmul.f32 %v4825, %v4825
        %v5026 = vadd.f32 %v4828, %v4829
        %v5027 = vadd.f32 %v5026, %v4830
        %5028 = vadd.xlane.f32.xlu0 %v5027
        %v5029 = vpop.xlane.xlu0 %5028
        %v5030 = vadd.f32 %v4831, %v4832
        %v5031 = vadd.f32 %v5030, %v4833
        %5032 = vadd.xlane.f32.xlu0 %v5031
        %v5033 = vpop.xlane.xlu0 %5032
        %v5034 = vadd.f32 %v4834, %v4835
        %v5035 = vadd.f32 %v5034, %v4836
        %5036 = vadd.xlane.f32.xlu0 %v5035
        %v5037 = vpop.xlane.xlu0 %5036
        %v5038 = vadd.f32 %v4837, %v4838
        %v5039 = vadd.f32 %v5038, %v4839
        %5040 = vadd.xlane.f32.xlu0 %v5039
        %v5041 = vpop.xlane.xlu0 %5040
        %v5042 = vadd.f32 %v4840, %v4841
        %v5043 = vadd.f32 %v5042, %v4842
        %5044 = vadd.xlane.f32.xlu0 %v5043
        %v5045 = vpop.xlane.xlu0 %5044
        %v5046 = vadd.f32 %v4843, %v4844
        %v5047 = vadd.f32 %v5046, %v4845
        %5048 = vadd.xlane.f32.xlu0 %v5047
        %v5049 = vpop.xlane.xlu0 %5048
        %v5050 = vadd.f32 %v4846, %v4847
        %v5051 = vadd.f32 %v5050, %v4848
        %5052 = vadd.xlane.f32.xlu0 %v5051
        %v5053 = vpop.xlane.xlu0 %5052
        %v5054 = vadd.f32 %v4849, %v4850
        %v5055 = vadd.f32 %v5054, %v4851
        %5056 = vadd.xlane.f32.xlu0 %v5055
        %v5057 = vpop.xlane.xlu0 %5056
        %v5058 = vadd.f32 %v4852, %v4853
        %v5059 = vadd.f32 %v5058, %v4854
        %5060 = vadd.xlane.f32.xlu0 %v5059
        %v5061 = vpop.xlane.xlu0 %5060
        %v5062 = vadd.f32 %v4855, %v4856
        %v5063 = vadd.f32 %v5062, %v4857
        %5064 = vadd.xlane.f32.xlu0 %v5063
        %v5065 = vpop.xlane.xlu0 %5064
        %v5066 = vadd.f32 %v4858, %v4859
        %v5067 = vadd.f32 %v5066, %v4860
        %5068 = vadd.xlane.f32.xlu0 %v5067
        %v5069 = vpop.xlane.xlu0 %5068
        %v5070 = vadd.f32 %v4861, %v4862
        %v5071 = vadd.f32 %v5070, %v4863
        %5072 = vadd.xlane.f32.xlu0 %v5071
        %v5073 = vpop.xlane.xlu0 %5072
        %v5074 = vadd.f32 %v4864, %v4865
        %v5075 = vadd.f32 %v5074, %v4866
        %5076 = vadd.xlane.f32.xlu0 %v5075
        %v5077 = vpop.xlane.xlu0 %5076
        %v5078 = vadd.f32 %v4867, %v4868
        %v5079 = vadd.f32 %v5078, %v4869
        %5080 = vadd.xlane.f32.xlu0 %v5079
        %v5081 = vpop.xlane.xlu0 %5080
        %v5082 = vadd.f32 %v4870, %v4871
        %v5083 = vadd.f32 %v5082, %v4872
        %5084 = vadd.xlane.f32.xlu0 %v5083
        %v5085 = vpop.xlane.xlu0 %5084
        %v5086 = vadd.f32 %v4873, %v4874
        %v5087 = vadd.f32 %v5086, %v4875
        %5088 = vadd.xlane.f32.xlu0 %v5087
        %v5089 = vpop.xlane.xlu0 %5088
        %v5090 = vadd.f32 %v4876, %v4877
        %v5091 = vadd.f32 %v5090, %v4878
        %5092 = vadd.xlane.f32.xlu0 %v5091
        %v5093 = vpop.xlane.xlu0 %5092
        %v5094 = vadd.f32 %v4879, %v4880
        %v5095 = vadd.f32 %v5094, %v4881
        %5096 = vadd.xlane.f32.xlu0 %v5095
        %v5097 = vpop.xlane.xlu0 %5096
        %v5098 = vadd.f32 %v4882, %v4883
        %v5099 = vadd.f32 %v5098, %v4884
        %5100 = vadd.xlane.f32.xlu0 %v5099
        %v5101 = vpop.xlane.xlu0 %5100
        %v5102 = vadd.f32 %v4885, %v4886
        %v5103 = vadd.f32 %v5102, %v4887
        %5104 = vadd.xlane.f32.xlu0 %v5103
        %v5105 = vpop.xlane.xlu0 %5104
        %v5106 = vadd.f32 %v4888, %v4889
        %v5107 = vadd.f32 %v5106, %v4890
        %5108 = vadd.xlane.f32.xlu0 %v5107
        %v5109 = vpop.xlane.xlu0 %5108
        %v5110 = vadd.f32 %v4891, %v4892
        %v5111 = vadd.f32 %v5110, %v4893
        %5112 = vadd.xlane.f32.xlu0 %v5111
        %v5113 = vpop.xlane.xlu0 %5112
        %v5114 = vadd.f32 %v4894, %v4895
        %v5115 = vadd.f32 %v5114, %v4896
        %5116 = vadd.xlane.f32.xlu0 %v5115
        %v5117 = vpop.xlane.xlu0 %5116
        %v5118 = vadd.f32 %v4897, %v4898
        %v5119 = vadd.f32 %v5118, %v4899
        %5120 = vadd.xlane.f32.xlu0 %v5119
        %v5121 = vpop.xlane.xlu0 %5120
        %v5122 = vadd.f32 %v4900, %v4901
        %v5123 = vadd.f32 %v5122, %v4902
        %5124 = vadd.xlane.f32.xlu0 %v5123
        %v5125 = vpop.xlane.xlu0 %5124
        %v5126 = vadd.f32 %v4903, %v4904
        %v5127 = vadd.f32 %v5126, %v4905
        %5128 = vadd.xlane.f32.xlu0 %v5127
        %v5129 = vpop.xlane.xlu0 %5128
        %v5130 = vadd.f32 %v4906, %v4907
        %v5131 = vadd.f32 %v5130, %v4908
        %5132 = vadd.xlane.f32.xlu0 %v5131
        %v5133 = vpop.xlane.xlu0 %5132
        %v5134 = vadd.f32 %v4909, %v4910
        %v5135 = vadd.f32 %v5134, %v4911
        %5136 = vadd.xlane.f32.xlu0 %v5135
        %v5137 = vpop.xlane.xlu0 %5136
        %v5138 = vadd.f32 %v4912, %v4913
        %v5139 = vadd.f32 %v5138, %v4914
        %5140 = vadd.xlane.f32.xlu0 %v5139
        %v5141 = vpop.xlane.xlu0 %5140
        %v5142 = vadd.f32 %v4915, %v4916
        %v5143 = vadd.f32 %v5142, %v4917
        %5144 = vadd.xlane.f32.xlu0 %v5143
        %v5145 = vpop.xlane.xlu0 %5144
        %v5146 = vadd.f32 %v4918, %v4919
        %v5147 = vadd.f32 %v5146, %v4920
        %5148 = vadd.xlane.f32.xlu0 %v5147
        %v5149 = vpop.xlane.xlu0 %5148
        %v5150 = vadd.f32 %v4921, %v4922
        %v5151 = vadd.f32 %v5150, %v4923
        %5152 = vadd.xlane.f32.xlu0 %v5151
        %v5153 = vpop.xlane.xlu0 %5152
        %v5154 = vadd.f32 %v4924, %v4925
        %v5155 = vadd.f32 %v5154, %v4926
        %5156 = vadd.xlane.f32.xlu0 %v5155
        %v5157 = vpop.xlane.xlu0 %5156
        %v5158 = vadd.f32 %v4927, %v4928
        %v5159 = vadd.f32 %v5158, %v4929
        %5160 = vadd.xlane.f32.xlu0 %v5159
        %v5161 = vpop.xlane.xlu0 %5160
        %v5162 = vadd.f32 %v4930, %v4931
        %v5163 = vadd.f32 %v5162, %v4932
        %5164 = vadd.xlane.f32.xlu0 %v5163
        %v5165 = vpop.xlane.xlu0 %5164
        %v5166 = vadd.f32 %v4933, %v4934
        %v5167 = vadd.f32 %v5166, %v4935
        %5168 = vadd.xlane.f32.xlu0 %v5167
        %v5169 = vpop.xlane.xlu0 %5168
        %v5170 = vadd.f32 %v4936, %v4937
        %v5171 = vadd.f32 %v5170, %v4938
        %5172 = vadd.xlane.f32.xlu0 %v5171
        %v5173 = vpop.xlane.xlu0 %5172
        %v5174 = vadd.f32 %v4939, %v4940
        %v5175 = vadd.f32 %v5174, %v4941
        %5176 = vadd.xlane.f32.xlu0 %v5175
        %v5177 = vpop.xlane.xlu0 %5176
        %v5178 = vadd.f32 %v4942, %v4943
        %v5179 = vadd.f32 %v5178, %v4944
        %5180 = vadd.xlane.f32.xlu0 %v5179
        %v5181 = vpop.xlane.xlu0 %5180
        %v5182 = vadd.f32 %v4945, %v4946
        %v5183 = vadd.f32 %v5182, %v4947
        %5184 = vadd.xlane.f32.xlu0 %v5183
        %v5185 = vpop.xlane.xlu0 %5184
        %v5186 = vadd.f32 %v4948, %v4949
        %v5187 = vadd.f32 %v5186, %v4950
        %5188 = vadd.xlane.f32.xlu0 %v5187
        %v5189 = vpop.xlane.xlu0 %5188
        %v5190 = vadd.f32 %v4951, %v4952
        %v5191 = vadd.f32 %v5190, %v4953
        %5192 = vadd.xlane.f32.xlu0 %v5191
        %v5193 = vpop.xlane.xlu0 %5192
        %v5194 = vadd.f32 %v4954, %v4955
        %v5195 = vadd.f32 %v5194, %v4956
        %5196 = vadd.xlane.f32.xlu0 %v5195
        %v5197 = vpop.xlane.xlu0 %5196
        %v5198 = vadd.f32 %v4957, %v4958
        %v5199 = vadd.f32 %v5198, %v4959
        %5200 = vadd.xlane.f32.xlu0 %v5199
        %v5201 = vpop.xlane.xlu0 %5200
        %v5202 = vadd.f32 %v4960, %v4961
        %v5203 = vadd.f32 %v5202, %v4962
        %5204 = vadd.xlane.f32.xlu0 %v5203
        %v5205 = vpop.xlane.xlu0 %5204
        %v5206 = vadd.f32 %v4963, %v4964
        %v5207 = vadd.f32 %v5206, %v4965
        %5208 = vadd.xlane.f32.xlu0 %v5207
        %v5209 = vpop.xlane.xlu0 %5208
        %v5210 = vadd.f32 %v4966, %v4967
        %v5211 = vadd.f32 %v5210, %v4968
        %5212 = vadd.xlane.f32.xlu0 %v5211
        %v5213 = vpop.xlane.xlu0 %5212
        %v5214 = vadd.f32 %v4969, %v4970
        %v5215 = vadd.f32 %v5214, %v4971
        %5216 = vadd.xlane.f32.xlu0 %v5215
        %v5217 = vpop.xlane.xlu0 %5216
        %v5218 = vadd.f32 %v4972, %v4973
        %v5219 = vadd.f32 %v5218, %v4974
        %5220 = vadd.xlane.f32.xlu0 %v5219
        %v5221 = vpop.xlane.xlu0 %5220
        %v5222 = vadd.f32 %v4975, %v4976
        %v5223 = vadd.f32 %v5222, %v4977
        %5224 = vadd.xlane.f32.xlu0 %v5223
        %v5225 = vpop.xlane.xlu0 %5224
        %v5226 = vadd.f32 %v4978, %v4979
        %v5227 = vadd.f32 %v5226, %v4980
        %5228 = vadd.xlane.f32.xlu0 %v5227
        %v5229 = vpop.xlane.xlu0 %5228
        %v5230 = vadd.f32 %v4981, %v4982
        %v5231 = vadd.f32 %v5230, %v4983
        %5232 = vadd.xlane.f32.xlu0 %v5231
        %v5233 = vpop.xlane.xlu0 %5232
        %v5234 = vadd.f32 %v4984, %v4985
        %v5235 = vadd.f32 %v5234, %v4986
        %5236 = vadd.xlane.f32.xlu0 %v5235
        %v5237 = vpop.xlane.xlu0 %5236
        %v5238 = vadd.f32 %v4987, %v4988
        %v5239 = vadd.f32 %v5238, %v4989
        %5240 = vadd.xlane.f32.xlu0 %v5239
        %v5241 = vpop.xlane.xlu0 %5240
        %v5242 = vadd.f32 %v4990, %v4991
        %v5243 = vadd.f32 %v5242, %v4992
        %5244 = vadd.xlane.f32.xlu0 %v5243
        %v5245 = vpop.xlane.xlu0 %5244
        %v5246 = vadd.f32 %v4993, %v4994
        %v5247 = vadd.f32 %v5246, %v4995
        %5248 = vadd.xlane.f32.xlu0 %v5247
        %v5249 = vpop.xlane.xlu0 %5248
        %v5250 = vadd.f32 %v4996, %v4997
        %v5251 = vadd.f32 %v5250, %v4998
        %5252 = vadd.xlane.f32.xlu0 %v5251
        %v5253 = vpop.xlane.xlu0 %5252
        %v5254 = vadd.f32 %v4999, %v5000
        %v5255 = vadd.f32 %v5254, %v5001
        %5256 = vadd.xlane.f32.xlu0 %v5255
        %v5257 = vpop.xlane.xlu0 %5256
        %v5258 = vadd.f32 %v5002, %v5003
        %v5259 = vadd.f32 %v5258, %v5004
        %5260 = vadd.xlane.f32.xlu0 %v5259
        %v5261 = vpop.xlane.xlu0 %5260
        %v5262 = vadd.f32 %v5005, %v5006
        %v5263 = vadd.f32 %v5262, %v5007
        %5264 = vadd.xlane.f32.xlu0 %v5263
        %v5265 = vpop.xlane.xlu0 %5264
        %v5266 = vadd.f32 %v5008, %v5009
        %v5267 = vadd.f32 %v5266, %v5010
        %5268 = vadd.xlane.f32.xlu0 %v5267
        %v5269 = vpop.xlane.xlu0 %5268
        %v5270 = vadd.f32 %v5011, %v5012
        %v5271 = vadd.f32 %v5270, %v5013
        %5272 = vadd.xlane.f32.xlu0 %v5271
        %v5273 = vpop.xlane.xlu0 %5272
        %v5274 = vadd.f32 %v5014, %v5015
        %v5275 = vadd.f32 %v5274, %v5016
        %5276 = vadd.xlane.f32.xlu0 %v5275
        %v5277 = vpop.xlane.xlu0 %5276
        %v5278 = vadd.f32 %v5017, %v5018
        %v5279 = vadd.f32 %v5278, %v5019
        %5280 = vadd.xlane.f32.xlu0 %v5279
        %v5281 = vpop.xlane.xlu0 %5280
        %v5282 = vadd.f32 %v5020, %v5021
        %v5283 = vadd.f32 %v5282, %v5022
        %5284 = vadd.xlane.f32.xlu0 %v5283
        %v5285 = vpop.xlane.xlu0 %5284
        %v5286 = vadd.f32 %v5023, %v5024
        %v5287 = vadd.f32 %v5286, %v5025
        %5288 = vadd.xlane.f32.xlu0 %v5287
        %v5289 = vpop.xlane.xlu0 %5288
        %v5290 = vadd.f32 %v5029, 1e-12
        %v5291 = vadd.f32 %v5033, 1e-12
        %v5292 = vadd.f32 %v5037, 1e-12
        %v5293 = vadd.f32 %v5041, 1e-12
        %v5294 = vadd.f32 %v5045, 1e-12
        %v5295 = vadd.f32 %v5049, 1e-12
        %v5296 = vadd.f32 %v5053, 1e-12
        %v5297 = vadd.f32 %v5057, 1e-12
        %v5298 = vadd.f32 %v5061, 1e-12
        %v5299 = vadd.f32 %v5065, 1e-12
        %v5300 = vadd.f32 %v5069, 1e-12
        %v5301 = vadd.f32 %v5073, 1e-12
        %v5302 = vadd.f32 %v5077, 1e-12
        %v5303 = vadd.f32 %v5081, 1e-12
        %v5304 = vadd.f32 %v5085, 1e-12
        %v5305 = vadd.f32 %v5089, 1e-12
        %v5306 = vadd.f32 %v5093, 1e-12
        %v5307 = vadd.f32 %v5097, 1e-12
        %v5308 = vadd.f32 %v5101, 1e-12
        %v5309 = vadd.f32 %v5105, 1e-12
        %v5310 = vadd.f32 %v5109, 1e-12
        %v5311 = vadd.f32 %v5113, 1e-12
        %v5312 = vadd.f32 %v5117, 1e-12
        %v5313 = vadd.f32 %v5121, 1e-12
        %v5314 = vadd.f32 %v5125, 1e-12
        %v5315 = vadd.f32 %v5129, 1e-12
        %v5316 = vadd.f32 %v5133, 1e-12
        %v5317 = vadd.f32 %v5137, 1e-12
        %v5318 = vadd.f32 %v5141, 1e-12
        %v5319 = vadd.f32 %v5145, 1e-12
        %v5320 = vadd.f32 %v5149, 1e-12
        %v5321 = vadd.f32 %v5153, 1e-12
        %v5322 = vadd.f32 %v5157, 1e-12
        %v5323 = vadd.f32 %v5161, 1e-12
        %v5324 = vadd.f32 %v5165, 1e-12
        %v5325 = vadd.f32 %v5169, 1e-12
        %v5326 = vadd.f32 %v5173, 1e-12
        %v5327 = vadd.f32 %v5177, 1e-12
        %v5328 = vadd.f32 %v5181, 1e-12
        %v5329 = vadd.f32 %v5185, 1e-12
        %v5330 = vadd.f32 %v5189, 1e-12
        %v5331 = vadd.f32 %v5193, 1e-12
        %v5332 = vadd.f32 %v5197, 1e-12
        %v5333 = vadd.f32 %v5201, 1e-12
        %v5334 = vadd.f32 %v5205, 1e-12
        %v5335 = vadd.f32 %v5209, 1e-12
        %v5336 = vadd.f32 %v5213, 1e-12
        %v5337 = vadd.f32 %v5217, 1e-12
        %v5338 = vadd.f32 %v5221, 1e-12
        %v5339 = vadd.f32 %v5225, 1e-12
        %v5340 = vadd.f32 %v5229, 1e-12
        %v5341 = vadd.f32 %v5233, 1e-12
        %v5342 = vadd.f32 %v5237, 1e-12
        %v5343 = vadd.f32 %v5241, 1e-12
        %v5344 = vadd.f32 %v5245, 1e-12
        %v5345 = vadd.f32 %v5249, 1e-12
        %v5346 = vadd.f32 %v5253, 1e-12
        %v5347 = vadd.f32 %v5257, 1e-12
        %v5348 = vadd.f32 %v5261, 1e-12
        %v5349 = vadd.f32 %v5265, 1e-12
        %v5350 = vadd.f32 %v5269, 1e-12
        %v5351 = vadd.f32 %v5273, 1e-12
        %v5352 = vadd.f32 %v5277, 1e-12
        %v5353 = vadd.f32 %v5281, 1e-12
        %v5354 = vadd.f32 %v5285, 1e-12
        %v5355 = vadd.f32 %v5289, 1e-12
        %v5356 = vrsqrt.pop %v5290
        %v5357 = vrsqrt.pop %v5291
        %v5358 = vrsqrt.pop %v5292
        %v5359 = vrsqrt.pop %v5293
        %v5360 = vrsqrt.pop %v5294
        %v5361 = vrsqrt.pop %v5295
        %v5362 = vrsqrt.pop %v5296
        %v5363 = vrsqrt.pop %v5297
        %v5364 = vrsqrt.pop %v5298
        %v5365 = vrsqrt.pop %v5299
        %v5366 = vrsqrt.pop %v5300
        %v5367 = vrsqrt.pop %v5301
        %v5368 = vrsqrt.pop %v5302
        %v5369 = vrsqrt.pop %v5303
        %v5370 = vrsqrt.pop %v5304
        %v5371 = vrsqrt.pop %v5305
        %v5372 = vrsqrt.pop %v5306
        %v5373 = vrsqrt.pop %v5307
        %v5374 = vrsqrt.pop %v5308
        %v5375 = vrsqrt.pop %v5309
        %v5376 = vrsqrt.pop %v5310
        %v5377 = vrsqrt.pop %v5311
        %v5378 = vrsqrt.pop %v5312
        %v5379 = vrsqrt.pop %v5313
        %v5380 = vrsqrt.pop %v5314
        %v5381 = vrsqrt.pop %v5315
        %v5382 = vrsqrt.pop %v5316
        %v5383 = vrsqrt.pop %v5317
        %v5384 = vrsqrt.pop %v5318
        %v5385 = vrsqrt.pop %v5319
        %v5386 = vrsqrt.pop %v5320
        %v5387 = vrsqrt.pop %v5321
        %v5388 = vrsqrt.pop %v5322
        %v5389 = vrsqrt.pop %v5323
        %v5390 = vrsqrt.pop %v5324
        %v5391 = vrsqrt.pop %v5325
        %v5392 = vrsqrt.pop %v5326
        %v5393 = vrsqrt.pop %v5327
        %v5394 = vrsqrt.pop %v5328
        %v5395 = vrsqrt.pop %v5329
        %v5396 = vrsqrt.pop %v5330
        %v5397 = vrsqrt.pop %v5331
        %v5398 = vrsqrt.pop %v5332
        %v5399 = vrsqrt.pop %v5333
        %v5400 = vrsqrt.pop %v5334
        %v5401 = vrsqrt.pop %v5335
        %v5402 = vrsqrt.pop %v5336
        %v5403 = vrsqrt.pop %v5337
        %v5404 = vrsqrt.pop %v5338
        %v5405 = vrsqrt.pop %v5339
        %v5406 = vrsqrt.pop %v5340
        %v5407 = vrsqrt.pop %v5341
        %v5408 = vrsqrt.pop %v5342
        %v5409 = vrsqrt.pop %v5343
        %v5410 = vrsqrt.pop %v5344
        %v5411 = vrsqrt.pop %v5345
        %v5412 = vrsqrt.pop %v5346
        %v5413 = vrsqrt.pop %v5347
        %v5414 = vrsqrt.pop %v5348
        %v5415 = vrsqrt.pop %v5349
        %v5416 = vrsqrt.pop %v5350
        %v5417 = vrsqrt.pop %v5351
        %v5418 = vrsqrt.pop %v5352
        %v5419 = vrsqrt.pop %v5353
        %v5420 = vrsqrt.pop %v5354
        %v5421 = vrsqrt.pop %v5355
        %v5422 = vmul.f32 %v4039, %v5356
        %v5423 = vmul.f32 %v4041, %v5356
        %v5424 = vmul.f32 %v4500, %v5356
        %v5425 = vmul.f32 %v4045, %v5357
        %v5426 = vmul.f32 %v4047, %v5357
        %v5427 = vmul.f32 %v4505, %v5357
        %v5428 = vmul.f32 %v4051, %v5358
        %v5429 = vmul.f32 %v4053, %v5358
        %v5430 = vmul.f32 %v4510, %v5358
        %v5431 = vmul.f32 %v4057, %v5359
        %v5432 = vmul.f32 %v4059, %v5359
        %v5433 = vmul.f32 %v4515, %v5359
        %v5434 = vmul.f32 %v4063, %v5360
        %v5435 = vmul.f32 %v4065, %v5360
        %v5436 = vmul.f32 %v4520, %v5360
        %v5437 = vmul.f32 %v4069, %v5361
        %v5438 = vmul.f32 %v4071, %v5361
        %v5439 = vmul.f32 %v4525, %v5361
        %v5440 = vmul.f32 %v4075, %v5362
        %v5441 = vmul.f32 %v4077, %v5362
        %v5442 = vmul.f32 %v4530, %v5362
        %v5443 = vmul.f32 %v4081, %v5363
        %v5444 = vmul.f32 %v4083, %v5363
        %v5445 = vmul.f32 %v4535, %v5363
        %v5446 = vmul.f32 %v4087, %v5364
        %v5447 = vmul.f32 %v4089, %v5364
        %v5448 = vmul.f32 %v4540, %v5364
        %v5449 = vmul.f32 %v4093, %v5365
        %v5450 = vmul.f32 %v4095, %v5365
        %v5451 = vmul.f32 %v4545, %v5365
        %v5452 = vmul.f32 %v4099, %v5366
        %v5453 = vmul.f32 %v4101, %v5366
        %v5454 = vmul.f32 %v4550, %v5366
        %v5455 = vmul.f32 %v4105, %v5367
        %v5456 = vmul.f32 %v4107, %v5367
        %v5457 = vmul.f32 %v4555, %v5367
        %v5458 = vmul.f32 %v4111, %v5368
        %v5459 = vmul.f32 %v4113, %v5368
        %v5460 = vmul.f32 %v4560, %v5368
        %v5461 = vmul.f32 %v4117, %v5369
        %v5462 = vmul.f32 %v4119, %v5369
        %v5463 = vmul.f32 %v4565, %v5369
        %v5464 = vmul.f32 %v4123, %v5370
        %v5465 = vmul.f32 %v4125, %v5370
        %v5466 = vmul.f32 %v4570, %v5370
        %v5467 = vmul.f32 %v4129, %v5371
        %v5468 = vmul.f32 %v4131, %v5371
        %v5469 = vmul.f32 %v4575, %v5371
        %v5470 = vmul.f32 %v4135, %v5372
        %v5471 = vmul.f32 %v4137, %v5372
        %v5472 = vmul.f32 %v4580, %v5372
        %v5473 = vmul.f32 %v4141, %v5373
        %v5474 = vmul.f32 %v4143, %v5373
        %v5475 = vmul.f32 %v4585, %v5373
        %v5476 = vmul.f32 %v4147, %v5374
        %v5477 = vmul.f32 %v4149, %v5374
        %v5478 = vmul.f32 %v4590, %v5374
        %v5479 = vmul.f32 %v4153, %v5375
        %v5480 = vmul.f32 %v4155, %v5375
        %v5481 = vmul.f32 %v4595, %v5375
        %v5482 = vmul.f32 %v4159, %v5376
        %v5483 = vmul.f32 %v4161, %v5376
        %v5484 = vmul.f32 %v4600, %v5376
        %v5485 = vmul.f32 %v4165, %v5377
        %v5486 = vmul.f32 %v4167, %v5377
        %v5487 = vmul.f32 %v4605, %v5377
        %v5488 = vmul.f32 %v4171, %v5378
        %v5489 = vmul.f32 %v4173, %v5378
        %v5490 = vmul.f32 %v4610, %v5378
        %v5491 = vmul.f32 %v4177, %v5379
        %v5492 = vmul.f32 %v4179, %v5379
        %v5493 = vmul.f32 %v4615, %v5379
        %v5494 = vmul.f32 %v4183, %v5380
        %v5495 = vmul.f32 %v4185, %v5380
        %v5496 = vmul.f32 %v4620, %v5380
        %v5497 = vmul.f32 %v4189, %v5381
        %v5498 = vmul.f32 %v4191, %v5381
        %v5499 = vmul.f32 %v4625, %v5381
        %v5500 = vmul.f32 %v4195, %v5382
        %v5501 = vmul.f32 %v4197, %v5382
        %v5502 = vmul.f32 %v4630, %v5382
        %v5503 = vmul.f32 %v4201, %v5383
        %v5504 = vmul.f32 %v4203, %v5383
        %v5505 = vmul.f32 %v4635, %v5383
        %v5506 = vmul.f32 %v4207, %v5384
        %v5507 = vmul.f32 %v4209, %v5384
        %v5508 = vmul.f32 %v4640, %v5384
        %v5509 = vmul.f32 %v4213, %v5385
        %v5510 = vmul.f32 %v4215, %v5385
        %v5511 = vmul.f32 %v4645, %v5385
        %v5512 = vmul.f32 %v4219, %v5386
        %v5513 = vmul.f32 %v4221, %v5386
        %v5514 = vmul.f32 %v4650, %v5386
        %v5515 = vmul.f32 %v4225, %v5387
        %v5516 = vmul.f32 %v4227, %v5387
        %v5517 = vmul.f32 %v4655, %v5387
        %v5518 = vmul.f32 %v4231, %v5388
        %v5519 = vmul.f32 %v4233, %v5388
        %v5520 = vmul.f32 %v4660, %v5388
        %v5521 = vmul.f32 %v4237, %v5389
        %v5522 = vmul.f32 %v4239, %v5389
        %v5523 = vmul.f32 %v4665, %v5389
        %v5524 = vmul.f32 %v4243, %v5390
        %v5525 = vmul.f32 %v4245, %v5390
        %v5526 = vmul.f32 %v4670, %v5390
        %v5527 = vmul.f32 %v4249, %v5391
        %v5528 = vmul.f32 %v4251, %v5391
        %v5529 = vmul.f32 %v4675, %v5391
        %v5530 = vmul.f32 %v4255, %v5392
        %v5531 = vmul.f32 %v4257, %v5392
        %v5532 = vmul.f32 %v4680, %v5392
        %v5533 = vmul.f32 %v4261, %v5393
        %v5534 = vmul.f32 %v4263, %v5393
        %v5535 = vmul.f32 %v4685, %v5393
        %v5536 = vmul.f32 %v4267, %v5394
        %v5537 = vmul.f32 %v4269, %v5394
        %v5538 = vmul.f32 %v4690, %v5394
        %v5539 = vmul.f32 %v4273, %v5395
        %v5540 = vmul.f32 %v4275, %v5395
        %v5541 = vmul.f32 %v4695, %v5395
        %v5542 = vmul.f32 %v4279, %v5396
        %v5543 = vmul.f32 %v4281, %v5396
        %v5544 = vmul.f32 %v4700, %v5396
        %v5545 = vmul.f32 %v4285, %v5397
        %v5546 = vmul.f32 %v4287, %v5397
        %v5547 = vmul.f32 %v4705, %v5397
        %v5548 = vmul.f32 %v4291, %v5398
        %v5549 = vmul.f32 %v4293, %v5398
        %v5550 = vmul.f32 %v4710, %v5398
        %v5551 = vmul.f32 %v4297, %v5399
        %v5552 = vmul.f32 %v4299, %v5399
        %v5553 = vmul.f32 %v4715, %v5399
        %v5554 = vmul.f32 %v4303, %v5400
        %v5555 = vmul.f32 %v4305, %v5400
        %v5556 = vmul.f32 %v4720, %v5400
        %v5557 = vmul.f32 %v4309, %v5401
        %v5558 = vmul.f32 %v4311, %v5401
        %v5559 = vmul.f32 %v4725, %v5401
        %v5560 = vmul.f32 %v4315, %v5402
        %v5561 = vmul.f32 %v4317, %v5402
        %v5562 = vmul.f32 %v4730, %v5402
        %v5563 = vmul.f32 %v4321, %v5403
        %v5564 = vmul.f32 %v4323, %v5403
        %v5565 = vmul.f32 %v4735, %v5403
        %v5566 = vmul.f32 %v4327, %v5404
        %v5567 = vmul.f32 %v4329, %v5404
        %v5568 = vmul.f32 %v4740, %v5404
        %v5569 = vmul.f32 %v4333, %v5405
        %v5570 = vmul.f32 %v4335, %v5405
        %v5571 = vmul.f32 %v4745, %v5405
        %v5572 = vmul.f32 %v4339, %v5406
        %v5573 = vmul.f32 %v4341, %v5406
        %v5574 = vmul.f32 %v4750, %v5406
        %v5575 = vmul.f32 %v4345, %v5407
        %v5576 = vmul.f32 %v4347, %v5407
        %v5577 = vmul.f32 %v4755, %v5407
        %v5578 = vmul.f32 %v4351, %v5408
        %v5579 = vmul.f32 %v4353, %v5408
        %v5580 = vmul.f32 %v4760, %v5408
        %v5581 = vmul.f32 %v4357, %v5409
        %v5582 = vmul.f32 %v4359, %v5409
        %v5583 = vmul.f32 %v4765, %v5409
        %v5584 = vmul.f32 %v4363, %v5410
        %v5585 = vmul.f32 %v4365, %v5410
        %v5586 = vmul.f32 %v4770, %v5410
        %v5587 = vmul.f32 %v4369, %v5411
        %v5588 = vmul.f32 %v4371, %v5411
        %v5589 = vmul.f32 %v4775, %v5411
        %v5590 = vmul.f32 %v4375, %v5412
        %v5591 = vmul.f32 %v4377, %v5412
        %v5592 = vmul.f32 %v4780, %v5412
        %v5593 = vmul.f32 %v4381, %v5413
        %v5594 = vmul.f32 %v4383, %v5413
        %v5595 = vmul.f32 %v4785, %v5413
        %v5596 = vmul.f32 %v4387, %v5414
        %v5597 = vmul.f32 %v4389, %v5414
        %v5598 = vmul.f32 %v4790, %v5414
        %v5599 = vmul.f32 %v4393, %v5415
        %v5600 = vmul.f32 %v4395, %v5415
        %v5601 = vmul.f32 %v4795, %v5415
        %v5602 = vmul.f32 %v4399, %v5416
        %v5603 = vmul.f32 %v4401, %v5416
        %v5604 = vmul.f32 %v4800, %v5416
        %v5605 = vmul.f32 %v4405, %v5417
        %v5606 = vmul.f32 %v4407, %v5417
        %v5607 = vmul.f32 %v4805, %v5417
        %v5608 = vmul.f32 %v4411, %v5418
        %v5609 = vmul.f32 %v4413, %v5418
        %v5610 = vmul.f32 %v4810, %v5418
        %v5611 = vmul.f32 %v4417, %v5419
        %v5612 = vmul.f32 %v4419, %v5419
        %v5613 = vmul.f32 %v4815, %v5419
        %v5614 = vmul.f32 %v4423, %v5420
        %v5615 = vmul.f32 %v4425, %v5420
        %v5616 = vmul.f32 %v4820, %v5420
        %v5617 = vmul.f32 %v4429, %v5421
        %v5618 = vmul.f32 %v4431, %v5421
        %v5619 = vmul.f32 %v4825, %v5421
        %5620 = vst [vmem:[%s152] sm:$0xff] %v5422
        %5621 = vst [vmem:[%s152 + $0x8] sm:$0xff] %v5423
        %5622 = vst [vmem:[%s152 + $0x10] sm:$0xff] %v5424
        %5623 = vst [vmem:[%s152 + $0x18] sm:$0xff] %v5425
        %5624 = vst [vmem:[%s152 + $0x20] sm:$0xff] %v5426
        %5625 = vst [vmem:[%s152 + $0x28] sm:$0xff] %v5427
        %5626 = vst [vmem:[%s152 + $0x30] sm:$0xff] %v5428
        %5627 = vst [vmem:[%s152 + $0x38] sm:$0xff] %v5429
        %5628 = vst [vmem:[%s152 + $0x40] sm:$0xff] %v5430
        %5629 = vst [vmem:[%s152 + $0x48] sm:$0xff] %v5431
        %5630 = vst [vmem:[%s152 + $0x50] sm:$0xff] %v5432
        %5631 = vst [vmem:[%s152 + $0x58] sm:$0xff] %v5433
        %5632 = vst [vmem:[%s152 + $0x60] sm:$0xff] %v5434
        %5633 = vst [vmem:[%s152 + $0x68] sm:$0xff] %v5435
        %5634 = vst [vmem:[%s152 + $0x70] sm:$0xff] %v5436
        %5635 = vst [vmem:[%s152 + $0x78] sm:$0xff] %v5437
        %5636 = vst [vmem:[%s152 + $0x80] sm:$0xff] %v5438
        %5637 = vst [vmem:[%s152 + $0x88] sm:$0xff] %v5439
        %5638 = vst [vmem:[%s152 + $0x90] sm:$0xff] %v5440
        %5639 = vst [vmem:[%s152 + $0x98] sm:$0xff] %v5441
        %5640 = vst [vmem:[%s152 + $0xa0] sm:$0xff] %v5442
        %5641 = vst [vmem:[%s152 + $0xa8] sm:$0xff] %v5443
        %5642 = vst [vmem:[%s152 + $0xb0] sm:$0xff] %v5444
        %5643 = vst [vmem:[%s152 + $0xb8] sm:$0xff] %v5445
        %5644 = vst [vmem:[%s152 + $0xc0] sm:$0xff] %v5446
        %5645 = vst [vmem:[%s152 + $0xc8] sm:$0xff] %v5447
        %5646 = vst [vmem:[%s152 + $0xd0] sm:$0xff] %v5448
        %5647 = vst [vmem:[%s152 + $0xd8] sm:$0xff] %v5449
        %5648 = vst [vmem:[%s152 + $0xe0] sm:$0xff] %v5450
        %5649 = vst [vmem:[%s152 + $0xe8] sm:$0xff] %v5451
        %5650 = vst [vmem:[%s152 + $0xf0] sm:$0xff] %v5452
        %5651 = vst [vmem:[%s152 + $0xf8] sm:$0xff] %v5453
        %5652 = vst [vmem:[%s152 + $0x100] sm:$0xff] %v5454
        %5653 = vst [vmem:[%s152 + $0x108] sm:$0xff] %v5455
        %5654 = vst [vmem:[%s152 + $0x110] sm:$0xff] %v5456
        %5655 = vst [vmem:[%s152 + $0x118] sm:$0xff] %v5457
        %5656 = vst [vmem:[%s152 + $0x120] sm:$0xff] %v5458
        %5657 = vst [vmem:[%s152 + $0x128] sm:$0xff] %v5459
        %5658 = vst [vmem:[%s152 + $0x130] sm:$0xff] %v5460
        %5659 = vst [vmem:[%s152 + $0x138] sm:$0xff] %v5461
        %5660 = vst [vmem:[%s152 + $0x140] sm:$0xff] %v5462
        %5661 = vst [vmem:[%s152 + $0x148] sm:$0xff] %v5463
        %5662 = vst [vmem:[%s152 + $0x150] sm:$0xff] %v5464
        %5663 = vst [vmem:[%s152 + $0x158] sm:$0xff] %v5465
        %5664 = vst [vmem:[%s152 + $0x160] sm:$0xff] %v5466
        %5665 = vst [vmem:[%s152 + $0x168] sm:$0xff] %v5467
        %5666 = vst [vmem:[%s152 + $0x170] sm:$0xff] %v5468
        %5667 = vst [vmem:[%s152 + $0x178] sm:$0xff] %v5469
        %5668 = vst [vmem:[%s152 + $0x180] sm:$0xff] %v5470
        %5669 = vst [vmem:[%s152 + $0x188] sm:$0xff] %v5471
        %5670 = vst [vmem:[%s152 + $0x190] sm:$0xff] %v5472
        %5671 = vst [vmem:[%s152 + $0x198] sm:$0xff] %v5473
        %5672 = vst [vmem:[%s152 + $0x1a0] sm:$0xff] %v5474
        %5673 = vst [vmem:[%s152 + $0x1a8] sm:$0xff] %v5475
        %5674 = vst [vmem:[%s152 + $0x1b0] sm:$0xff] %v5476
        %5675 = vst [vmem:[%s152 + $0x1b8] sm:$0xff] %v5477
        %5676 = vst [vmem:[%s152 + $0x1c0] sm:$0xff] %v5478
        %5677 = vst [vmem:[%s152 + $0x1c8] sm:$0xff] %v5479
        %5678 = vst [vmem:[%s152 + $0x1d0] sm:$0xff] %v5480
        %5679 = vst [vmem:[%s152 + $0x1d8] sm:$0xff] %v5481
        %5680 = vst [vmem:[%s152 + $0x1e0] sm:$0xff] %v5482
        %5681 = vst [vmem:[%s152 + $0x1e8] sm:$0xff] %v5483
        %5682 = vst [vmem:[%s152 + $0x1f0] sm:$0xff] %v5484
        %5683 = vst [vmem:[%s152 + $0x1f8] sm:$0xff] %v5485
        %5684 = vst [vmem:[%s152 + $0x200] sm:$0xff] %v5486
        %5685 = vst [vmem:[%s152 + $0x208] sm:$0xff] %v5487
        %5686 = vst [vmem:[%s152 + $0x210] sm:$0xff] %v5488
        %5687 = vst [vmem:[%s152 + $0x218] sm:$0xff] %v5489
        %5688 = vst [vmem:[%s152 + $0x220] sm:$0xff] %v5490
        %5689 = vst [vmem:[%s152 + $0x228] sm:$0xff] %v5491
        %5690 = vst [vmem:[%s152 + $0x230] sm:$0xff] %v5492
        %5691 = vst [vmem:[%s152 + $0x238] sm:$0xff] %v5493
        %5692 = vst [vmem:[%s152 + $0x240] sm:$0xff] %v5494
        %5693 = vst [vmem:[%s152 + $0x248] sm:$0xff] %v5495
        %5694 = vst [vmem:[%s152 + $0x250] sm:$0xff] %v5496
        %5695 = vst [vmem:[%s152 + $0x258] sm:$0xff] %v5497
        %5696 = vst [vmem:[%s152 + $0x260] sm:$0xff] %v5498
        %5697 = vst [vmem:[%s152 + $0x268] sm:$0xff] %v5499
        %5698 = vst [vmem:[%s152 + $0x270] sm:$0xff] %v5500
        %5699 = vst [vmem:[%s152 + $0x278] sm:$0xff] %v5501
        %5700 = vst [vmem:[%s152 + $0x280] sm:$0xff] %v5502
        %5701 = vst [vmem:[%s152 + $0x288] sm:$0xff] %v5503
        %5702 = vst [vmem:[%s152 + $0x290] sm:$0xff] %v5504
        %5703 = vst [vmem:[%s152 + $0x298] sm:$0xff] %v5505
        %5704 = vst [vmem:[%s152 + $0x2a0] sm:$0xff] %v5506
        %5705 = vst [vmem:[%s152 + $0x2a8] sm:$0xff] %v5507
        %5706 = vst [vmem:[%s152 + $0x2b0] sm:$0xff] %v5508
        %5707 = vst [vmem:[%s152 + $0x2b8] sm:$0xff] %v5509
        %5708 = vst [vmem:[%s152 + $0x2c0] sm:$0xff] %v5510
        %5709 = vst [vmem:[%s152 + $0x2c8] sm:$0xff] %v5511
        %5710 = vst [vmem:[%s152 + $0x2d0] sm:$0xff] %v5512
        %5711 = vst [vmem:[%s152 + $0x2d8] sm:$0xff] %v5513
        %5712 = vst [vmem:[%s152 + $0x2e0] sm:$0xff] %v5514
        %5713 = vst [vmem:[%s152 + $0x2e8] sm:$0xff] %v5515
        %5714 = vst [vmem:[%s152 + $0x2f0] sm:$0xff] %v5516
        %5715 = vst [vmem:[%s152 + $0x2f8] sm:$0xff] %v5517
        %5716 = vst [vmem:[%s152 + $0x300] sm:$0xff] %v5518
        %5717 = vst [vmem:[%s152 + $0x308] sm:$0xff] %v5519
        %5718 = vst [vmem:[%s152 + $0x310] sm:$0xff] %v5520
        %5719 = vst [vmem:[%s152 + $0x318] sm:$0xff] %v5521
        %5720 = vst [vmem:[%s152 + $0x320] sm:$0xff] %v5522
        %5721 = vst [vmem:[%s152 + $0x328] sm:$0xff] %v5523
        %5722 = vst [vmem:[%s152 + $0x330] sm:$0xff] %v5524
        %5723 = vst [vmem:[%s152 + $0x338] sm:$0xff] %v5525
        %5724 = vst [vmem:[%s152 + $0x340] sm:$0xff] %v5526
        %5725 = vst [vmem:[%s152 + $0x348] sm:$0xff] %v5527
        %5726 = vst [vmem:[%s152 + $0x350] sm:$0xff] %v5528
        %5727 = vst [vmem:[%s152 + $0x358] sm:$0xff] %v5529
        %5728 = vst [vmem:[%s152 + $0x360] sm:$0xff] %v5530
        %5729 = vst [vmem:[%s152 + $0x368] sm:$0xff] %v5531
        %5730 = vst [vmem:[%s152 + $0x370] sm:$0xff] %v5532
        %5731 = vst [vmem:[%s152 + $0x378] sm:$0xff] %v5533
        %5732 = vst [vmem:[%s152 + $0x380] sm:$0xff] %v5534
        %5733 = vst [vmem:[%s152 + $0x388] sm:$0xff] %v5535
        %5734 = vst [vmem:[%s152 + $0x390] sm:$0xff] %v5536
        %5735 = vst [vmem:[%s152 + $0x398] sm:$0xff] %v5537
        %5736 = vst [vmem:[%s152 + $0x3a0] sm:$0xff] %v5538
        %5737 = vst [vmem:[%s152 + $0x3a8] sm:$0xff] %v5539
        %5738 = vst [vmem:[%s152 + $0x3b0] sm:$0xff] %v5540
        %5739 = vst [vmem:[%s152 + $0x3b8] sm:$0xff] %v5541
        %5740 = vst [vmem:[%s152 + $0x3c0] sm:$0xff] %v5542
        %5741 = vst [vmem:[%s152 + $0x3c8] sm:$0xff] %v5543
        %5742 = vst [vmem:[%s152 + $0x3d0] sm:$0xff] %v5544
        %5743 = vst [vmem:[%s152 + $0x3d8] sm:$0xff] %v5545
        %5744 = vst [vmem:[%s152 + $0x3e0] sm:$0xff] %v5546
        %5745 = vst [vmem:[%s152 + $0x3e8] sm:$0xff] %v5547
        %5746 = vst [vmem:[%s152 + $0x3f0] sm:$0xff] %v5548
        %5747 = vst [vmem:[%s152 + $0x3f8] sm:$0xff] %v5549
        %5748 = vst [vmem:[%s152 + $0x400] sm:$0xff] %v5550
        %5749 = vst [vmem:[%s152 + $0x408] sm:$0xff] %v5551
        %5750 = vst [vmem:[%s152 + $0x410] sm:$0xff] %v5552
        %5751 = vst [vmem:[%s152 + $0x418] sm:$0xff] %v5553
        %5752 = vst [vmem:[%s152 + $0x420] sm:$0xff] %v5554
        %5753 = vst [vmem:[%s152 + $0x428] sm:$0xff] %v5555
        %5754 = vst [vmem:[%s152 + $0x430] sm:$0xff] %v5556
        %5755 = vst [vmem:[%s152 + $0x438] sm:$0xff] %v5557
        %5756 = vst [vmem:[%s152 + $0x440] sm:$0xff] %v5558
        %5757 = vst [vmem:[%s152 + $0x448] sm:$0xff] %v5559
        %5758 = vst [vmem:[%s152 + $0x450] sm:$0xff] %v5560
        %5759 = vst [vmem:[%s152 + $0x458] sm:$0xff] %v5561
        %5760 = vst [vmem:[%s152 + $0x460] sm:$0xff] %v5562
        %5761 = vst [vmem:[%s152 + $0x468] sm:$0xff] %v5563
        %5762 = vst [vmem:[%s152 + $0x470] sm:$0xff] %v5564
        %5763 = vst [vmem:[%s152 + $0x478] sm:$0xff] %v5565
        %5764 = vst [vmem:[%s152 + $0x480] sm:$0xff] %v5566
        %5765 = vst [vmem:[%s152 + $0x488] sm:$0xff] %v5567
        %5766 = vst [vmem:[%s152 + $0x490] sm:$0xff] %v5568
        %5767 = vst [vmem:[%s152 + $0x498] sm:$0xff] %v5569
        %5768 = vst [vmem:[%s152 + $0x4a0] sm:$0xff] %v5570
        %5769 = vst [vmem:[%s152 + $0x4a8] sm:$0xff] %v5571
        %5770 = vst [vmem:[%s152 + $0x4b0] sm:$0xff] %v5572
        %5771 = vst [vmem:[%s152 + $0x4b8] sm:$0xff] %v5573
        %5772 = vst [vmem:[%s152 + $0x4c0] sm:$0xff] %v5574
        %5773 = vst [vmem:[%s152 + $0x4c8] sm:$0xff] %v5575
        %5774 = vst [vmem:[%s152 + $0x4d0] sm:$0xff] %v5576
        %5775 = vst [vmem:[%s152 + $0x4d8] sm:$0xff] %v5577
        %5776 = vst [vmem:[%s152 + $0x4e0] sm:$0xff] %v5578
        %5777 = vst [vmem:[%s152 + $0x4e8] sm:$0xff] %v5579
        %5778 = vst [vmem:[%s152 + $0x4f0] sm:$0xff] %v5580
        %5779 = vst [vmem:[%s152 + $0x4f8] sm:$0xff] %v5581
        %5780 = vst [vmem:[%s152 + $0x500] sm:$0xff] %v5582
        %5781 = vst [vmem:[%s152 + $0x508] sm:$0xff] %v5583
        %5782 = vst [vmem:[%s152 + $0x510] sm:$0xff] %v5584
        %5783 = vst [vmem:[%s152 + $0x518] sm:$0xff] %v5585
        %5784 = vst [vmem:[%s152 + $0x520] sm:$0xff] %v5586
        %5785 = vst [vmem:[%s152 + $0x528] sm:$0xff] %v5587
        %5786 = vst [vmem:[%s152 + $0x530] sm:$0xff] %v5588
        %5787 = vst [vmem:[%s152 + $0x538] sm:$0xff] %v5589
        %5788 = vst [vmem:[%s152 + $0x540] sm:$0xff] %v5590
        %5789 = vst [vmem:[%s152 + $0x548] sm:$0xff] %v5591
        %5790 = vst [vmem:[%s152 + $0x550] sm:$0xff] %v5592
        %5791 = vst [vmem:[%s152 + $0x558] sm:$0xff] %v5593
        %5792 = vst [vmem:[%s152 + $0x560] sm:$0xff] %v5594
        %5793 = vst [vmem:[%s152 + $0x568] sm:$0xff] %v5595
        %5794 = vst [vmem:[%s152 + $0x570] sm:$0xff] %v5596
        %5795 = vst [vmem:[%s152 + $0x578] sm:$0xff] %v5597
        %5796 = vst [vmem:[%s152 + $0x580] sm:$0xff] %v5598
        %5797 = vst [vmem:[%s152 + $0x588] sm:$0xff] %v5599
        %5798 = vst [vmem:[%s152 + $0x590] sm:$0xff] %v5600
        %5799 = vst [vmem:[%s152 + $0x598] sm:$0xff] %v5601
        %5800 = vst [vmem:[%s152 + $0x5a0] sm:$0xff] %v5602
        %5801 = vst [vmem:[%s152 + $0x5a8] sm:$0xff] %v5603
        %5802 = vst [vmem:[%s152 + $0x5b0] sm:$0xff] %v5604
        %5803 = vst [vmem:[%s152 + $0x5b8] sm:$0xff] %v5605
        %5804 = vst [vmem:[%s152 + $0x5c0] sm:$0xff] %v5606
        %5805 = vst [vmem:[%s152 + $0x5c8] sm:$0xff] %v5607
        %5806 = vst [vmem:[%s152 + $0x5d0] sm:$0xff] %v5608
        %5807 = vst [vmem:[%s152 + $0x5d8] sm:$0xff] %v5609
        %5808 = vst [vmem:[%s152 + $0x5e0] sm:$0xff] %v5610
        %5809 = vst [vmem:[%s152 + $0x5e8] sm:$0xff] %v5611
        %5810 = vst [vmem:[%s152 + $0x5f0] sm:$0xff] %v5612
        %5811 = vst [vmem:[%s152 + $0x5f8] sm:$0xff] %v5613
        %5812 = vst [vmem:[%s152 + $0x600] sm:$0xff] %v5614
        %5813 = vst [vmem:[%s152 + $0x608] sm:$0xff] %v5615
        %5814 = vst [vmem:[%s152 + $0x610] sm:$0xff] %v5616
        %5815 = vst [vmem:[%s152 + $0x618] sm:$0xff] %v5617
        %5816 = vst [vmem:[%s152 + $0x620] sm:$0xff] %v5618
        %5817 = vst [vmem:[%s152 + $0x628] sm:$0xff] %v5619
        %s5818 = sand.u32 %s72, 1
        %s5819 = scalar_lea.sflag [#allocation4], %s5818
        %s5820 = sand.u32 %s72, 1
        %s5821 = smul.addr %s5820, 1584
        %s5822 = scalar_lea.vmem [#allocation5], %s5821
        // Predicated region
        $region33: #{tpu_custom_call.1} parent=27 // pred_check
          %p5823 = pneg %p82
        $region34: #{tpu_custom_call.1} parent=27 // pred_check_branch
          %5825 = sbr.rel (%p5823) target = $region36
        $region35: #{tpu_custom_call.1} parent=27 // pred_region
          %s5826 = smul.u32 66, %s17
          %s5828 = ssub.s32 25344, 25344
          %5829 = vsyncadd %s5819, %s5828
          %s5830 = smul.addr %s5826, 3
          %s5831 = smul.addr %s5830, 128
          %s5832 = scalar_lea.hbm %s2, %s5831
          %s5833 = sshll.u32 %s5822, 4
          %s5834 = int_to_ptr.vmem [resolvable:$true] %s5833
          %5839 = dma.vmem_to_hbm [thread:$0]  %s5834, 25344, %s5832, %s5819, 384, 384, 24
        $region36: #{tpu_custom_call.1} parent=27 // pred_fallthru
          _
      $region28: #{tpu_custom_call.1} parent=5 // pred_fallthru
        _
      %p5840 = scmp.le.s32.totalorder 2, %s12
      // Predicated region
      $region37: #{tpu_custom_call.1} parent=5 // pred_check
        %p5841 = pneg %p5840
      $region38: #{tpu_custom_call.1} parent=5 // pred_check_branch
        %5843 = sbr.rel (%p5841) target = $region40
      $region39: #{tpu_custom_call.1} parent=5 // pred_region
        %s5844 = ssub.s32 %s12, 2
        // Predicated region
        $region41: #{tpu_custom_call.1} parent=39 // pred_check
          %p5845 = pneg %p88
        $region42: #{tpu_custom_call.1} parent=39 // pred_check_branch
          %5847 = sbr.rel (%p5845) target = $region44
        $region43: #{tpu_custom_call.1} parent=39 // pred_region
          %s5848 = sand.u32 %s73, 1
          %s5849 = scalar_lea.sflag [#allocation4], %s5848
          %s5850 = sand.u32 %s73, 1
          %s5851 = smul.addr %s5850, 1584
          %s5852 = scalar_lea.vmem [#allocation5], %s5851
          %5853 = dma.done %s5849, 25344
        $region44: #{tpu_custom_call.1} parent=39 // pred_fallthru
          _
      $region40: #{tpu_custom_call.1} parent=5 // pred_fallthru
        _
    $region6: #{tpu_custom_call.1} parent=1 // loop_footer
      %s16 = sadd.s32 1, %s12
    $region7: #{tpu_custom_call.1} parent=1 // loop_footer_branch
      %11 = sbr.rel target = $region3
    $region8: #{tpu_custom_call.1} parent=1 // loop_exit
      _
    %5854 = vsyncpa [#allocation3], 1
    %s5855 = scalar_lea.sflag [#allocation3], 1
    %5856 = vsyncpa %s5855, 1
    %5857 = vsyncpa [#allocation4], 1
    %s5858 = scalar_lea.sflag [#allocation4], 1
    %5859 = vsyncpa %s5858, 1

</llo_original>
